<compile_context>
chip_gen: v7x
topology: tpu7x:2x2x1
jax: 0.10.0
libtpu: 0.0.40
codegen_flags: <defaults>
</compile_context>

<pallas_src>
import jax
import jax.numpy as jnp
from jax.experimental import pallas as pl
from jax.experimental.pallas import tpu as pltpu


_LANES = 128  # pad the tiny (H, C) classifier / prob output to lane-dense width


def _model_kernel(cw_ref, flag_ref, ids_ref, emb_ref, w_ref, b_ref, labels_ref,
                  prob_ref, loss_ref, pooled_acc, count_acc):
    si = pl.program_id(1)

    @pl.when(si == 0)
    def _():
        pooled_acc[...] = jnp.zeros_like(pooled_acc)
        count_acc[...] = jnp.zeros_like(count_acc)

    # attention_mask = input_ids.ne(1)   (token id 1 == <pad> for RoBERTa)
    ids = ids_ref[...]                                        # (TB, TS) int32
    mask_f32 = (ids != 1).astype(jnp.float32)                 # (TB, TS)

    # --- synthetic encoder body: masked-sum pooling, accumulated over S -----
    emb = emb_ref[...]                                        # (TB, TS, H) bf16
    mask_q = mask_f32.astype(emb.dtype)[:, None, :]           # (TB, 1, TS) bf16
    # masked pool as an MXU contraction (bf16 x bf16, f32 accumulation)
    contrib = jnp.einsum("bqs,bsh->bqh", mask_q, emb,
                         preferred_element_type=jnp.float32)  # (TB, 1, H) f32
    pooled_acc[...] += contrib[:, 0, :]
    count_acc[...] += jnp.sum(mask_f32, axis=1, keepdims=True)

    # --- epilogue: classifier + sigmoid (+ optional weighted log loss) ------
    @pl.when(si == pl.num_programs(1) - 1)
    def _():
        denom = jnp.maximum(count_acc[...], 1.0)              # (TB, 1)
        pooled = pooled_acc[...] / denom                      # (TB, H)
        logits = jnp.dot(pooled, w_ref[...],
                         preferred_element_type=jnp.float32) + b_ref[...]  # (TB, 128)
        prob = jax.nn.sigmoid(logits)
        prob_ref[...] = prob                                  # lane-dense store

        @pl.when(flag_ref[0] != 0)                            # skip when labels=None
        def _():
            labels = labels_ref[...]                          # (TB, 1) f32
            cw0 = cw_ref[0]
            cw1 = cw_ref[1]
            p0 = prob[:, 0:1]                                 # (TB, 1)
            loss_ref[...] = -(jnp.log(p0 + 1e-10) * labels * cw1
                              + jnp.log(1.0 - p0 + 1e-10) * (1.0 - labels) * cw0)


def _call_kernel(class_weights, has_labels, input_ids, emb, w_pad, b_pad,
                 labels_2d, tb, ts):
    B, S = input_ids.shape
    H = emb.shape[2]
    grid = (B // tb, S // ts)

    prob_pad, loss_elem = pl.pallas_call(
        _model_kernel,
        out_shape=[
            jax.ShapeDtypeStruct((B, _LANES), jnp.float32),   # prob (lane padded)
            jax.ShapeDtypeStruct((B, 1), jnp.float32),        # per-example -loss
        ],
        grid_spec=pltpu.PrefetchScalarGridSpec(
            num_scalar_prefetch=0,
            grid=grid,
            in_specs=[
                pl.BlockSpec(memory_space=pltpu.MemorySpace.SMEM),     # class_weights (2,)
                pl.BlockSpec(memory_space=pltpu.MemorySpace.SMEM),     # has_labels (1,)
                pl.BlockSpec((tb, ts), lambda bi, si: (bi, si)),       # input_ids
                pl.BlockSpec((tb, ts, H), lambda bi, si: (bi, si, 0)), # embeddings bf16
                pl.BlockSpec((H, _LANES), lambda bi, si: (0, 0)),      # classifier W (padded)
                pl.BlockSpec((1, _LANES), lambda bi, si: (0, 0)),      # classifier b (padded)
                pl.BlockSpec((tb, 1), lambda bi, si: (bi, 0)),         # labels
            ],
            out_specs=[
                pl.BlockSpec((tb, _LANES), lambda bi, si: (bi, 0)),    # prob
                pl.BlockSpec((tb, 1), lambda bi, si: (bi, 0)),         # loss elems
            ],
            scratch_shapes=[
                pltpu.VMEM((tb, H), jnp.float32),   # pooled accumulator
                pltpu.VMEM((tb, 1), jnp.float32),   # mask-count accumulator
            ],
        ),
        compiler_params=pltpu.CompilerParams(
            dimension_semantics=("parallel", "arbitrary"),  # batch parallel, S reduce
            vmem_limit_bytes=32 * 1024 * 1024,              # fits v7x's smaller VMEM
        ),
    )(class_weights, has_labels, input_ids, emb, w_pad, b_pad, labels_2d)
    return prob_pad, loss_elem


def _pick_tiles(B, S):
    # Batch tile: sublane-aligned (multiple of 8) when possible, else full batch.
    tb = 8 if (B % 8 == 0 and B >= 8) else B
    # Sequence (reduction) tile: 256 keeps double-buffered bf16 tiles small
    # enough for v7x's 32 MiB scoped VMEM at real hidden sizes.
    ts = S
    for cand in (256, 128):
        if S % cand == 0:
            ts = cand
            break
    return tb, ts


def init_params(key, vocab_size, hidden, num_labels):
    k1, k2 = jax.random.split(key)
    # bf16 embedding table: halves HBM traffic on the dominant (B, S, H) read.
    emb_table = (0.02 * jax.random.normal(k1, (vocab_size, hidden), jnp.float32)
                 ).astype(jnp.bfloat16)
    w = 0.02 * jax.random.normal(k2, (hidden, num_labels), jnp.float32)
    b = jnp.zeros((num_labels,), jnp.float32)
    # Pad the (H, C) classifier to a lane-dense (H, 128) slab once, up front.
    w_pad = jnp.zeros((hidden, _LANES), jnp.float32).at[:, :num_labels].set(w)
    b_pad = jnp.zeros((1, _LANES), jnp.float32).at[:, :num_labels].set(b)
    return emb_table, w_pad, b_pad, num_labels


def model_forward(params, class_weights, input_ids, labels=None):
    """Mirrors Model.forward: returns (loss, prob) if labels given, else prob."""
    emb_table, w_pad, b_pad, num_labels = params
    input_ids = input_ids.astype(jnp.int32)
    B, S = input_ids.shape

    # TODO(synk): the real `encoder` is an external HuggingFace transformer; a
    # synthetic masked-mean-pool + linear head stands in, and the embedding
    # gather stays in XLA glue (an in-kernel DMA gather or an emb_table @ W
    # fold would remove this (B, S, H) HBM round trip entirely).
    emb = jnp.take(emb_table, input_ids, axis=0)              # (B, S, H) bf16

    has_labels = labels is not None
    if has_labels:
        labels_2d = labels.astype(jnp.float32).reshape(B, 1)
    else:
        labels_2d = jnp.zeros((B, 1), jnp.float32)
    flag = jnp.array([1 if has_labels else 0], jnp.int32)
    cw = class_weights.astype(jnp.float32).reshape(-1)

    tb, ts = _pick_tiles(B, S)
    prob_pad, loss_elem = _call_kernel(cw, flag, input_ids, emb, w_pad, b_pad,
                                       labels_2d, tb, ts)
    prob = prob_pad[:, :num_labels]
    if has_labels:
        return jnp.mean(loss_elem), prob
    return prob


if __name__ == "__main__":
    B, S, H, V, C = 16, 512, 32, 64, 2

    key = jax.random.PRNGKey(0)
    k_par, k_ids, k_lab = jax.random.split(key, 3)

    params = init_params(k_par, V, H, C)
    class_weights = jnp.array([0.3, 0.7], jnp.float32)

    input_ids = jax.random.randint(k_ids, (B, S), 0, V, dtype=jnp.int32)
    # force some pad tokens (id == 1) so the attention mask matters
    input_ids = input_ids.at[:, -32:].set(1)
    labels = jax.random.randint(k_lab, (B,), 0, 2, dtype=jnp.int32)

    # labels provided -> (loss, prob)
    loss, prob = model_forward(params, class_weights, input_ids, labels)
    jax.block_until_ready((loss, prob))

    # labels omitted -> prob only
    prob_only = model_forward(params, class_weights, input_ids)
    jax.block_until_ready(prob_only)

    assert prob.shape == (B, C) and prob_only.shape == (B, C)
    assert loss.shape == ()

    # pure-JAX reference for a numeric sanity check
    emb_table, w_pad, b_pad, _ = params
    mask = (input_ids != 1).astype(jnp.float32)
    emb_f32 = jnp.take(emb_table, input_ids, axis=0).astype(jnp.float32)
    pooled = jnp.sum(emb_f32 * mask[:, :, None], axis=1) / jnp.maximum(
        jnp.sum(mask, axis=1, keepdims=True), 1.0)
    logits = pooled @ w_pad[:, :C] + b_pad[:, :C]
    prob_ref = jax.nn.sigmoid(logits)
    lab_f = labels.astype(jnp.float32)
    p0 = prob_ref[:, 0]
    loss_ref = -jnp.mean(jnp.log(p0 + 1e-10) * lab_f * class_weights[1]
                         + jnp.log(1.0 - p0 + 1e-10) * (1.0 - lab_f) * class_weights[0])

    assert jnp.allclose(prob, prob_ref, atol=1e-2), "prob mismatch vs reference"
    assert jnp.allclose(prob_only, prob_ref, atol=1e-2), "prob (no-labels) mismatch"
    assert jnp.allclose(loss, loss_ref, atol=1e-2), "loss mismatch vs reference"
    print("KERNEL_OK")
</pallas_src>

<mosaic_0001>
module attributes {stable_mosaic.version = 11 : i64} {
  func.func @_model_kernel(%arg0: i32, %arg1: i32, %arg2: memref<2xf32, #tpu.memory_space<smem>>, %arg3: memref<1xi32, #tpu.memory_space<smem>>, %arg4: memref<8x256xi32, #tpu.memory_space<vmem>>, %arg5: memref<8x256x32xbf16, #tpu.memory_space<vmem>>, %arg6: memref<32x128xf32, #tpu.memory_space<vmem>>, %arg7: memref<1x128xf32, #tpu.memory_space<vmem>>, %arg8: memref<8x1xf32, #tpu.memory_space<vmem>>, %arg9: memref<8x128xf32, #tpu.memory_space<vmem>>, %arg10: memref<8x1xf32, #tpu.memory_space<vmem>>, %arg11: memref<8x32xf32, #tpu.memory_space<vmem>>, %arg12: memref<8x1xf32, #tpu.memory_space<vmem>>) attributes {dimension_semantics = [#tpu.dimension_semantics<parallel>, #tpu.dimension_semantics<arbitrary>], iteration_bounds = array<i64: 2, 2>, scalar_prefetch = 0 : i64, scratch_operands = 2 : i64, tpu.core_type = #tpu.core_type<tc>, window_params = [{transform_indices = @transform_0, window_bounds = array<i64: 2>}, {transform_indices = @transform_1, window_bounds = array<i64: 1>}, {transform_indices = @transform_2, window_bounds = array<i64: 8, 256>}, {transform_indices = @transform_3, window_bounds = array<i64: 8, 256, 32>}, {pipeline_mode = #tpu.pipeline_mode<synchronous>, transform_indices = @transform_4, window_bounds = array<i64: 32, 128>}, {pipeline_mode = #tpu.pipeline_mode<synchronous>, transform_indices = @transform_5, window_bounds = array<i64: 1, 128>}, {transform_indices = @transform_6, window_bounds = array<i64: 8, 1>}, {transform_indices = @transform_7, window_bounds = array<i64: 8, 128>}, {transform_indices = @transform_8, window_bounds = array<i64: 8, 1>}]} {
    %c0_i32 = arith.constant 0 : i32
    %0 = arith.cmpi eq, %arg1, %c0_i32 : i32
    %1 = arith.extui %0 : i1 to i32
    %c0_i32_0 = arith.constant 0 : i32
    %2 = arith.cmpi ne, %1, %c0_i32_0 : i32
    scf.if %2 {
      %cst_16 = arith.constant 0.000000e+00 : f32
      %24 = vector.broadcast %cst_16 : f32 to vector<8x32xf32>
      %c0_17 = arith.constant 0 : index
      %c0_18 = arith.constant 0 : index
      %25 = vector.load %arg11[%c0_17, %c0_18] : memref<8x32xf32, #tpu.memory_space<vmem>>, vector<8x32xf32>
      tpu.vector_store %arg11[%c0_17, %c0_18], %24 {strides = array<i32>} : memref<8x32xf32, #tpu.memory_space<vmem>>, vector<8x32xf32>,
      %cst_19 = arith.constant 0.000000e+00 : f32
      %26 = vector.broadcast %cst_19 : f32 to vector<8x1xf32>
      %c0_20 = arith.constant 0 : index
      %c0_21 = arith.constant 0 : index
      %27 = vector.load %arg12[%c0_20, %c0_21] : memref<8x1xf32, #tpu.memory_space<vmem>>, vector<8x1xf32>
      tpu.vector_store %arg12[%c0_20, %c0_21], %26 {strides = array<i32>} : memref<8x1xf32, #tpu.memory_space<vmem>>, vector<8x1xf32>,
    } else {
    }
    %c0 = arith.constant 0 : index
    %c0_1 = arith.constant 0 : index
    %3 = vector.load %arg4[%c0, %c0_1] : memref<8x256xi32, #tpu.memory_space<vmem>>, vector<8x256xi32>
    %c1_i32 = arith.constant 1 : i32
    %4 = vector.broadcast %c1_i32 : i32 to vector<8x256xi32>
    %5 = arith.cmpi ne, %3, %4 : vector<8x256xi32>
    %6 = arith.extui %5 : vector<8x256xi1> to vector<8x256xi32>
    %7 = arith.sitofp %6 : vector<8x256xi32> to vector<8x256xf32>
    %c0_2 = arith.constant 0 : index
    %c0_3 = arith.constant 0 : index
    %c0_4 = arith.constant 0 : index
    %8 = vector.load %arg5[%c0_2, %c0_3, %c0_4] : memref<8x256x32xbf16, #tpu.memory_space<vmem>>, vector<8x256x32xbf16>
    %9 = arith.truncf %7 : vector<8x256xf32> to vector<8x256xbf16>
    %10 = vector.shape_cast %9 : vector<8x256xbf16> to vector<8x1x256xbf16>
    "tpu.trace_start"() <{level = 10 : i32, message = "bqs,bsh->bqh"}> : () -> ()
    %cst = arith.constant dense<0.000000e+00> : vector<8x1x32xf32>
    %11 = tpu.matmul %10, %8, %cst {dimension_numbers = #tpu.dot_dimension_numbers<[2], [1], [1], [2], [0, 0, 0, 1, 1, 2], [0], [0]>} : vector<8x1x256xbf16>, vector<8x256x32xbf16>, vector<8x1x32xf32> -> vector<8x1x32xf32>
    "tpu.trace_stop"() : () -> ()
    %c0_5 = arith.constant 0 : index
    %c0_6 = arith.constant 0 : index
    %12 = vector.load %arg11[%c0_5, %c0_6] : memref<8x32xf32, #tpu.memory_space<vmem>>, vector<8x32xf32>
    %13 = vector.shape_cast %11 : vector<8x1x32xf32> to vector<8x32xf32>
    %14 = arith.addf %12, %13 : vector<8x32xf32>
    %c0_7 = arith.constant 0 : index
    %c0_8 = arith.constant 0 : index
    %15 = vector.load %arg11[%c0_7, %c0_8] : memref<8x32xf32, #tpu.memory_space<vmem>>, vector<8x32xf32>
    tpu.vector_store %arg11[%c0_7, %c0_8], %14 {strides = array<i32>} : memref<8x32xf32, #tpu.memory_space<vmem>>, vector<8x32xf32>,
    %c0_9 = arith.constant 0 : index
    %c0_10 = arith.constant 0 : index
    %16 = vector.load %arg12[%c0_9, %c0_10] : memref<8x1xf32, #tpu.memory_space<vmem>>, vector<8x1xf32>
    %cst_11 = arith.constant dense<0.000000e+00> : vector<8xf32>
    %17 = vector.multi_reduction <add>, %7, %cst_11 [1] : vector<8x256xf32> to vector<8xf32>
    %18 = vector.shape_cast %17 : vector<8xf32> to vector<8x1xf32>
    %19 = arith.addf %16, %18 : vector<8x1xf32>
    %c0_12 = arith.constant 0 : index
    %c0_13 = arith.constant 0 : index
    %20 = vector.load %arg12[%c0_12, %c0_13] : memref<8x1xf32, #tpu.memory_space<vmem>>, vector<8x1xf32>
    tpu.vector_store %arg12[%c0_12, %c0_13], %19 {strides = array<i32>} : memref<8x1xf32, #tpu.memory_space<vmem>>, vector<8x1xf32>,
    %c1_i32_14 = arith.constant 1 : i32
    %21 = arith.cmpi eq, %arg1, %c1_i32_14 : i32
    %22 = arith.extui %21 : i1 to i32
    %c0_i32_15 = arith.constant 0 : i32
    %23 = arith.cmpi ne, %22, %c0_i32_15 : i32
    scf.if %23 {
      %c0_16 = arith.constant 0 : index
      %c0_17 = arith.constant 0 : index
      %24 = vector.load %arg12[%c0_16, %c0_17] : memref<8x1xf32, #tpu.memory_space<vmem>>, vector<8x1xf32>
      %cst_18 = arith.constant 1.000000e+00 : f32
      %25 = vector.broadcast %cst_18 : f32 to vector<8x1xf32>
      %26 = arith.maximumf %24, %25 : vector<8x1xf32>
      %c0_19 = arith.constant 0 : index
      %c0_20 = arith.constant 0 : index
      %27 = vector.load %arg11[%c0_19, %c0_20] : memref<8x32xf32, #tpu.memory_space<vmem>>, vector<8x32xf32>
      %28 = vector.broadcast %26 : vector<8x1xf32> to vector<8x32xf32>
      %29 = arith.divf %27, %28 : vector<8x32xf32>
      %c0_21 = arith.constant 0 : index
      %c0_22 = arith.constant 0 : index
      %30 = vector.load %arg6[%c0_21, %c0_22] : memref<32x128xf32, #tpu.memory_space<vmem>>, vector<32x128xf32>
      %cst_23 = arith.constant dense<0.000000e+00> : vector<8x128xf32>
      %31 = tpu.matmul %29, %30, %cst_23 {dimension_numbers = #tpu.dot_dimension_numbers<[1], [0], [0], [1], [0, 0, 1, 1], [], []>} : vector<8x32xf32>, vector<32x128xf32>, vector<8x128xf32> -> vector<8x128xf32>
      %c0_24 = arith.constant 0 : index
      %c0_25 = arith.constant 0 : index
      %32 = vector.load %arg7[%c0_24, %c0_25] : memref<1x128xf32, #tpu.memory_space<vmem>>, vector<1x128xf32>
      %33 = vector.broadcast %32 : vector<1x128xf32> to vector<8x128xf32>
      %34 = arith.addf %31, %33 : vector<8x128xf32>
      %35 = arith.negf %34 : vector<8x128xf32>
      %36 = math.exp %35 : vector<8x128xf32>
      %cst_26 = arith.constant 1.000000e+00 : f32
      %37 = vector.broadcast %cst_26 : f32 to vector<8x128xf32>
      %38 = arith.addf %37, %36 : vector<8x128xf32>
      %39 = arith.divf %37, %38 : vector<8x128xf32>
      %c0_27 = arith.constant 0 : index
      %c0_28 = arith.constant 0 : index
      %40 = vector.load %arg9[%c0_27, %c0_28] : memref<8x128xf32, #tpu.memory_space<vmem>>, vector<8x128xf32>
      tpu.vector_store %arg9[%c0_27, %c0_28], %39 {strides = array<i32>} : memref<8x128xf32, #tpu.memory_space<vmem>>, vector<8x128xf32>,
      %c0_29 = arith.constant 0 : index
      %41 = memref.load %arg3[%c0_29] : memref<1xi32, #tpu.memory_space<smem>>
      %c0_i32_30 = arith.constant 0 : i32
      %42 = arith.cmpi ne, %41, %c0_i32_30 : i32
      %43 = arith.extui %42 : i1 to i32
      %c0_i32_31 = arith.constant 0 : i32
      %44 = arith.cmpi ne, %43, %c0_i32_31 : i32
      scf.if %44 {
        %c0_32 = arith.constant 0 : index
        %c0_33 = arith.constant 0 : index
        %45 = vector.load %arg8[%c0_32, %c0_33] : memref<8x1xf32, #tpu.memory_space<vmem>>, vector<8x1xf32>
        %c0_34 = arith.constant 0 : index
        %46 = memref.load %arg2[%c0_34] : memref<2xf32, #tpu.memory_space<smem>>
        %c1 = arith.constant 1 : index
        %47 = memref.load %arg2[%c1] : memref<2xf32, #tpu.memory_space<smem>>
        %48 = vector.extract_strided_slice %39 {offsets = [0, 0], sizes = [8, 1], strides = [1, 1]} : vector<8x128xf32> to vector<8x1xf32>
        %cst_35 = arith.constant 1.000000e-10 : f32
        %49 = vector.broadcast %cst_35 : f32 to vector<8x1xf32>
        %50 = arith.addf %48, %49 : vector<8x1xf32>
        %51 = math.log %50 : vector<8x1xf32>
        %52 = arith.mulf %51, %45 : vector<8x1xf32>
        %53 = vector.broadcast %47 : f32 to vector<8x1xf32>
        %54 = arith.mulf %52, %53 : vector<8x1xf32>
        %cst_36 = arith.constant 1.000000e+00 : f32
        %55 = vector.broadcast %cst_36 : f32 to vector<8x1xf32>
        %56 = arith.subf %55, %48 : vector<8x1xf32>
        %cst_37 = arith.constant 1.000000e-10 : f32
        %57 = vector.broadcast %cst_37 : f32 to vector<8x1xf32>
        %58 = arith.addf %56, %57 : vector<8x1xf32>
        %59 = math.log %58 : vector<8x1xf32>
        %cst_38 = arith.constant 1.000000e+00 : f32
        %60 = vector.broadcast %cst_38 : f32 to vector<8x1xf32>
        %61 = arith.subf %60, %45 : vector<8x1xf32>
        %62 = arith.mulf %59, %61 : vector<8x1xf32>
        %63 = vector.broadcast %46 : f32 to vector<8x1xf32>
        %64 = arith.mulf %62, %63 : vector<8x1xf32>
        %65 = arith.addf %54, %64 : vector<8x1xf32>
        %cst_39 = arith.constant 0.000000e+00 : f32
        %66 = vector.broadcast %cst_39 : f32 to vector<8x1xf32>
        %67 = arith.subf %66, %65 : vector<8x1xf32>
        %c0_40 = arith.constant 0 : index
        %c0_41 = arith.constant 0 : index
        %68 = vector.load %arg10[%c0_40, %c0_41] : memref<8x1xf32, #tpu.memory_space<vmem>>, vector<8x1xf32>
        tpu.vector_store %arg10[%c0_40, %c0_41], %67 {strides = array<i32>} : memref<8x1xf32, #tpu.memory_space<vmem>>, vector<8x1xf32>,
      } else {
      }
    } else {
    }
    return
  }
  func.func @transform_0(%arg0: i32, %arg1: i32) -> i32 {
    %c0_i32 = arith.constant 0 : i32
    %c0_i32_0 = arith.constant 0 : i32
    return %c0_i32 : i32
  }
  func.func @transform_1(%arg0: i32, %arg1: i32) -> i32 {
    %c0_i32 = arith.constant 0 : i32
    %c0_i32_0 = arith.constant 0 : i32
    return %c0_i32 : i32
  }
  func.func @transform_2(%arg0: i32, %arg1: i32) -> (i32, i32) {
    %c0_i32 = arith.constant 0 : i32
    return %arg0, %arg1 : i32, i32
  }
  func.func @transform_3(%arg0: i32, %arg1: i32) -> (i32, i32, i32) {
    %c0_i32 = arith.constant 0 : i32
    %c0_i32_0 = arith.constant 0 : i32
    return %arg0, %arg1, %c0_i32 : i32, i32, i32
  }
  func.func @transform_4(%arg0: i32, %arg1: i32) -> (i32, i32) {
    %c0_i32 = arith.constant 0 : i32
    %c0_i32_0 = arith.constant 0 : i32
    %c0_i32_1 = arith.constant 0 : i32
    return %c0_i32, %c0_i32_0 : i32, i32
  }
  func.func @transform_5(%arg0: i32, %arg1: i32) -> (i32, i32) {
    %c0_i32 = arith.constant 0 : i32
    %c0_i32_0 = arith.constant 0 : i32
    %c0_i32_1 = arith.constant 0 : i32
    return %c0_i32, %c0_i32_0 : i32, i32
  }
  func.func @transform_6(%arg0: i32, %arg1: i32) -> (i32, i32) {
    %c0_i32 = arith.constant 0 : i32
    %c0_i32_0 = arith.constant 0 : i32
    return %arg0, %c0_i32 : i32, i32
  }
  func.func @transform_7(%arg0: i32, %arg1: i32) -> (i32, i32) {
    %c0_i32 = arith.constant 0 : i32
    %c0_i32_0 = arith.constant 0 : i32
    return %arg0, %c0_i32 : i32, i32
  }
  func.func @transform_8(%arg0: i32, %arg1: i32) -> (i32, i32) {
    %c0_i32 = arith.constant 0 : i32
    %c0_i32_0 = arith.constant 0 : i32
    return %arg0, %c0_i32 : i32, i32
  }
}

</mosaic_0001>

<llo_original>
// kernel: tpu_custom_call.1
$region0: #{tpu_custom_call.1}
  #allocation0 [shape = 'u32[]', space=smem, size = 0x4, offset = 0x4, fixed_abs, tag = 'smem constant byte address 0x4 - core index']
  #allocation1 [shape = 'u32[144,128]{1,0:T(1,128)}', space=vmem, size = 0x12000, scoped, tag = 'internal scratch']
  #allocation2 [shape = 'f32[8,32]{1,0:T(8,128)}', space=vmem, size = 0x1000, scoped, tag = 'scratch operand']
  #allocation3 [shape = 'f32[8,1]{1,0:T(8,128)}', space=vmem, size = 0x1000, scoped, tag = 'scratch operand']
  #allocation4 [shape = 's32[1]{0:T(128)S(6)}', space=smem, size = 0x200, scoped, tag = 'scoped memory for tpu_custom_call.1']
  %s0 = inlined_call_operand.vmem [shape: f32[2], index: 0, kind: input, shape index: {}]
  %s1 = inlined_call_operand.<no memory space> [shape: s32[1], index: 1, kind: input, shape index: {}]
  %s2 = inlined_call_operand.vmem [shape: s32[16,512], index: 2, kind: input, shape index: {}]
  %s3 = inlined_call_operand.vmem [shape: bf16[16,512,32], index: 3, kind: input, shape index: {}]
  %s4 = inlined_call_operand.vmem [shape: f32[32,128], index: 4, kind: input, shape index: {}]
  %s5 = inlined_call_operand.vmem [shape: f32[1,128], index: 5, kind: input, shape index: {}]
  %s6 = inlined_call_operand.vmem [shape: f32[16,1], index: 6, kind: input, shape index: {}]
  %s7 = inlined_call_operand.hbm [shape: f32[16,128], index: 7, kind: output, shape index: {0}]
  %s8 = inlined_call_operand.vmem [shape: f32[16,1], index: 8, kind: output, shape index: {1}]
  %9 = xla_tuple %s7, %s8
  %s10 = sld [smem:[#allocation0]]
  $region126: #{tpu_custom_call.1} parent=0
    _
  %s12 = ssub.s32 1, %s10
  %s13 = scalar_select 0, %s12, %s10
  %14 = sst [smem:[#allocation4]] %s1
  $region1: #{tpu_custom_call.1} parent=0
    #allocation5 [shape = 'u8[512]{0}', space=smem, size = 0x200, scoped, tag = 'input window, operand 0, single buffered']
    #allocation6 [shape = 's32[2]{0}', space=sflag, size = 0x8, scoped, tag = 'scoped memory for tpu_custom_call.1']
    #allocation7 [shape = 's32[2]{0}', space=sflag, size = 0x8, scoped, tag = 'scoped memory for tpu_custom_call.1']
    #allocation8 [shape = 'u8[1048576]{0}', space=vmem, size = 0x100000, scoped, tag = 'input window, operand 3']
    #allocation9 [shape = 'u8[8192]{0}', space=vmem, size = 0x2000, scoped, tag = 'output window, operand 0']
    %15 = vsyncpa [#allocation7], 0
    %16 = vsyncpa [#allocation6], 0
    %s17 = scalar_lea.sflag [#allocation6], 1
    %18 = vsyncpa %s17, 0
    loop: start=0, step=1, limit=6
    $region2: #{tpu_custom_call.1} parent=1 // loop_pre_header
      _
    $region3: #{tpu_custom_call.1} parent=1 // loop_header
      %s20 = sphi 0, %s24
      %p21 = scmp.ge.s32.totalorder %s20, 6
      %s27 = sphi 0, %s39
      %s28 = sphi 0, %s35
      %s29 = sphi 0, %s27
      %s30 = sphi 0, %s28
      %s31 = sphi 0, %s29
      %s32 = sphi 0, %s30
      %s40 = sphi 0, %s40
      %s42 = sphi 0, %s40
      %s43 = sphi 0, %s42
      %s57 = sphi 0, %s43
      %s61 = sphi 0, %s61
      %s63 = sphi 0, %s61
      %s64 = sphi 0, %s63
      %s78 = sphi 0, %s64
      %s86 = sphi 0, %s88
      %s89 = sphi 0, %s86
      %s90 = sphi 0, %s89
      %s106 = sphi 0, %s90
      %s114 = sphi 0, %s116
      %s117 = sphi 0, %s114
      %s118 = sphi 0, %s117
      %s134 = sphi 0, %s118
      %s138 = sphi 0, %s138
      %s140 = sphi 0, %s138
      %s141 = sphi 0, %s140
      %s155 = sphi 0, %s141
      %s159 = sphi 0, %s159
      %s161 = sphi 0, %s159
      %s162 = sphi 0, %s161
      %s176 = sphi 0, %s162
      %s182 = sphi 0, %s184
      %s185 = sphi 0, %s182
      %s186 = sphi 0, %s185
      %s202 = sphi 0, %s186
      %s208 = sphi 0, %s210
      %s211 = sphi 0, %s208
      %s212 = sphi 0, %s211
      %s228 = sphi 0, %s212
      %s234 = sphi 0, %s236
      %s237 = sphi 0, %s234
      %s238 = sphi 0, %s237
      %s254 = sphi 0, %s238
    $region4: #{tpu_custom_call.1} parent=1 // loop_header_branch
      %23 = sbr.rel (%p21) target = $region8
    $region5: #{tpu_custom_call.1} parent=1 // loop_body
      %s25 = ssub.s32 %s20, 1
      %s26 = ssub.s32 %s20, 2
      %s33 = sadd.s32 1, %s28
      %p34 = scmp.ge.s32.totalorder %s33, 2
      %s35 = scalar_select %p34, 0, %s33
      %s36 = sadd.s32 1, %s27
      %s37 = scalar_select %p34, %s36, %s27
      %p38 = scmp.ge.s32.totalorder %s37, 2
      %s39 = scalar_select %p38, 0, %s37
      %s41 = sadd.s32 %s40, 1
      %p44 = scmp.eq.s32.totalorder %s20, 3
      %p45 = scmp.ne.s32.totalorder %s40, %s42
      %p46 = scmp.eq.s32.totalorder %s20, 0
      %p47 = por %p45, %p46
      %p48 = scmp.ne.s32.totalorder %s40, %s42
      %p49 = scmp.eq.s32.totalorder %s25, 3
      %p50 = por %p48, %p49
      %p51 = scmp.ne.s32.totalorder %s42, %s43
      %p52 = scmp.eq.s32.totalorder %s25, 0
      %p53 = por %p51, %p52
      %p54 = scmp.ne.s32.totalorder %s42, %s43
      %p55 = scmp.eq.s32.totalorder %s26, 3
      %p56 = por %p54, %p55
      %p58 = scmp.ne.s32.totalorder %s43, %s57
      %p59 = scmp.eq.s32.totalorder %s26, 0
      %p60 = por %p58, %p59
      %s62 = sadd.s32 %s61, 1
      %p65 = scmp.eq.s32.totalorder %s20, 3
      %p66 = scmp.ne.s32.totalorder %s61, %s63
      %p67 = scmp.eq.s32.totalorder %s20, 0
      %p68 = por %p66, %p67
      %p69 = scmp.ne.s32.totalorder %s61, %s63
      %p70 = scmp.eq.s32.totalorder %s25, 3
      %p71 = por %p69, %p70
      %p72 = scmp.ne.s32.totalorder %s63, %s64
      %p73 = scmp.eq.s32.totalorder %s25, 0
      %p74 = por %p72, %p73
      %p75 = scmp.ne.s32.totalorder %s63, %s64
      %p76 = scmp.eq.s32.totalorder %s26, 3
      %p77 = por %p75, %p76
      %p79 = scmp.ne.s32.totalorder %s64, %s78
      %p80 = scmp.eq.s32.totalorder %s26, 0
      %p81 = por %p79, %p80
      %s82 = ssub.s32 %s27, %s39
      %s83 = ssub.s32 %s28, %s35
      %s84 = sor.u32 %s82, %s83
      %p85 = scmp.eq.s32.totalorder %s84, 0
      %s87 = sadd.s32 %s86, 1
      %s88 = scalar_select %p85, %s86, %s87
      %p91 = pneg %p85
      %p92 = scmp.eq.s32.totalorder %s20, 3
      %p93 = por %p91, %p92
      %p94 = scmp.ne.s32.totalorder %s86, %s89
      %p95 = scmp.eq.s32.totalorder %s20, 0
      %p96 = por %p94, %p95
      %p97 = scmp.ne.s32.totalorder %s86, %s89
      %p98 = scmp.eq.s32.totalorder %s25, 3
      %p99 = por %p97, %p98
      %p100 = scmp.ne.s32.totalorder %s89, %s90
      %p101 = scmp.eq.s32.totalorder %s25, 0
      %p102 = por %p100, %p101
      %p103 = scmp.ne.s32.totalorder %s89, %s90
      %p104 = scmp.eq.s32.totalorder %s26, 3
      %p105 = por %p103, %p104
      %p107 = scmp.ne.s32.totalorder %s90, %s106
      %p108 = scmp.eq.s32.totalorder %s26, 0
      %p109 = por %p107, %p108
      %s110 = ssub.s32 %s27, %s39
      %s111 = ssub.s32 %s28, %s35
      %s112 = sor.u32 %s110, %s111
      %p113 = scmp.eq.s32.totalorder %s112, 0
      %s115 = sadd.s32 %s114, 1
      %s116 = scalar_select %p113, %s114, %s115
      %p119 = pneg %p113
      %p120 = scmp.eq.s32.totalorder %s20, 3
      %p121 = por %p119, %p120
      %p122 = scmp.ne.s32.totalorder %s114, %s117
      %p123 = scmp.eq.s32.totalorder %s20, 0
      %p124 = por %p122, %p123
      %p125 = scmp.ne.s32.totalorder %s114, %s117
      %p126 = scmp.eq.s32.totalorder %s25, 3
      %p127 = por %p125, %p126
      %p128 = scmp.ne.s32.totalorder %s117, %s118
      %p129 = scmp.eq.s32.totalorder %s25, 0
      %p130 = por %p128, %p129
      %p131 = scmp.ne.s32.totalorder %s117, %s118
      %p132 = scmp.eq.s32.totalorder %s26, 3
      %p133 = por %p131, %p132
      %p135 = scmp.ne.s32.totalorder %s118, %s134
      %p136 = scmp.eq.s32.totalorder %s26, 0
      %p137 = por %p135, %p136
      %s139 = sadd.s32 %s138, 1
      %p142 = scmp.eq.s32.totalorder %s20, 3
      %p143 = scmp.ne.s32.totalorder %s138, %s140
      %p144 = scmp.eq.s32.totalorder %s20, 0
      %p145 = por %p143, %p144
      %p146 = scmp.ne.s32.totalorder %s138, %s140
      %p147 = scmp.eq.s32.totalorder %s25, 3
      %p148 = por %p146, %p147
      %p149 = scmp.ne.s32.totalorder %s140, %s141
      %p150 = scmp.eq.s32.totalorder %s25, 0
      %p151 = por %p149, %p150
      %p152 = scmp.ne.s32.totalorder %s140, %s141
      %p153 = scmp.eq.s32.totalorder %s26, 3
      %p154 = por %p152, %p153
      %p156 = scmp.ne.s32.totalorder %s141, %s155
      %p157 = scmp.eq.s32.totalorder %s26, 0
      %p158 = por %p156, %p157
      %s160 = sadd.s32 %s159, 1
      %p163 = scmp.eq.s32.totalorder %s20, 3
      %p164 = scmp.ne.s32.totalorder %s159, %s161
      %p165 = scmp.eq.s32.totalorder %s20, 0
      %p166 = por %p164, %p165
      %p167 = scmp.ne.s32.totalorder %s159, %s161
      %p168 = scmp.eq.s32.totalorder %s25, 3
      %p169 = por %p167, %p168
      %p170 = scmp.ne.s32.totalorder %s161, %s162
      %p171 = scmp.eq.s32.totalorder %s25, 0
      %p172 = por %p170, %p171
      %p173 = scmp.ne.s32.totalorder %s161, %s162
      %p174 = scmp.eq.s32.totalorder %s26, 3
      %p175 = por %p173, %p174
      %p177 = scmp.ne.s32.totalorder %s162, %s176
      %p178 = scmp.eq.s32.totalorder %s26, 0
      %p179 = por %p177, %p178
      %s180 = ssub.s32 %s27, %s39
      %p181 = scmp.eq.s32.totalorder %s180, 0
      %s183 = sadd.s32 %s182, 1
      %s184 = scalar_select %p181, %s182, %s183
      %p187 = pneg %p181
      %p188 = scmp.eq.s32.totalorder %s20, 3
      %p189 = por %p187, %p188
      %p190 = scmp.ne.s32.totalorder %s182, %s185
      %p191 = scmp.eq.s32.totalorder %s20, 0
      %p192 = por %p190, %p191
      %p193 = scmp.ne.s32.totalorder %s182, %s185
      %p194 = scmp.eq.s32.totalorder %s25, 3
      %p195 = por %p193, %p194
      %p196 = scmp.ne.s32.totalorder %s185, %s186
      %p197 = scmp.eq.s32.totalorder %s25, 0
      %p198 = por %p196, %p197
      %p199 = scmp.ne.s32.totalorder %s185, %s186
      %p200 = scmp.eq.s32.totalorder %s26, 3
      %p201 = por %p199, %p200
      %p203 = scmp.ne.s32.totalorder %s186, %s202
      %p204 = scmp.eq.s32.totalorder %s26, 0
      %p205 = por %p203, %p204
      %s206 = ssub.s32 %s27, %s39
      %p207 = scmp.eq.s32.totalorder %s206, 0
      %s209 = sadd.s32 %s208, 1
      %s210 = scalar_select %p207, %s208, %s209
      %p213 = pneg %p207
      %p214 = scmp.eq.s32.totalorder %s20, 3
      %p215 = por %p213, %p214
      %p216 = scmp.ne.s32.totalorder %s208, %s211
      %p217 = scmp.eq.s32.totalorder %s20, 0
      %p218 = por %p216, %p217
      %p219 = scmp.ne.s32.totalorder %s208, %s211
      %p220 = scmp.eq.s32.totalorder %s25, 3
      %p221 = por %p219, %p220
      %p222 = scmp.ne.s32.totalorder %s211, %s212
      %p223 = scmp.eq.s32.totalorder %s25, 0
      %p224 = por %p222, %p223
      %p225 = scmp.ne.s32.totalorder %s211, %s212
      %p226 = scmp.eq.s32.totalorder %s26, 3
      %p227 = por %p225, %p226
      %p229 = scmp.ne.s32.totalorder %s212, %s228
      %p230 = scmp.eq.s32.totalorder %s26, 0
      %p231 = por %p229, %p230
      %s232 = ssub.s32 %s27, %s39
      %p233 = scmp.eq.s32.totalorder %s232, 0
      %s235 = sadd.s32 %s234, 1
      %s236 = scalar_select %p233, %s234, %s235
      %p239 = pneg %p233
      %p240 = scmp.eq.s32.totalorder %s20, 3
      %p241 = por %p239, %p240
      %p242 = scmp.ne.s32.totalorder %s234, %s237
      %p243 = scmp.eq.s32.totalorder %s20, 0
      %p244 = por %p242, %p243
      %p245 = scmp.ne.s32.totalorder %s234, %s237
      %p246 = scmp.eq.s32.totalorder %s25, 3
      %p247 = por %p245, %p246
      %p248 = scmp.ne.s32.totalorder %s237, %s238
      %p249 = scmp.eq.s32.totalorder %s25, 0
      %p250 = por %p248, %p249
      %p251 = scmp.ne.s32.totalorder %s237, %s238
      %p252 = scmp.eq.s32.totalorder %s26, 3
      %p253 = por %p251, %p252
      %p255 = scmp.ne.s32.totalorder %s238, %s254
      %p256 = scmp.eq.s32.totalorder %s26, 0
      %p257 = por %p255, %p256
      %p258 = scmp.le.s32.totalorder 1, %s20
      %p259 = scmp.lt.s32.totalorder %s20, 5
      %p260 = pnand %p258, %p259
      %p261 = pneg %p260
      // Predicated region
      $region9: #{tpu_custom_call.1} parent=5 // pred_check
        _
      $region10: #{tpu_custom_call.1} parent=5 // pred_check_branch
        %263 = sbr.rel (%p260) target = $region12
      $region11: #{tpu_custom_call.1} parent=5 // pred_region
        %s264 = ssub.s32 %s20, 1
        // Predicated region
        $region13: #{tpu_custom_call.1} parent=11 // pred_check
          %p265 = pneg %p53
        $region14: #{tpu_custom_call.1} parent=11 // pred_check_branch
          %267 = sbr.rel (%p265) target = $region16
        $region15: #{tpu_custom_call.1} parent=11 // pred_region
          %s269 = ssub.s32 16, 16
          %270 = vsyncadd [#allocation7], %s269
          %s272 = sshll.u32 %s0, 4
          %s273 = int_to_ptr.vmem [resolvable:$true] %s272
          %275 = dma.vmem_to_smem %s273, 16, [#allocation5], [#allocation7]
        $region16: #{tpu_custom_call.1} parent=11 // pred_fallthru
          _
        // Predicated region
        $region17: #{tpu_custom_call.1} parent=11 // pred_check
          %p276 = pneg %p74
        $region18: #{tpu_custom_call.1} parent=11 // pred_check_branch
          %278 = sbr.rel (%p276) target = $region20
        $region19: #{tpu_custom_call.1} parent=11 // pred_region
          _
        $region20: #{tpu_custom_call.1} parent=11 // pred_fallthru
          _
        // Predicated region
        $region21: #{tpu_custom_call.1} parent=11 // pred_check
          %p279 = pneg %p151
        $region22: #{tpu_custom_call.1} parent=11 // pred_check_branch
          %281 = sbr.rel (%p279) target = $region24
        $region23: #{tpu_custom_call.1} parent=11 // pred_region
          _
        $region24: #{tpu_custom_call.1} parent=11 // pred_fallthru
          _
        // Predicated region
        $region25: #{tpu_custom_call.1} parent=11 // pred_check
          %p282 = pneg %p172
        $region26: #{tpu_custom_call.1} parent=11 // pred_check_branch
          %284 = sbr.rel (%p282) target = $region28
        $region27: #{tpu_custom_call.1} parent=11 // pred_region
          _
        $region28: #{tpu_custom_call.1} parent=11 // pred_fallthru
          _
      $region12: #{tpu_custom_call.1} parent=5 // pred_fallthru
        _
      %p285 = scmp.lt.s32.totalorder %s20, 4
      // Predicated region
      $region29: #{tpu_custom_call.1} parent=5 // pred_check
        %p286 = pneg %p285
      $region30: #{tpu_custom_call.1} parent=5 // pred_check_branch
        %288 = sbr.rel (%p286) target = $region32
      $region31: #{tpu_custom_call.1} parent=5 // pred_region
        // Predicated region
        $region33: #{tpu_custom_call.1} parent=31 // pred_check
          %p289 = pneg %p96
        $region34: #{tpu_custom_call.1} parent=31 // pred_check_branch
          %291 = sbr.rel (%p289) target = $region36
        $region35: #{tpu_custom_call.1} parent=31 // pred_region
          %s292 = smul.u32 2, %s28
          %p293 = scmp.lt.s32.totalorder %s27, 1
          %s294 = scalar_select %p293, %s27, 1
          %p295 = scmp.lt.s32.totalorder %s292, 3
          %s296 = scalar_select %p295, %s292, 3
          %s297 = smul.addr %s294, 4
          %s298 = sadd.s32 %s296, %s297
          %s299 = smul.addr %s298, 8
          %s300 = scalar_lea.vmem %s2, %s299
          %s301 = smul.u32 2, %s28
        $region36: #{tpu_custom_call.1} parent=31 // pred_fallthru
          _
        // Predicated region
        $region37: #{tpu_custom_call.1} parent=31 // pred_check
          %p302 = pneg %p124
        $region38: #{tpu_custom_call.1} parent=31 // pred_check_branch
          %304 = sbr.rel (%p302) target = $region40
        $region39: #{tpu_custom_call.1} parent=31 // pred_region
          %s305 = sand.u32 %s114, 1
          %s306 = sand.u32 %s114, 1
          %s307 = smul.addr %s306, 1024
          %s308 = scalar_lea.vmem [#allocation8], %s307
          %s309 = smul.u32 8, %s27
          %s310 = smul.u32 32, %s28
          %s311 = smul.addr %s309, 64
          %s312 = sadd.s32 %s310, %s311
          %s313 = smul.addr %s312, 4
          %s314 = scalar_lea.vmem %s3, %s313
          // Predicated region
          $region41: #{tpu_custom_call.1} parent=39 // pred_check
            _
          $region42: #{tpu_custom_call.1} parent=39 // pred_check_branch
            %316 = sbr.rel (0) target = $region44
          $region43: #{tpu_custom_call.1} parent=39 // pred_region
            // Predicated region
            $region45: #{tpu_custom_call.1} parent=43 // pred_check
              _
            $region46: #{tpu_custom_call.1} parent=43 // pred_check_branch
              %318 = sbr.rel target = $region48
            $region47: #{tpu_custom_call.1} parent=43 // pred_region
              // Predicated region
              $region60: #{tpu_custom_call.1} parent=47 // pred_check
                _
              $region61: #{tpu_custom_call.1} parent=47 // pred_check_branch
                %843 = sbr.rel (0) target = $region63
              $region62: #{tpu_custom_call.1} parent=47 // pred_region
                loop: start=0, step=1, limit=1
                $region64: #{tpu_custom_call.1} parent=62 // loop_pre_header
                  _
                $region65: #{tpu_custom_call.1} parent=62 // loop_header
                  %s845 = sphi 0, %s849
                  %p846 = scmp.ge.s32.totalorder %s845, 1
                  %s850 = sphi %s314, %s314
                  %s851 = sphi %s308, %s308
                $region66: #{tpu_custom_call.1} parent=62 // loop_header_branch
                  %848 = sbr.rel (%p846) target = $region70
                $region67: #{tpu_custom_call.1} parent=62 // loop_body
                  _
                $region68: #{tpu_custom_call.1} parent=62 // loop_footer
                  %s849 = sadd.s32 1, %s845
                $region69: #{tpu_custom_call.1} parent=62 // loop_footer_branch
                  %844 = sbr.rel target = $region65
                $region70: #{tpu_custom_call.1} parent=62 // loop_exit
                  _
                loop: start=0, step=1, limit=1
                $region71: #{tpu_custom_call.1} parent=62 // loop_pre_header
                  _
                $region72: #{tpu_custom_call.1} parent=62 // loop_header
                  %s854 = sphi 0, %s858
                  %p855 = scmp.ge.s32.totalorder %s854, 1
                  %s859 = sphi %s314, %s314
                  %s860 = sphi %s308, %s308
                $region73: #{tpu_custom_call.1} parent=62 // loop_header_branch
                  %857 = sbr.rel (%p855) target = $region77
                $region74: #{tpu_custom_call.1} parent=62 // loop_body
                  %v861 = vld [vmem:[%s859] sm:$0xf]
                  %862 = vst [vmem:[%s860] sm:$0xf] %v861
                  %v863 = vld [vmem:[%s859 + $0x4] sm:$0xf]
                  %864 = vst [vmem:[%s860 + $0x4] sm:$0xf] %v863
                  %v865 = vld [vmem:[%s859 + $0x8] sm:$0xf]
                  %866 = vst [vmem:[%s860 + $0x8] sm:$0xf] %v865
                  %v867 = vld [vmem:[%s859 + $0xc] sm:$0xf]
                  %868 = vst [vmem:[%s860 + $0xc] sm:$0xf] %v867
                  %v869 = vld [vmem:[%s859 + $0x10] sm:$0xf]
                  %870 = vst [vmem:[%s860 + $0x10] sm:$0xf] %v869
                  %v871 = vld [vmem:[%s859 + $0x14] sm:$0xf]
                  %872 = vst [vmem:[%s860 + $0x14] sm:$0xf] %v871
                  %v873 = vld [vmem:[%s859 + $0x18] sm:$0xf]
                  %874 = vst [vmem:[%s860 + $0x18] sm:$0xf] %v873
                  %v875 = vld [vmem:[%s859 + $0x1c] sm:$0xf]
                  %876 = vst [vmem:[%s860 + $0x1c] sm:$0xf] %v875
                  %v877 = vld [vmem:[%s859 + $0x20] sm:$0xf]
                  %878 = vst [vmem:[%s860 + $0x20] sm:$0xf] %v877
                  %v879 = vld [vmem:[%s859 + $0x24] sm:$0xf]
                  %880 = vst [vmem:[%s860 + $0x24] sm:$0xf] %v879
                  %v881 = vld [vmem:[%s859 + $0x28] sm:$0xf]
                  %882 = vst [vmem:[%s860 + $0x28] sm:$0xf] %v881
                  %v883 = vld [vmem:[%s859 + $0x2c] sm:$0xf]
                  %884 = vst [vmem:[%s860 + $0x2c] sm:$0xf] %v883
                  %v885 = vld [vmem:[%s859 + $0x30] sm:$0xf]
                  %886 = vst [vmem:[%s860 + $0x30] sm:$0xf] %v885
                  %v887 = vld [vmem:[%s859 + $0x34] sm:$0xf]
                  %888 = vst [vmem:[%s860 + $0x34] sm:$0xf] %v887
                  %v889 = vld [vmem:[%s859 + $0x38] sm:$0xf]
                  %890 = vst [vmem:[%s860 + $0x38] sm:$0xf] %v889
                  %v891 = vld [vmem:[%s859 + $0x3c] sm:$0xf]
                  %892 = vst [vmem:[%s860 + $0x3c] sm:$0xf] %v891
                  %v893 = vld [vmem:[%s859 + $0x40] sm:$0xf]
                  %894 = vst [vmem:[%s860 + $0x40] sm:$0xf] %v893
                  %v895 = vld [vmem:[%s859 + $0x44] sm:$0xf]
                  %896 = vst [vmem:[%s860 + $0x44] sm:$0xf] %v895
                  %v897 = vld [vmem:[%s859 + $0x48] sm:$0xf]
                  %898 = vst [vmem:[%s860 + $0x48] sm:$0xf] %v897
                  %v899 = vld [vmem:[%s859 + $0x4c] sm:$0xf]
                  %900 = vst [vmem:[%s860 + $0x4c] sm:$0xf] %v899
                  %v901 = vld [vmem:[%s859 + $0x50] sm:$0xf]
                  %902 = vst [vmem:[%s860 + $0x50] sm:$0xf] %v901
                  %v903 = vld [vmem:[%s859 + $0x54] sm:$0xf]
                  %904 = vst [vmem:[%s860 + $0x54] sm:$0xf] %v903
                  %v905 = vld [vmem:[%s859 + $0x58] sm:$0xf]
                  %906 = vst [vmem:[%s860 + $0x58] sm:$0xf] %v905
                  %v907 = vld [vmem:[%s859 + $0x5c] sm:$0xf]
                  %908 = vst [vmem:[%s860 + $0x5c] sm:$0xf] %v907
                  %v909 = vld [vmem:[%s859 + $0x60] sm:$0xf]
                  %910 = vst [vmem:[%s860 + $0x60] sm:$0xf] %v909
                  %v911 = vld [vmem:[%s859 + $0x64] sm:$0xf]
                  %912 = vst [vmem:[%s860 + $0x64] sm:$0xf] %v911
                  %v913 = vld [vmem:[%s859 + $0x68] sm:$0xf]
                  %914 = vst [vmem:[%s860 + $0x68] sm:$0xf] %v913
                  %v915 = vld [vmem:[%s859 + $0x6c] sm:$0xf]
                  %916 = vst [vmem:[%s860 + $0x6c] sm:$0xf] %v915
                  %v917 = vld [vmem:[%s859 + $0x70] sm:$0xf]
                  %918 = vst [vmem:[%s860 + $0x70] sm:$0xf] %v917
                  %v919 = vld [vmem:[%s859 + $0x74] sm:$0xf]
                  %920 = vst [vmem:[%s860 + $0x74] sm:$0xf] %v919
                  %v921 = vld [vmem:[%s859 + $0x78] sm:$0xf]
                  %922 = vst [vmem:[%s860 + $0x78] sm:$0xf] %v921
                  %v923 = vld [vmem:[%s859 + $0x7c] sm:$0xf]
                  %924 = vst [vmem:[%s860 + $0x7c] sm:$0xf] %v923
                  %v925 = vld [vmem:[%s859 + $0x100] sm:$0xf]
                  %926 = vst [vmem:[%s860 + $0x80] sm:$0xf] %v925
                  %v927 = vld [vmem:[%s859 + $0x104] sm:$0xf]
                  %928 = vst [vmem:[%s860 + $0x84] sm:$0xf] %v927
                  %v929 = vld [vmem:[%s859 + $0x108] sm:$0xf]
                  %930 = vst [vmem:[%s860 + $0x88] sm:$0xf] %v929
                  %v931 = vld [vmem:[%s859 + $0x10c] sm:$0xf]
                  %932 = vst [vmem:[%s860 + $0x8c] sm:$0xf] %v931
                  %v933 = vld [vmem:[%s859 + $0x110] sm:$0xf]
                  %934 = vst [vmem:[%s860 + $0x90] sm:$0xf] %v933
                  %v935 = vld [vmem:[%s859 + $0x114] sm:$0xf]
                  %936 = vst [vmem:[%s860 + $0x94] sm:$0xf] %v935
                  %v937 = vld [vmem:[%s859 + $0x118] sm:$0xf]
                  %938 = vst [vmem:[%s860 + $0x98] sm:$0xf] %v937
                  %v939 = vld [vmem:[%s859 + $0x11c] sm:$0xf]
                  %940 = vst [vmem:[%s860 + $0x9c] sm:$0xf] %v939
                  %v941 = vld [vmem:[%s859 + $0x120] sm:$0xf]
                  %942 = vst [vmem:[%s860 + $0xa0] sm:$0xf] %v941
                  %v943 = vld [vmem:[%s859 + $0x124] sm:$0xf]
                  %944 = vst [vmem:[%s860 + $0xa4] sm:$0xf] %v943
                  %v945 = vld [vmem:[%s859 + $0x128] sm:$0xf]
                  %946 = vst [vmem:[%s860 + $0xa8] sm:$0xf] %v945
                  %v947 = vld [vmem:[%s859 + $0x12c] sm:$0xf]
                  %948 = vst [vmem:[%s860 + $0xac] sm:$0xf] %v947
                  %v949 = vld [vmem:[%s859 + $0x130] sm:$0xf]
                  %950 = vst [vmem:[%s860 + $0xb0] sm:$0xf] %v949
                  %v951 = vld [vmem:[%s859 + $0x134] sm:$0xf]
                  %952 = vst [vmem:[%s860 + $0xb4] sm:$0xf] %v951
                  %v953 = vld [vmem:[%s859 + $0x138] sm:$0xf]
                  %954 = vst [vmem:[%s860 + $0xb8] sm:$0xf] %v953
                  %v955 = vld [vmem:[%s859 + $0x13c] sm:$0xf]
                  %956 = vst [vmem:[%s860 + $0xbc] sm:$0xf] %v955
                  %v957 = vld [vmem:[%s859 + $0x140] sm:$0xf]
                  %958 = vst [vmem:[%s860 + $0xc0] sm:$0xf] %v957
                  %v959 = vld [vmem:[%s859 + $0x144] sm:$0xf]
                  %960 = vst [vmem:[%s860 + $0xc4] sm:$0xf] %v959
                  %v961 = vld [vmem:[%s859 + $0x148] sm:$0xf]
                  %962 = vst [vmem:[%s860 + $0xc8] sm:$0xf] %v961
                  %v963 = vld [vmem:[%s859 + $0x14c] sm:$0xf]
                  %964 = vst [vmem:[%s860 + $0xcc] sm:$0xf] %v963
                  %v965 = vld [vmem:[%s859 + $0x150] sm:$0xf]
                  %966 = vst [vmem:[%s860 + $0xd0] sm:$0xf] %v965
                  %v967 = vld [vmem:[%s859 + $0x154] sm:$0xf]
                  %968 = vst [vmem:[%s860 + $0xd4] sm:$0xf] %v967
                  %v969 = vld [vmem:[%s859 + $0x158] sm:$0xf]
                  %970 = vst [vmem:[%s860 + $0xd8] sm:$0xf] %v969
                  %v971 = vld [vmem:[%s859 + $0x15c] sm:$0xf]
                  %972 = vst [vmem:[%s860 + $0xdc] sm:$0xf] %v971
                  %v973 = vld [vmem:[%s859 + $0x160] sm:$0xf]
                  %974 = vst [vmem:[%s860 + $0xe0] sm:$0xf] %v973
                  %v975 = vld [vmem:[%s859 + $0x164] sm:$0xf]
                  %976 = vst [vmem:[%s860 + $0xe4] sm:$0xf] %v975
                  %v977 = vld [vmem:[%s859 + $0x168] sm:$0xf]
                  %978 = vst [vmem:[%s860 + $0xe8] sm:$0xf] %v977
                  %v979 = vld [vmem:[%s859 + $0x16c] sm:$0xf]
                  %980 = vst [vmem:[%s860 + $0xec] sm:$0xf] %v979
                  %v981 = vld [vmem:[%s859 + $0x170] sm:$0xf]
                  %982 = vst [vmem:[%s860 + $0xf0] sm:$0xf] %v981
                  %v983 = vld [vmem:[%s859 + $0x174] sm:$0xf]
                  %984 = vst [vmem:[%s860 + $0xf4] sm:$0xf] %v983
                  %v985 = vld [vmem:[%s859 + $0x178] sm:$0xf]
                  %986 = vst [vmem:[%s860 + $0xf8] sm:$0xf] %v985
                  %v987 = vld [vmem:[%s859 + $0x17c] sm:$0xf]
                  %988 = vst [vmem:[%s860 + $0xfc] sm:$0xf] %v987
                  %v989 = vld [vmem:[%s859 + $0x200] sm:$0xf]
                  %990 = vst [vmem:[%s860 + $0x100] sm:$0xf] %v989
                  %v991 = vld [vmem:[%s859 + $0x204] sm:$0xf]
                  %992 = vst [vmem:[%s860 + $0x104] sm:$0xf] %v991
                  %v993 = vld [vmem:[%s859 + $0x208] sm:$0xf]
                  %994 = vst [vmem:[%s860 + $0x108] sm:$0xf] %v993
                  %v995 = vld [vmem:[%s859 + $0x20c] sm:$0xf]
                  %996 = vst [vmem:[%s860 + $0x10c] sm:$0xf] %v995
                  %v997 = vld [vmem:[%s859 + $0x210] sm:$0xf]
                  %998 = vst [vmem:[%s860 + $0x110] sm:$0xf] %v997
                  %v999 = vld [vmem:[%s859 + $0x214] sm:$0xf]
                  %1000 = vst [vmem:[%s860 + $0x114] sm:$0xf] %v999
                  %v1001 = vld [vmem:[%s859 + $0x218] sm:$0xf]
                  %1002 = vst [vmem:[%s860 + $0x118] sm:$0xf] %v1001
                  %v1003 = vld [vmem:[%s859 + $0x21c] sm:$0xf]
                  %1004 = vst [vmem:[%s860 + $0x11c] sm:$0xf] %v1003
                  %v1005 = vld [vmem:[%s859 + $0x220] sm:$0xf]
                  %1006 = vst [vmem:[%s860 + $0x120] sm:$0xf] %v1005
                  %v1007 = vld [vmem:[%s859 + $0x224] sm:$0xf]
                  %1008 = vst [vmem:[%s860 + $0x124] sm:$0xf] %v1007
                  %v1009 = vld [vmem:[%s859 + $0x228] sm:$0xf]
                  %1010 = vst [vmem:[%s860 + $0x128] sm:$0xf] %v1009
                  %v1011 = vld [vmem:[%s859 + $0x22c] sm:$0xf]
                  %1012 = vst [vmem:[%s860 + $0x12c] sm:$0xf] %v1011
                  %v1013 = vld [vmem:[%s859 + $0x230] sm:$0xf]
                  %1014 = vst [vmem:[%s860 + $0x130] sm:$0xf] %v1013
                  %v1015 = vld [vmem:[%s859 + $0x234] sm:$0xf]
                  %1016 = vst [vmem:[%s860 + $0x134] sm:$0xf] %v1015
                  %v1017 = vld [vmem:[%s859 + $0x238] sm:$0xf]
                  %1018 = vst [vmem:[%s860 + $0x138] sm:$0xf] %v1017
                  %v1019 = vld [vmem:[%s859 + $0x23c] sm:$0xf]
                  %1020 = vst [vmem:[%s860 + $0x13c] sm:$0xf] %v1019
                  %v1021 = vld [vmem:[%s859 + $0x240] sm:$0xf]
                  %1022 = vst [vmem:[%s860 + $0x140] sm:$0xf] %v1021
                  %v1023 = vld [vmem:[%s859 + $0x244] sm:$0xf]
                  %1024 = vst [vmem:[%s860 + $0x144] sm:$0xf] %v1023
                  %v1025 = vld [vmem:[%s859 + $0x248] sm:$0xf]
                  %1026 = vst [vmem:[%s860 + $0x148] sm:$0xf] %v1025
                  %v1027 = vld [vmem:[%s859 + $0x24c] sm:$0xf]
                  %1028 = vst [vmem:[%s860 + $0x14c] sm:$0xf] %v1027
                  %v1029 = vld [vmem:[%s859 + $0x250] sm:$0xf]
                  %1030 = vst [vmem:[%s860 + $0x150] sm:$0xf] %v1029
                  %v1031 = vld [vmem:[%s859 + $0x254] sm:$0xf]
                  %1032 = vst [vmem:[%s860 + $0x154] sm:$0xf] %v1031
                  %v1033 = vld [vmem:[%s859 + $0x258] sm:$0xf]
                  %1034 = vst [vmem:[%s860 + $0x158] sm:$0xf] %v1033
                  %v1035 = vld [vmem:[%s859 + $0x25c] sm:$0xf]
                  %1036 = vst [vmem:[%s860 + $0x15c] sm:$0xf] %v1035
                  %v1037 = vld [vmem:[%s859 + $0x260] sm:$0xf]
                  %1038 = vst [vmem:[%s860 + $0x160] sm:$0xf] %v1037
                  %v1039 = vld [vmem:[%s859 + $0x264] sm:$0xf]
                  %1040 = vst [vmem:[%s860 + $0x164] sm:$0xf] %v1039
                  %v1041 = vld [vmem:[%s859 + $0x268] sm:$0xf]
                  %1042 = vst [vmem:[%s860 + $0x168] sm:$0xf] %v1041
                  %v1043 = vld [vmem:[%s859 + $0x26c] sm:$0xf]
                  %1044 = vst [vmem:[%s860 + $0x16c] sm:$0xf] %v1043
                  %v1045 = vld [vmem:[%s859 + $0x270] sm:$0xf]
                  %1046 = vst [vmem:[%s860 + $0x170] sm:$0xf] %v1045
                  %v1047 = vld [vmem:[%s859 + $0x274] sm:$0xf]
                  %1048 = vst [vmem:[%s860 + $0x174] sm:$0xf] %v1047
                  %v1049 = vld [vmem:[%s859 + $0x278] sm:$0xf]
                  %1050 = vst [vmem:[%s860 + $0x178] sm:$0xf] %v1049
                  %v1051 = vld [vmem:[%s859 + $0x27c] sm:$0xf]
                  %1052 = vst [vmem:[%s860 + $0x17c] sm:$0xf] %v1051
                  %v1053 = vld [vmem:[%s859 + $0x300] sm:$0xf]
                  %1054 = vst [vmem:[%s860 + $0x180] sm:$0xf] %v1053
                  %v1055 = vld [vmem:[%s859 + $0x304] sm:$0xf]
                  %1056 = vst [vmem:[%s860 + $0x184] sm:$0xf] %v1055
                  %v1057 = vld [vmem:[%s859 + $0x308] sm:$0xf]
                  %1058 = vst [vmem:[%s860 + $0x188] sm:$0xf] %v1057
                  %v1059 = vld [vmem:[%s859 + $0x30c] sm:$0xf]
                  %1060 = vst [vmem:[%s860 + $0x18c] sm:$0xf] %v1059
                  %v1061 = vld [vmem:[%s859 + $0x310] sm:$0xf]
                  %1062 = vst [vmem:[%s860 + $0x190] sm:$0xf] %v1061
                  %v1063 = vld [vmem:[%s859 + $0x314] sm:$0xf]
                  %1064 = vst [vmem:[%s860 + $0x194] sm:$0xf] %v1063
                  %v1065 = vld [vmem:[%s859 + $0x318] sm:$0xf]
                  %1066 = vst [vmem:[%s860 + $0x198] sm:$0xf] %v1065
                  %v1067 = vld [vmem:[%s859 + $0x31c] sm:$0xf]
                  %1068 = vst [vmem:[%s860 + $0x19c] sm:$0xf] %v1067
                  %v1069 = vld [vmem:[%s859 + $0x320] sm:$0xf]
                  %1070 = vst [vmem:[%s860 + $0x1a0] sm:$0xf] %v1069
                  %v1071 = vld [vmem:[%s859 + $0x324] sm:$0xf]
                  %1072 = vst [vmem:[%s860 + $0x1a4] sm:$0xf] %v1071
                  %v1073 = vld [vmem:[%s859 + $0x328] sm:$0xf]
                  %1074 = vst [vmem:[%s860 + $0x1a8] sm:$0xf] %v1073
                  %v1075 = vld [vmem:[%s859 + $0x32c] sm:$0xf]
                  %1076 = vst [vmem:[%s860 + $0x1ac] sm:$0xf] %v1075
                  %v1077 = vld [vmem:[%s859 + $0x330] sm:$0xf]
                  %1078 = vst [vmem:[%s860 + $0x1b0] sm:$0xf] %v1077
                  %v1079 = vld [vmem:[%s859 + $0x334] sm:$0xf]
                  %1080 = vst [vmem:[%s860 + $0x1b4] sm:$0xf] %v1079
                  %v1081 = vld [vmem:[%s859 + $0x338] sm:$0xf]
                  %1082 = vst [vmem:[%s860 + $0x1b8] sm:$0xf] %v1081
                  %v1083 = vld [vmem:[%s859 + $0x33c] sm:$0xf]
                  %1084 = vst [vmem:[%s860 + $0x1bc] sm:$0xf] %v1083
                  %v1085 = vld [vmem:[%s859 + $0x340] sm:$0xf]
                  %1086 = vst [vmem:[%s860 + $0x1c0] sm:$0xf] %v1085
                  %v1087 = vld [vmem:[%s859 + $0x344] sm:$0xf]
                  %1088 = vst [vmem:[%s860 + $0x1c4] sm:$0xf] %v1087
                  %v1089 = vld [vmem:[%s859 + $0x348] sm:$0xf]
                  %1090 = vst [vmem:[%s860 + $0x1c8] sm:$0xf] %v1089
                  %v1091 = vld [vmem:[%s859 + $0x34c] sm:$0xf]
                  %1092 = vst [vmem:[%s860 + $0x1cc] sm:$0xf] %v1091
                  %v1093 = vld [vmem:[%s859 + $0x350] sm:$0xf]
                  %1094 = vst [vmem:[%s860 + $0x1d0] sm:$0xf] %v1093
                  %v1095 = vld [vmem:[%s859 + $0x354] sm:$0xf]
                  %1096 = vst [vmem:[%s860 + $0x1d4] sm:$0xf] %v1095
                  %v1097 = vld [vmem:[%s859 + $0x358] sm:$0xf]
                  %1098 = vst [vmem:[%s860 + $0x1d8] sm:$0xf] %v1097
                  %v1099 = vld [vmem:[%s859 + $0x35c] sm:$0xf]
                  %1100 = vst [vmem:[%s860 + $0x1dc] sm:$0xf] %v1099
                  %v1101 = vld [vmem:[%s859 + $0x360] sm:$0xf]
                  %1102 = vst [vmem:[%s860 + $0x1e0] sm:$0xf] %v1101
                  %v1103 = vld [vmem:[%s859 + $0x364] sm:$0xf]
                  %1104 = vst [vmem:[%s860 + $0x1e4] sm:$0xf] %v1103
                  %v1105 = vld [vmem:[%s859 + $0x368] sm:$0xf]
                  %1106 = vst [vmem:[%s860 + $0x1e8] sm:$0xf] %v1105
                  %v1107 = vld [vmem:[%s859 + $0x36c] sm:$0xf]
                  %1108 = vst [vmem:[%s860 + $0x1ec] sm:$0xf] %v1107
                  %v1109 = vld [vmem:[%s859 + $0x370] sm:$0xf]
                  %1110 = vst [vmem:[%s860 + $0x1f0] sm:$0xf] %v1109
                  %v1111 = vld [vmem:[%s859 + $0x374] sm:$0xf]
                  %1112 = vst [vmem:[%s860 + $0x1f4] sm:$0xf] %v1111
                  %v1113 = vld [vmem:[%s859 + $0x378] sm:$0xf]
                  %1114 = vst [vmem:[%s860 + $0x1f8] sm:$0xf] %v1113
                  %v1115 = vld [vmem:[%s859 + $0x37c] sm:$0xf]
                  %1116 = vst [vmem:[%s860 + $0x1fc] sm:$0xf] %v1115
                  %v1117 = vld [vmem:[%s859 + $0x400] sm:$0xf]
                  %1118 = vst [vmem:[%s860 + $0x200] sm:$0xf] %v1117
                  %v1119 = vld [vmem:[%s859 + $0x404] sm:$0xf]
                  %1120 = vst [vmem:[%s860 + $0x204] sm:$0xf] %v1119
                  %v1121 = vld [vmem:[%s859 + $0x408] sm:$0xf]
                  %1122 = vst [vmem:[%s860 + $0x208] sm:$0xf] %v1121
                  %v1123 = vld [vmem:[%s859 + $0x40c] sm:$0xf]
                  %1124 = vst [vmem:[%s860 + $0x20c] sm:$0xf] %v1123
                  %v1125 = vld [vmem:[%s859 + $0x410] sm:$0xf]
                  %1126 = vst [vmem:[%s860 + $0x210] sm:$0xf] %v1125
                  %v1127 = vld [vmem:[%s859 + $0x414] sm:$0xf]
                  %1128 = vst [vmem:[%s860 + $0x214] sm:$0xf] %v1127
                  %v1129 = vld [vmem:[%s859 + $0x418] sm:$0xf]
                  %1130 = vst [vmem:[%s860 + $0x218] sm:$0xf] %v1129
                  %v1131 = vld [vmem:[%s859 + $0x41c] sm:$0xf]
                  %1132 = vst [vmem:[%s860 + $0x21c] sm:$0xf] %v1131
                  %v1133 = vld [vmem:[%s859 + $0x420] sm:$0xf]
                  %1134 = vst [vmem:[%s860 + $0x220] sm:$0xf] %v1133
                  %v1135 = vld [vmem:[%s859 + $0x424] sm:$0xf]
                  %1136 = vst [vmem:[%s860 + $0x224] sm:$0xf] %v1135
                  %v1137 = vld [vmem:[%s859 + $0x428] sm:$0xf]
                  %1138 = vst [vmem:[%s860 + $0x228] sm:$0xf] %v1137
                  %v1139 = vld [vmem:[%s859 + $0x42c] sm:$0xf]
                  %1140 = vst [vmem:[%s860 + $0x22c] sm:$0xf] %v1139
                  %v1141 = vld [vmem:[%s859 + $0x430] sm:$0xf]
                  %1142 = vst [vmem:[%s860 + $0x230] sm:$0xf] %v1141
                  %v1143 = vld [vmem:[%s859 + $0x434] sm:$0xf]
                  %1144 = vst [vmem:[%s860 + $0x234] sm:$0xf] %v1143
                  %v1145 = vld [vmem:[%s859 + $0x438] sm:$0xf]
                  %1146 = vst [vmem:[%s860 + $0x238] sm:$0xf] %v1145
                  %v1147 = vld [vmem:[%s859 + $0x43c] sm:$0xf]
                  %1148 = vst [vmem:[%s860 + $0x23c] sm:$0xf] %v1147
                  %v1149 = vld [vmem:[%s859 + $0x440] sm:$0xf]
                  %1150 = vst [vmem:[%s860 + $0x240] sm:$0xf] %v1149
                  %v1151 = vld [vmem:[%s859 + $0x444] sm:$0xf]
                  %1152 = vst [vmem:[%s860 + $0x244] sm:$0xf] %v1151
                  %v1153 = vld [vmem:[%s859 + $0x448] sm:$0xf]
                  %1154 = vst [vmem:[%s860 + $0x248] sm:$0xf] %v1153
                  %v1155 = vld [vmem:[%s859 + $0x44c] sm:$0xf]
                  %1156 = vst [vmem:[%s860 + $0x24c] sm:$0xf] %v1155
                  %v1157 = vld [vmem:[%s859 + $0x450] sm:$0xf]
                  %1158 = vst [vmem:[%s860 + $0x250] sm:$0xf] %v1157
                  %v1159 = vld [vmem:[%s859 + $0x454] sm:$0xf]
                  %1160 = vst [vmem:[%s860 + $0x254] sm:$0xf] %v1159
                  %v1161 = vld [vmem:[%s859 + $0x458] sm:$0xf]
                  %1162 = vst [vmem:[%s860 + $0x258] sm:$0xf] %v1161
                  %v1163 = vld [vmem:[%s859 + $0x45c] sm:$0xf]
                  %1164 = vst [vmem:[%s860 + $0x25c] sm:$0xf] %v1163
                  %v1165 = vld [vmem:[%s859 + $0x460] sm:$0xf]
                  %1166 = vst [vmem:[%s860 + $0x260] sm:$0xf] %v1165
                  %v1167 = vld [vmem:[%s859 + $0x464] sm:$0xf]
                  %1168 = vst [vmem:[%s860 + $0x264] sm:$0xf] %v1167
                  %v1169 = vld [vmem:[%s859 + $0x468] sm:$0xf]
                  %1170 = vst [vmem:[%s860 + $0x268] sm:$0xf] %v1169
                  %v1171 = vld [vmem:[%s859 + $0x46c] sm:$0xf]
                  %1172 = vst [vmem:[%s860 + $0x26c] sm:$0xf] %v1171
                  %v1173 = vld [vmem:[%s859 + $0x470] sm:$0xf]
                  %1174 = vst [vmem:[%s860 + $0x270] sm:$0xf] %v1173
                  %v1175 = vld [vmem:[%s859 + $0x474] sm:$0xf]
                  %1176 = vst [vmem:[%s860 + $0x274] sm:$0xf] %v1175
                  %v1177 = vld [vmem:[%s859 + $0x478] sm:$0xf]
                  %1178 = vst [vmem:[%s860 + $0x278] sm:$0xf] %v1177
                  %v1179 = vld [vmem:[%s859 + $0x47c] sm:$0xf]
                  %1180 = vst [vmem:[%s860 + $0x27c] sm:$0xf] %v1179
                  %v1181 = vld [vmem:[%s859 + $0x500] sm:$0xf]
                  %1182 = vst [vmem:[%s860 + $0x280] sm:$0xf] %v1181
                  %v1183 = vld [vmem:[%s859 + $0x504] sm:$0xf]
                  %1184 = vst [vmem:[%s860 + $0x284] sm:$0xf] %v1183
                  %v1185 = vld [vmem:[%s859 + $0x508] sm:$0xf]
                  %1186 = vst [vmem:[%s860 + $0x288] sm:$0xf] %v1185
                  %v1187 = vld [vmem:[%s859 + $0x50c] sm:$0xf]
                  %1188 = vst [vmem:[%s860 + $0x28c] sm:$0xf] %v1187
                  %v1189 = vld [vmem:[%s859 + $0x510] sm:$0xf]
                  %1190 = vst [vmem:[%s860 + $0x290] sm:$0xf] %v1189
                  %v1191 = vld [vmem:[%s859 + $0x514] sm:$0xf]
                  %1192 = vst [vmem:[%s860 + $0x294] sm:$0xf] %v1191
                  %v1193 = vld [vmem:[%s859 + $0x518] sm:$0xf]
                  %1194 = vst [vmem:[%s860 + $0x298] sm:$0xf] %v1193
                  %v1195 = vld [vmem:[%s859 + $0x51c] sm:$0xf]
                  %1196 = vst [vmem:[%s860 + $0x29c] sm:$0xf] %v1195
                  %v1197 = vld [vmem:[%s859 + $0x520] sm:$0xf]
                  %1198 = vst [vmem:[%s860 + $0x2a0] sm:$0xf] %v1197
                  %v1199 = vld [vmem:[%s859 + $0x524] sm:$0xf]
                  %1200 = vst [vmem:[%s860 + $0x2a4] sm:$0xf] %v1199
                  %v1201 = vld [vmem:[%s859 + $0x528] sm:$0xf]
                  %1202 = vst [vmem:[%s860 + $0x2a8] sm:$0xf] %v1201
                  %v1203 = vld [vmem:[%s859 + $0x52c] sm:$0xf]
                  %1204 = vst [vmem:[%s860 + $0x2ac] sm:$0xf] %v1203
                  %v1205 = vld [vmem:[%s859 + $0x530] sm:$0xf]
                  %1206 = vst [vmem:[%s860 + $0x2b0] sm:$0xf] %v1205
                  %v1207 = vld [vmem:[%s859 + $0x534] sm:$0xf]
                  %1208 = vst [vmem:[%s860 + $0x2b4] sm:$0xf] %v1207
                  %v1209 = vld [vmem:[%s859 + $0x538] sm:$0xf]
                  %1210 = vst [vmem:[%s860 + $0x2b8] sm:$0xf] %v1209
                  %v1211 = vld [vmem:[%s859 + $0x53c] sm:$0xf]
                  %1212 = vst [vmem:[%s860 + $0x2bc] sm:$0xf] %v1211
                  %v1213 = vld [vmem:[%s859 + $0x540] sm:$0xf]
                  %1214 = vst [vmem:[%s860 + $0x2c0] sm:$0xf] %v1213
                  %v1215 = vld [vmem:[%s859 + $0x544] sm:$0xf]
                  %1216 = vst [vmem:[%s860 + $0x2c4] sm:$0xf] %v1215
                  %v1217 = vld [vmem:[%s859 + $0x548] sm:$0xf]
                  %1218 = vst [vmem:[%s860 + $0x2c8] sm:$0xf] %v1217
                  %v1219 = vld [vmem:[%s859 + $0x54c] sm:$0xf]
                  %1220 = vst [vmem:[%s860 + $0x2cc] sm:$0xf] %v1219
                  %v1221 = vld [vmem:[%s859 + $0x550] sm:$0xf]
                  %1222 = vst [vmem:[%s860 + $0x2d0] sm:$0xf] %v1221
                  %v1223 = vld [vmem:[%s859 + $0x554] sm:$0xf]
                  %1224 = vst [vmem:[%s860 + $0x2d4] sm:$0xf] %v1223
                  %v1225 = vld [vmem:[%s859 + $0x558] sm:$0xf]
                  %1226 = vst [vmem:[%s860 + $0x2d8] sm:$0xf] %v1225
                  %v1227 = vld [vmem:[%s859 + $0x55c] sm:$0xf]
                  %1228 = vst [vmem:[%s860 + $0x2dc] sm:$0xf] %v1227
                  %v1229 = vld [vmem:[%s859 + $0x560] sm:$0xf]
                  %1230 = vst [vmem:[%s860 + $0x2e0] sm:$0xf] %v1229
                  %v1231 = vld [vmem:[%s859 + $0x564] sm:$0xf]
                  %1232 = vst [vmem:[%s860 + $0x2e4] sm:$0xf] %v1231
                  %v1233 = vld [vmem:[%s859 + $0x568] sm:$0xf]
                  %1234 = vst [vmem:[%s860 + $0x2e8] sm:$0xf] %v1233
                  %v1235 = vld [vmem:[%s859 + $0x56c] sm:$0xf]
                  %1236 = vst [vmem:[%s860 + $0x2ec] sm:$0xf] %v1235
                  %v1237 = vld [vmem:[%s859 + $0x570] sm:$0xf]
                  %1238 = vst [vmem:[%s860 + $0x2f0] sm:$0xf] %v1237
                  %v1239 = vld [vmem:[%s859 + $0x574] sm:$0xf]
                  %1240 = vst [vmem:[%s860 + $0x2f4] sm:$0xf] %v1239
                  %v1241 = vld [vmem:[%s859 + $0x578] sm:$0xf]
                  %1242 = vst [vmem:[%s860 + $0x2f8] sm:$0xf] %v1241
                  %v1243 = vld [vmem:[%s859 + $0x57c] sm:$0xf]
                  %1244 = vst [vmem:[%s860 + $0x2fc] sm:$0xf] %v1243
                  %v1245 = vld [vmem:[%s859 + $0x600] sm:$0xf]
                  %1246 = vst [vmem:[%s860 + $0x300] sm:$0xf] %v1245
                  %v1247 = vld [vmem:[%s859 + $0x604] sm:$0xf]
                  %1248 = vst [vmem:[%s860 + $0x304] sm:$0xf] %v1247
                  %v1249 = vld [vmem:[%s859 + $0x608] sm:$0xf]
                  %1250 = vst [vmem:[%s860 + $0x308] sm:$0xf] %v1249
                  %v1251 = vld [vmem:[%s859 + $0x60c] sm:$0xf]
                  %1252 = vst [vmem:[%s860 + $0x30c] sm:$0xf] %v1251
                  %v1253 = vld [vmem:[%s859 + $0x610] sm:$0xf]
                  %1254 = vst [vmem:[%s860 + $0x310] sm:$0xf] %v1253
                  %v1255 = vld [vmem:[%s859 + $0x614] sm:$0xf]
                  %1256 = vst [vmem:[%s860 + $0x314] sm:$0xf] %v1255
                  %v1257 = vld [vmem:[%s859 + $0x618] sm:$0xf]
                  %1258 = vst [vmem:[%s860 + $0x318] sm:$0xf] %v1257
                  %v1259 = vld [vmem:[%s859 + $0x61c] sm:$0xf]
                  %1260 = vst [vmem:[%s860 + $0x31c] sm:$0xf] %v1259
                  %v1261 = vld [vmem:[%s859 + $0x620] sm:$0xf]
                  %1262 = vst [vmem:[%s860 + $0x320] sm:$0xf] %v1261
                  %v1263 = vld [vmem:[%s859 + $0x624] sm:$0xf]
                  %1264 = vst [vmem:[%s860 + $0x324] sm:$0xf] %v1263
                  %v1265 = vld [vmem:[%s859 + $0x628] sm:$0xf]
                  %1266 = vst [vmem:[%s860 + $0x328] sm:$0xf] %v1265
                  %v1267 = vld [vmem:[%s859 + $0x62c] sm:$0xf]
                  %1268 = vst [vmem:[%s860 + $0x32c] sm:$0xf] %v1267
                  %v1269 = vld [vmem:[%s859 + $0x630] sm:$0xf]
                  %1270 = vst [vmem:[%s860 + $0x330] sm:$0xf] %v1269
                  %v1271 = vld [vmem:[%s859 + $0x634] sm:$0xf]
                  %1272 = vst [vmem:[%s860 + $0x334] sm:$0xf] %v1271
                  %v1273 = vld [vmem:[%s859 + $0x638] sm:$0xf]
                  %1274 = vst [vmem:[%s860 + $0x338] sm:$0xf] %v1273
                  %v1275 = vld [vmem:[%s859 + $0x63c] sm:$0xf]
                  %1276 = vst [vmem:[%s860 + $0x33c] sm:$0xf] %v1275
                  %v1277 = vld [vmem:[%s859 + $0x640] sm:$0xf]
                  %1278 = vst [vmem:[%s860 + $0x340] sm:$0xf] %v1277
                  %v1279 = vld [vmem:[%s859 + $0x644] sm:$0xf]
                  %1280 = vst [vmem:[%s860 + $0x344] sm:$0xf] %v1279
                  %v1281 = vld [vmem:[%s859 + $0x648] sm:$0xf]
                  %1282 = vst [vmem:[%s860 + $0x348] sm:$0xf] %v1281
                  %v1283 = vld [vmem:[%s859 + $0x64c] sm:$0xf]
                  %1284 = vst [vmem:[%s860 + $0x34c] sm:$0xf] %v1283
                  %v1285 = vld [vmem:[%s859 + $0x650] sm:$0xf]
                  %1286 = vst [vmem:[%s860 + $0x350] sm:$0xf] %v1285
                  %v1287 = vld [vmem:[%s859 + $0x654] sm:$0xf]
                  %1288 = vst [vmem:[%s860 + $0x354] sm:$0xf] %v1287
                  %v1289 = vld [vmem:[%s859 + $0x658] sm:$0xf]
                  %1290 = vst [vmem:[%s860 + $0x358] sm:$0xf] %v1289
                  %v1291 = vld [vmem:[%s859 + $0x65c] sm:$0xf]
                  %1292 = vst [vmem:[%s860 + $0x35c] sm:$0xf] %v1291
                  %v1293 = vld [vmem:[%s859 + $0x660] sm:$0xf]
                  %1294 = vst [vmem:[%s860 + $0x360] sm:$0xf] %v1293
                  %v1295 = vld [vmem:[%s859 + $0x664] sm:$0xf]
                  %1296 = vst [vmem:[%s860 + $0x364] sm:$0xf] %v1295
                  %v1297 = vld [vmem:[%s859 + $0x668] sm:$0xf]
                  %1298 = vst [vmem:[%s860 + $0x368] sm:$0xf] %v1297
                  %v1299 = vld [vmem:[%s859 + $0x66c] sm:$0xf]
                  %1300 = vst [vmem:[%s860 + $0x36c] sm:$0xf] %v1299
                  %v1301 = vld [vmem:[%s859 + $0x670] sm:$0xf]
                  %1302 = vst [vmem:[%s860 + $0x370] sm:$0xf] %v1301
                  %v1303 = vld [vmem:[%s859 + $0x674] sm:$0xf]
                  %1304 = vst [vmem:[%s860 + $0x374] sm:$0xf] %v1303
                  %v1305 = vld [vmem:[%s859 + $0x678] sm:$0xf]
                  %1306 = vst [vmem:[%s860 + $0x378] sm:$0xf] %v1305
                  %v1307 = vld [vmem:[%s859 + $0x67c] sm:$0xf]
                  %1308 = vst [vmem:[%s860 + $0x37c] sm:$0xf] %v1307
                  %v1309 = vld [vmem:[%s859 + $0x700] sm:$0xf]
                  %1310 = vst [vmem:[%s860 + $0x380] sm:$0xf] %v1309
                  %v1311 = vld [vmem:[%s859 + $0x704] sm:$0xf]
                  %1312 = vst [vmem:[%s860 + $0x384] sm:$0xf] %v1311
                  %v1313 = vld [vmem:[%s859 + $0x708] sm:$0xf]
                  %1314 = vst [vmem:[%s860 + $0x388] sm:$0xf] %v1313
                  %v1315 = vld [vmem:[%s859 + $0x70c] sm:$0xf]
                  %1316 = vst [vmem:[%s860 + $0x38c] sm:$0xf] %v1315
                  %v1317 = vld [vmem:[%s859 + $0x710] sm:$0xf]
                  %1318 = vst [vmem:[%s860 + $0x390] sm:$0xf] %v1317
                  %v1319 = vld [vmem:[%s859 + $0x714] sm:$0xf]
                  %1320 = vst [vmem:[%s860 + $0x394] sm:$0xf] %v1319
                  %v1321 = vld [vmem:[%s859 + $0x718] sm:$0xf]
                  %1322 = vst [vmem:[%s860 + $0x398] sm:$0xf] %v1321
                  %v1323 = vld [vmem:[%s859 + $0x71c] sm:$0xf]
                  %1324 = vst [vmem:[%s860 + $0x39c] sm:$0xf] %v1323
                  %v1325 = vld [vmem:[%s859 + $0x720] sm:$0xf]
                  %1326 = vst [vmem:[%s860 + $0x3a0] sm:$0xf] %v1325
                  %v1327 = vld [vmem:[%s859 + $0x724] sm:$0xf]
                  %1328 = vst [vmem:[%s860 + $0x3a4] sm:$0xf] %v1327
                  %v1329 = vld [vmem:[%s859 + $0x728] sm:$0xf]
                  %1330 = vst [vmem:[%s860 + $0x3a8] sm:$0xf] %v1329
                  %v1331 = vld [vmem:[%s859 + $0x72c] sm:$0xf]
                  %1332 = vst [vmem:[%s860 + $0x3ac] sm:$0xf] %v1331
                  %v1333 = vld [vmem:[%s859 + $0x730] sm:$0xf]
                  %1334 = vst [vmem:[%s860 + $0x3b0] sm:$0xf] %v1333
                  %v1335 = vld [vmem:[%s859 + $0x734] sm:$0xf]
                  %1336 = vst [vmem:[%s860 + $0x3b4] sm:$0xf] %v1335
                  %v1337 = vld [vmem:[%s859 + $0x738] sm:$0xf]
                  %1338 = vst [vmem:[%s860 + $0x3b8] sm:$0xf] %v1337
                  %v1339 = vld [vmem:[%s859 + $0x73c] sm:$0xf]
                  %1340 = vst [vmem:[%s860 + $0x3bc] sm:$0xf] %v1339
                  %v1341 = vld [vmem:[%s859 + $0x740] sm:$0xf]
                  %1342 = vst [vmem:[%s860 + $0x3c0] sm:$0xf] %v1341
                  %v1343 = vld [vmem:[%s859 + $0x744] sm:$0xf]
                  %1344 = vst [vmem:[%s860 + $0x3c4] sm:$0xf] %v1343
                  %v1345 = vld [vmem:[%s859 + $0x748] sm:$0xf]
                  %1346 = vst [vmem:[%s860 + $0x3c8] sm:$0xf] %v1345
                  %v1347 = vld [vmem:[%s859 + $0x74c] sm:$0xf]
                  %1348 = vst [vmem:[%s860 + $0x3cc] sm:$0xf] %v1347
                  %v1349 = vld [vmem:[%s859 + $0x750] sm:$0xf]
                  %1350 = vst [vmem:[%s860 + $0x3d0] sm:$0xf] %v1349
                  %v1351 = vld [vmem:[%s859 + $0x754] sm:$0xf]
                  %1352 = vst [vmem:[%s860 + $0x3d4] sm:$0xf] %v1351
                  %v1353 = vld [vmem:[%s859 + $0x758] sm:$0xf]
                  %1354 = vst [vmem:[%s860 + $0x3d8] sm:$0xf] %v1353
                  %v1355 = vld [vmem:[%s859 + $0x75c] sm:$0xf]
                  %1356 = vst [vmem:[%s860 + $0x3dc] sm:$0xf] %v1355
                  %v1357 = vld [vmem:[%s859 + $0x760] sm:$0xf]
                  %1358 = vst [vmem:[%s860 + $0x3e0] sm:$0xf] %v1357
                  %v1359 = vld [vmem:[%s859 + $0x764] sm:$0xf]
                  %1360 = vst [vmem:[%s860 + $0x3e4] sm:$0xf] %v1359
                  %v1361 = vld [vmem:[%s859 + $0x768] sm:$0xf]
                  %1362 = vst [vmem:[%s860 + $0x3e8] sm:$0xf] %v1361
                  %v1363 = vld [vmem:[%s859 + $0x76c] sm:$0xf]
                  %1364 = vst [vmem:[%s860 + $0x3ec] sm:$0xf] %v1363
                  %v1365 = vld [vmem:[%s859 + $0x770] sm:$0xf]
                  %1366 = vst [vmem:[%s860 + $0x3f0] sm:$0xf] %v1365
                  %v1367 = vld [vmem:[%s859 + $0x774] sm:$0xf]
                  %1368 = vst [vmem:[%s860 + $0x3f4] sm:$0xf] %v1367
                  %v1369 = vld [vmem:[%s859 + $0x778] sm:$0xf]
                  %1370 = vst [vmem:[%s860 + $0x3f8] sm:$0xf] %v1369
                  %v1371 = vld [vmem:[%s859 + $0x77c] sm:$0xf]
                  %1372 = vst [vmem:[%s860 + $0x3fc] sm:$0xf] %v1371
                $region75: #{tpu_custom_call.1} parent=62 // loop_footer
                  %s858 = sadd.s32 1, %s854
                $region76: #{tpu_custom_call.1} parent=62 // loop_footer_branch
                  %853 = sbr.rel target = $region72
                $region77: #{tpu_custom_call.1} parent=62 // loop_exit
                  _
              $region63: #{tpu_custom_call.1} parent=47 // pred_fallthru
                _
            $region48: #{tpu_custom_call.1} parent=43 // pred_fallthru
              _
            // Predicated region
            $region49: #{tpu_custom_call.1} parent=43 // pred_check
              _
            $region50: #{tpu_custom_call.1} parent=43 // pred_check_branch
              %320 = sbr.rel (0) target = $region52
            $region51: #{tpu_custom_call.1} parent=43 // pred_region
              loop: start=0, step=1, limit=1
              $region53: #{tpu_custom_call.1} parent=51 // loop_pre_header
                _
              $region54: #{tpu_custom_call.1} parent=51 // loop_header
                %s323 = sphi 0, %s327
                %p324 = scmp.ge.s32.totalorder %s323, 1
                %s328 = sphi %s314, %s314
                %s329 = sphi %s308, %s308
              $region55: #{tpu_custom_call.1} parent=51 // loop_header_branch
                %326 = sbr.rel (%p324) target = $region59
              $region56: #{tpu_custom_call.1} parent=51 // loop_body
                %v330 = vld [vmem:[%s328] sm:$0xf]
                %331 = vst [vmem:[%s329] sm:$0xf] %v330
                %v332 = vld [vmem:[%s328 + $0x4] sm:$0xf]
                %333 = vst [vmem:[%s329 + $0x4] sm:$0xf] %v332
                %v334 = vld [vmem:[%s328 + $0x8] sm:$0xf]
                %335 = vst [vmem:[%s329 + $0x8] sm:$0xf] %v334
                %v336 = vld [vmem:[%s328 + $0xc] sm:$0xf]
                %337 = vst [vmem:[%s329 + $0xc] sm:$0xf] %v336
                %v338 = vld [vmem:[%s328 + $0x10] sm:$0xf]
                %339 = vst [vmem:[%s329 + $0x10] sm:$0xf] %v338
                %v340 = vld [vmem:[%s328 + $0x14] sm:$0xf]
                %341 = vst [vmem:[%s329 + $0x14] sm:$0xf] %v340
                %v342 = vld [vmem:[%s328 + $0x18] sm:$0xf]
                %343 = vst [vmem:[%s329 + $0x18] sm:$0xf] %v342
                %v344 = vld [vmem:[%s328 + $0x1c] sm:$0xf]
                %345 = vst [vmem:[%s329 + $0x1c] sm:$0xf] %v344
                %v346 = vld [vmem:[%s328 + $0x20] sm:$0xf]
                %347 = vst [vmem:[%s329 + $0x20] sm:$0xf] %v346
                %v348 = vld [vmem:[%s328 + $0x24] sm:$0xf]
                %349 = vst [vmem:[%s329 + $0x24] sm:$0xf] %v348
                %v350 = vld [vmem:[%s328 + $0x28] sm:$0xf]
                %351 = vst [vmem:[%s329 + $0x28] sm:$0xf] %v350
                %v352 = vld [vmem:[%s328 + $0x2c] sm:$0xf]
                %353 = vst [vmem:[%s329 + $0x2c] sm:$0xf] %v352
                %v354 = vld [vmem:[%s328 + $0x30] sm:$0xf]
                %355 = vst [vmem:[%s329 + $0x30] sm:$0xf] %v354
                %v356 = vld [vmem:[%s328 + $0x34] sm:$0xf]
                %357 = vst [vmem:[%s329 + $0x34] sm:$0xf] %v356
                %v358 = vld [vmem:[%s328 + $0x38] sm:$0xf]
                %359 = vst [vmem:[%s329 + $0x38] sm:$0xf] %v358
                %v360 = vld [vmem:[%s328 + $0x3c] sm:$0xf]
                %361 = vst [vmem:[%s329 + $0x3c] sm:$0xf] %v360
                %v362 = vld [vmem:[%s328 + $0x40] sm:$0xf]
                %363 = vst [vmem:[%s329 + $0x40] sm:$0xf] %v362
                %v364 = vld [vmem:[%s328 + $0x44] sm:$0xf]
                %365 = vst [vmem:[%s329 + $0x44] sm:$0xf] %v364
                %v366 = vld [vmem:[%s328 + $0x48] sm:$0xf]
                %367 = vst [vmem:[%s329 + $0x48] sm:$0xf] %v366
                %v368 = vld [vmem:[%s328 + $0x4c] sm:$0xf]
                %369 = vst [vmem:[%s329 + $0x4c] sm:$0xf] %v368
                %v370 = vld [vmem:[%s328 + $0x50] sm:$0xf]
                %371 = vst [vmem:[%s329 + $0x50] sm:$0xf] %v370
                %v372 = vld [vmem:[%s328 + $0x54] sm:$0xf]
                %373 = vst [vmem:[%s329 + $0x54] sm:$0xf] %v372
                %v374 = vld [vmem:[%s328 + $0x58] sm:$0xf]
                %375 = vst [vmem:[%s329 + $0x58] sm:$0xf] %v374
                %v376 = vld [vmem:[%s328 + $0x5c] sm:$0xf]
                %377 = vst [vmem:[%s329 + $0x5c] sm:$0xf] %v376
                %v378 = vld [vmem:[%s328 + $0x60] sm:$0xf]
                %379 = vst [vmem:[%s329 + $0x60] sm:$0xf] %v378
                %v380 = vld [vmem:[%s328 + $0x64] sm:$0xf]
                %381 = vst [vmem:[%s329 + $0x64] sm:$0xf] %v380
                %v382 = vld [vmem:[%s328 + $0x68] sm:$0xf]
                %383 = vst [vmem:[%s329 + $0x68] sm:$0xf] %v382
                %v384 = vld [vmem:[%s328 + $0x6c] sm:$0xf]
                %385 = vst [vmem:[%s329 + $0x6c] sm:$0xf] %v384
                %v386 = vld [vmem:[%s328 + $0x70] sm:$0xf]
                %387 = vst [vmem:[%s329 + $0x70] sm:$0xf] %v386
                %v388 = vld [vmem:[%s328 + $0x74] sm:$0xf]
                %389 = vst [vmem:[%s329 + $0x74] sm:$0xf] %v388
                %v390 = vld [vmem:[%s328 + $0x78] sm:$0xf]
                %391 = vst [vmem:[%s329 + $0x78] sm:$0xf] %v390
                %v392 = vld [vmem:[%s328 + $0x7c] sm:$0xf]
                %393 = vst [vmem:[%s329 + $0x7c] sm:$0xf] %v392
                %v394 = vld [vmem:[%s328 + $0x100] sm:$0xf]
                %395 = vst [vmem:[%s329 + $0x80] sm:$0xf] %v394
                %v396 = vld [vmem:[%s328 + $0x104] sm:$0xf]
                %397 = vst [vmem:[%s329 + $0x84] sm:$0xf] %v396
                %v398 = vld [vmem:[%s328 + $0x108] sm:$0xf]
                %399 = vst [vmem:[%s329 + $0x88] sm:$0xf] %v398
                %v400 = vld [vmem:[%s328 + $0x10c] sm:$0xf]
                %401 = vst [vmem:[%s329 + $0x8c] sm:$0xf] %v400
                %v402 = vld [vmem:[%s328 + $0x110] sm:$0xf]
                %403 = vst [vmem:[%s329 + $0x90] sm:$0xf] %v402
                %v404 = vld [vmem:[%s328 + $0x114] sm:$0xf]
                %405 = vst [vmem:[%s329 + $0x94] sm:$0xf] %v404
                %v406 = vld [vmem:[%s328 + $0x118] sm:$0xf]
                %407 = vst [vmem:[%s329 + $0x98] sm:$0xf] %v406
                %v408 = vld [vmem:[%s328 + $0x11c] sm:$0xf]
                %409 = vst [vmem:[%s329 + $0x9c] sm:$0xf] %v408
                %v410 = vld [vmem:[%s328 + $0x120] sm:$0xf]
                %411 = vst [vmem:[%s329 + $0xa0] sm:$0xf] %v410
                %v412 = vld [vmem:[%s328 + $0x124] sm:$0xf]
                %413 = vst [vmem:[%s329 + $0xa4] sm:$0xf] %v412
                %v414 = vld [vmem:[%s328 + $0x128] sm:$0xf]
                %415 = vst [vmem:[%s329 + $0xa8] sm:$0xf] %v414
                %v416 = vld [vmem:[%s328 + $0x12c] sm:$0xf]
                %417 = vst [vmem:[%s329 + $0xac] sm:$0xf] %v416
                %v418 = vld [vmem:[%s328 + $0x130] sm:$0xf]
                %419 = vst [vmem:[%s329 + $0xb0] sm:$0xf] %v418
                %v420 = vld [vmem:[%s328 + $0x134] sm:$0xf]
                %421 = vst [vmem:[%s329 + $0xb4] sm:$0xf] %v420
                %v422 = vld [vmem:[%s328 + $0x138] sm:$0xf]
                %423 = vst [vmem:[%s329 + $0xb8] sm:$0xf] %v422
                %v424 = vld [vmem:[%s328 + $0x13c] sm:$0xf]
                %425 = vst [vmem:[%s329 + $0xbc] sm:$0xf] %v424
                %v426 = vld [vmem:[%s328 + $0x140] sm:$0xf]
                %427 = vst [vmem:[%s329 + $0xc0] sm:$0xf] %v426
                %v428 = vld [vmem:[%s328 + $0x144] sm:$0xf]
                %429 = vst [vmem:[%s329 + $0xc4] sm:$0xf] %v428
                %v430 = vld [vmem:[%s328 + $0x148] sm:$0xf]
                %431 = vst [vmem:[%s329 + $0xc8] sm:$0xf] %v430
                %v432 = vld [vmem:[%s328 + $0x14c] sm:$0xf]
                %433 = vst [vmem:[%s329 + $0xcc] sm:$0xf] %v432
                %v434 = vld [vmem:[%s328 + $0x150] sm:$0xf]
                %435 = vst [vmem:[%s329 + $0xd0] sm:$0xf] %v434
                %v436 = vld [vmem:[%s328 + $0x154] sm:$0xf]
                %437 = vst [vmem:[%s329 + $0xd4] sm:$0xf] %v436
                %v438 = vld [vmem:[%s328 + $0x158] sm:$0xf]
                %439 = vst [vmem:[%s329 + $0xd8] sm:$0xf] %v438
                %v440 = vld [vmem:[%s328 + $0x15c] sm:$0xf]
                %441 = vst [vmem:[%s329 + $0xdc] sm:$0xf] %v440
                %v442 = vld [vmem:[%s328 + $0x160] sm:$0xf]
                %443 = vst [vmem:[%s329 + $0xe0] sm:$0xf] %v442
                %v444 = vld [vmem:[%s328 + $0x164] sm:$0xf]
                %445 = vst [vmem:[%s329 + $0xe4] sm:$0xf] %v444
                %v446 = vld [vmem:[%s328 + $0x168] sm:$0xf]
                %447 = vst [vmem:[%s329 + $0xe8] sm:$0xf] %v446
                %v448 = vld [vmem:[%s328 + $0x16c] sm:$0xf]
                %449 = vst [vmem:[%s329 + $0xec] sm:$0xf] %v448
                %v450 = vld [vmem:[%s328 + $0x170] sm:$0xf]
                %451 = vst [vmem:[%s329 + $0xf0] sm:$0xf] %v450
                %v452 = vld [vmem:[%s328 + $0x174] sm:$0xf]
                %453 = vst [vmem:[%s329 + $0xf4] sm:$0xf] %v452
                %v454 = vld [vmem:[%s328 + $0x178] sm:$0xf]
                %455 = vst [vmem:[%s329 + $0xf8] sm:$0xf] %v454
                %v456 = vld [vmem:[%s328 + $0x17c] sm:$0xf]
                %457 = vst [vmem:[%s329 + $0xfc] sm:$0xf] %v456
                %v458 = vld [vmem:[%s328 + $0x200] sm:$0xf]
                %459 = vst [vmem:[%s329 + $0x100] sm:$0xf] %v458
                %v460 = vld [vmem:[%s328 + $0x204] sm:$0xf]
                %461 = vst [vmem:[%s329 + $0x104] sm:$0xf] %v460
                %v462 = vld [vmem:[%s328 + $0x208] sm:$0xf]
                %463 = vst [vmem:[%s329 + $0x108] sm:$0xf] %v462
                %v464 = vld [vmem:[%s328 + $0x20c] sm:$0xf]
                %465 = vst [vmem:[%s329 + $0x10c] sm:$0xf] %v464
                %v466 = vld [vmem:[%s328 + $0x210] sm:$0xf]
                %467 = vst [vmem:[%s329 + $0x110] sm:$0xf] %v466
                %v468 = vld [vmem:[%s328 + $0x214] sm:$0xf]
                %469 = vst [vmem:[%s329 + $0x114] sm:$0xf] %v468
                %v470 = vld [vmem:[%s328 + $0x218] sm:$0xf]
                %471 = vst [vmem:[%s329 + $0x118] sm:$0xf] %v470
                %v472 = vld [vmem:[%s328 + $0x21c] sm:$0xf]
                %473 = vst [vmem:[%s329 + $0x11c] sm:$0xf] %v472
                %v474 = vld [vmem:[%s328 + $0x220] sm:$0xf]
                %475 = vst [vmem:[%s329 + $0x120] sm:$0xf] %v474
                %v476 = vld [vmem:[%s328 + $0x224] sm:$0xf]
                %477 = vst [vmem:[%s329 + $0x124] sm:$0xf] %v476
                %v478 = vld [vmem:[%s328 + $0x228] sm:$0xf]
                %479 = vst [vmem:[%s329 + $0x128] sm:$0xf] %v478
                %v480 = vld [vmem:[%s328 + $0x22c] sm:$0xf]
                %481 = vst [vmem:[%s329 + $0x12c] sm:$0xf] %v480
                %v482 = vld [vmem:[%s328 + $0x230] sm:$0xf]
                %483 = vst [vmem:[%s329 + $0x130] sm:$0xf] %v482
                %v484 = vld [vmem:[%s328 + $0x234] sm:$0xf]
                %485 = vst [vmem:[%s329 + $0x134] sm:$0xf] %v484
                %v486 = vld [vmem:[%s328 + $0x238] sm:$0xf]
                %487 = vst [vmem:[%s329 + $0x138] sm:$0xf] %v486
                %v488 = vld [vmem:[%s328 + $0x23c] sm:$0xf]
                %489 = vst [vmem:[%s329 + $0x13c] sm:$0xf] %v488
                %v490 = vld [vmem:[%s328 + $0x240] sm:$0xf]
                %491 = vst [vmem:[%s329 + $0x140] sm:$0xf] %v490
                %v492 = vld [vmem:[%s328 + $0x244] sm:$0xf]
                %493 = vst [vmem:[%s329 + $0x144] sm:$0xf] %v492
                %v494 = vld [vmem:[%s328 + $0x248] sm:$0xf]
                %495 = vst [vmem:[%s329 + $0x148] sm:$0xf] %v494
                %v496 = vld [vmem:[%s328 + $0x24c] sm:$0xf]
                %497 = vst [vmem:[%s329 + $0x14c] sm:$0xf] %v496
                %v498 = vld [vmem:[%s328 + $0x250] sm:$0xf]
                %499 = vst [vmem:[%s329 + $0x150] sm:$0xf] %v498
                %v500 = vld [vmem:[%s328 + $0x254] sm:$0xf]
                %501 = vst [vmem:[%s329 + $0x154] sm:$0xf] %v500
                %v502 = vld [vmem:[%s328 + $0x258] sm:$0xf]
                %503 = vst [vmem:[%s329 + $0x158] sm:$0xf] %v502
                %v504 = vld [vmem:[%s328 + $0x25c] sm:$0xf]
                %505 = vst [vmem:[%s329 + $0x15c] sm:$0xf] %v504
                %v506 = vld [vmem:[%s328 + $0x260] sm:$0xf]
                %507 = vst [vmem:[%s329 + $0x160] sm:$0xf] %v506
                %v508 = vld [vmem:[%s328 + $0x264] sm:$0xf]
                %509 = vst [vmem:[%s329 + $0x164] sm:$0xf] %v508
                %v510 = vld [vmem:[%s328 + $0x268] sm:$0xf]
                %511 = vst [vmem:[%s329 + $0x168] sm:$0xf] %v510
                %v512 = vld [vmem:[%s328 + $0x26c] sm:$0xf]
                %513 = vst [vmem:[%s329 + $0x16c] sm:$0xf] %v512
                %v514 = vld [vmem:[%s328 + $0x270] sm:$0xf]
                %515 = vst [vmem:[%s329 + $0x170] sm:$0xf] %v514
                %v516 = vld [vmem:[%s328 + $0x274] sm:$0xf]
                %517 = vst [vmem:[%s329 + $0x174] sm:$0xf] %v516
                %v518 = vld [vmem:[%s328 + $0x278] sm:$0xf]
                %519 = vst [vmem:[%s329 + $0x178] sm:$0xf] %v518
                %v520 = vld [vmem:[%s328 + $0x27c] sm:$0xf]
                %521 = vst [vmem:[%s329 + $0x17c] sm:$0xf] %v520
                %v522 = vld [vmem:[%s328 + $0x300] sm:$0xf]
                %523 = vst [vmem:[%s329 + $0x180] sm:$0xf] %v522
                %v524 = vld [vmem:[%s328 + $0x304] sm:$0xf]
                %525 = vst [vmem:[%s329 + $0x184] sm:$0xf] %v524
                %v526 = vld [vmem:[%s328 + $0x308] sm:$0xf]
                %527 = vst [vmem:[%s329 + $0x188] sm:$0xf] %v526
                %v528 = vld [vmem:[%s328 + $0x30c] sm:$0xf]
                %529 = vst [vmem:[%s329 + $0x18c] sm:$0xf] %v528
                %v530 = vld [vmem:[%s328 + $0x310] sm:$0xf]
                %531 = vst [vmem:[%s329 + $0x190] sm:$0xf] %v530
                %v532 = vld [vmem:[%s328 + $0x314] sm:$0xf]
                %533 = vst [vmem:[%s329 + $0x194] sm:$0xf] %v532
                %v534 = vld [vmem:[%s328 + $0x318] sm:$0xf]
                %535 = vst [vmem:[%s329 + $0x198] sm:$0xf] %v534
                %v536 = vld [vmem:[%s328 + $0x31c] sm:$0xf]
                %537 = vst [vmem:[%s329 + $0x19c] sm:$0xf] %v536
                %v538 = vld [vmem:[%s328 + $0x320] sm:$0xf]
                %539 = vst [vmem:[%s329 + $0x1a0] sm:$0xf] %v538
                %v540 = vld [vmem:[%s328 + $0x324] sm:$0xf]
                %541 = vst [vmem:[%s329 + $0x1a4] sm:$0xf] %v540
                %v542 = vld [vmem:[%s328 + $0x328] sm:$0xf]
                %543 = vst [vmem:[%s329 + $0x1a8] sm:$0xf] %v542
                %v544 = vld [vmem:[%s328 + $0x32c] sm:$0xf]
                %545 = vst [vmem:[%s329 + $0x1ac] sm:$0xf] %v544
                %v546 = vld [vmem:[%s328 + $0x330] sm:$0xf]
                %547 = vst [vmem:[%s329 + $0x1b0] sm:$0xf] %v546
                %v548 = vld [vmem:[%s328 + $0x334] sm:$0xf]
                %549 = vst [vmem:[%s329 + $0x1b4] sm:$0xf] %v548
                %v550 = vld [vmem:[%s328 + $0x338] sm:$0xf]
                %551 = vst [vmem:[%s329 + $0x1b8] sm:$0xf] %v550
                %v552 = vld [vmem:[%s328 + $0x33c] sm:$0xf]
                %553 = vst [vmem:[%s329 + $0x1bc] sm:$0xf] %v552
                %v554 = vld [vmem:[%s328 + $0x340] sm:$0xf]
                %555 = vst [vmem:[%s329 + $0x1c0] sm:$0xf] %v554
                %v556 = vld [vmem:[%s328 + $0x344] sm:$0xf]
                %557 = vst [vmem:[%s329 + $0x1c4] sm:$0xf] %v556
                %v558 = vld [vmem:[%s328 + $0x348] sm:$0xf]
                %559 = vst [vmem:[%s329 + $0x1c8] sm:$0xf] %v558
                %v560 = vld [vmem:[%s328 + $0x34c] sm:$0xf]
                %561 = vst [vmem:[%s329 + $0x1cc] sm:$0xf] %v560
                %v562 = vld [vmem:[%s328 + $0x350] sm:$0xf]
                %563 = vst [vmem:[%s329 + $0x1d0] sm:$0xf] %v562
                %v564 = vld [vmem:[%s328 + $0x354] sm:$0xf]
                %565 = vst [vmem:[%s329 + $0x1d4] sm:$0xf] %v564
                %v566 = vld [vmem:[%s328 + $0x358] sm:$0xf]
                %567 = vst [vmem:[%s329 + $0x1d8] sm:$0xf] %v566
                %v568 = vld [vmem:[%s328 + $0x35c] sm:$0xf]
                %569 = vst [vmem:[%s329 + $0x1dc] sm:$0xf] %v568
                %v570 = vld [vmem:[%s328 + $0x360] sm:$0xf]
                %571 = vst [vmem:[%s329 + $0x1e0] sm:$0xf] %v570
                %v572 = vld [vmem:[%s328 + $0x364] sm:$0xf]
                %573 = vst [vmem:[%s329 + $0x1e4] sm:$0xf] %v572
                %v574 = vld [vmem:[%s328 + $0x368] sm:$0xf]
                %575 = vst [vmem:[%s329 + $0x1e8] sm:$0xf] %v574
                %v576 = vld [vmem:[%s328 + $0x36c] sm:$0xf]
                %577 = vst [vmem:[%s329 + $0x1ec] sm:$0xf] %v576
                %v578 = vld [vmem:[%s328 + $0x370] sm:$0xf]
                %579 = vst [vmem:[%s329 + $0x1f0] sm:$0xf] %v578
                %v580 = vld [vmem:[%s328 + $0x374] sm:$0xf]
                %581 = vst [vmem:[%s329 + $0x1f4] sm:$0xf] %v580
                %v582 = vld [vmem:[%s328 + $0x378] sm:$0xf]
                %583 = vst [vmem:[%s329 + $0x1f8] sm:$0xf] %v582
                %v584 = vld [vmem:[%s328 + $0x37c] sm:$0xf]
                %585 = vst [vmem:[%s329 + $0x1fc] sm:$0xf] %v584
                %v586 = vld [vmem:[%s328 + $0x400] sm:$0xf]
                %587 = vst [vmem:[%s329 + $0x200] sm:$0xf] %v586
                %v588 = vld [vmem:[%s328 + $0x404] sm:$0xf]
                %589 = vst [vmem:[%s329 + $0x204] sm:$0xf] %v588
                %v590 = vld [vmem:[%s328 + $0x408] sm:$0xf]
                %591 = vst [vmem:[%s329 + $0x208] sm:$0xf] %v590
                %v592 = vld [vmem:[%s328 + $0x40c] sm:$0xf]
                %593 = vst [vmem:[%s329 + $0x20c] sm:$0xf] %v592
                %v594 = vld [vmem:[%s328 + $0x410] sm:$0xf]
                %595 = vst [vmem:[%s329 + $0x210] sm:$0xf] %v594
                %v596 = vld [vmem:[%s328 + $0x414] sm:$0xf]
                %597 = vst [vmem:[%s329 + $0x214] sm:$0xf] %v596
                %v598 = vld [vmem:[%s328 + $0x418] sm:$0xf]
                %599 = vst [vmem:[%s329 + $0x218] sm:$0xf] %v598
                %v600 = vld [vmem:[%s328 + $0x41c] sm:$0xf]
                %601 = vst [vmem:[%s329 + $0x21c] sm:$0xf] %v600
                %v602 = vld [vmem:[%s328 + $0x420] sm:$0xf]
                %603 = vst [vmem:[%s329 + $0x220] sm:$0xf] %v602
                %v604 = vld [vmem:[%s328 + $0x424] sm:$0xf]
                %605 = vst [vmem:[%s329 + $0x224] sm:$0xf] %v604
                %v606 = vld [vmem:[%s328 + $0x428] sm:$0xf]
                %607 = vst [vmem:[%s329 + $0x228] sm:$0xf] %v606
                %v608 = vld [vmem:[%s328 + $0x42c] sm:$0xf]
                %609 = vst [vmem:[%s329 + $0x22c] sm:$0xf] %v608
                %v610 = vld [vmem:[%s328 + $0x430] sm:$0xf]
                %611 = vst [vmem:[%s329 + $0x230] sm:$0xf] %v610
                %v612 = vld [vmem:[%s328 + $0x434] sm:$0xf]
                %613 = vst [vmem:[%s329 + $0x234] sm:$0xf] %v612
                %v614 = vld [vmem:[%s328 + $0x438] sm:$0xf]
                %615 = vst [vmem:[%s329 + $0x238] sm:$0xf] %v614
                %v616 = vld [vmem:[%s328 + $0x43c] sm:$0xf]
                %617 = vst [vmem:[%s329 + $0x23c] sm:$0xf] %v616
                %v618 = vld [vmem:[%s328 + $0x440] sm:$0xf]
                %619 = vst [vmem:[%s329 + $0x240] sm:$0xf] %v618
                %v620 = vld [vmem:[%s328 + $0x444] sm:$0xf]
                %621 = vst [vmem:[%s329 + $0x244] sm:$0xf] %v620
                %v622 = vld [vmem:[%s328 + $0x448] sm:$0xf]
                %623 = vst [vmem:[%s329 + $0x248] sm:$0xf] %v622
                %v624 = vld [vmem:[%s328 + $0x44c] sm:$0xf]
                %625 = vst [vmem:[%s329 + $0x24c] sm:$0xf] %v624
                %v626 = vld [vmem:[%s328 + $0x450] sm:$0xf]
                %627 = vst [vmem:[%s329 + $0x250] sm:$0xf] %v626
                %v628 = vld [vmem:[%s328 + $0x454] sm:$0xf]
                %629 = vst [vmem:[%s329 + $0x254] sm:$0xf] %v628
                %v630 = vld [vmem:[%s328 + $0x458] sm:$0xf]
                %631 = vst [vmem:[%s329 + $0x258] sm:$0xf] %v630
                %v632 = vld [vmem:[%s328 + $0x45c] sm:$0xf]
                %633 = vst [vmem:[%s329 + $0x25c] sm:$0xf] %v632
                %v634 = vld [vmem:[%s328 + $0x460] sm:$0xf]
                %635 = vst [vmem:[%s329 + $0x260] sm:$0xf] %v634
                %v636 = vld [vmem:[%s328 + $0x464] sm:$0xf]
                %637 = vst [vmem:[%s329 + $0x264] sm:$0xf] %v636
                %v638 = vld [vmem:[%s328 + $0x468] sm:$0xf]
                %639 = vst [vmem:[%s329 + $0x268] sm:$0xf] %v638
                %v640 = vld [vmem:[%s328 + $0x46c] sm:$0xf]
                %641 = vst [vmem:[%s329 + $0x26c] sm:$0xf] %v640
                %v642 = vld [vmem:[%s328 + $0x470] sm:$0xf]
                %643 = vst [vmem:[%s329 + $0x270] sm:$0xf] %v642
                %v644 = vld [vmem:[%s328 + $0x474] sm:$0xf]
                %645 = vst [vmem:[%s329 + $0x274] sm:$0xf] %v644
                %v646 = vld [vmem:[%s328 + $0x478] sm:$0xf]
                %647 = vst [vmem:[%s329 + $0x278] sm:$0xf] %v646
                %v648 = vld [vmem:[%s328 + $0x47c] sm:$0xf]
                %649 = vst [vmem:[%s329 + $0x27c] sm:$0xf] %v648
                %v650 = vld [vmem:[%s328 + $0x500] sm:$0xf]
                %651 = vst [vmem:[%s329 + $0x280] sm:$0xf] %v650
                %v652 = vld [vmem:[%s328 + $0x504] sm:$0xf]
                %653 = vst [vmem:[%s329 + $0x284] sm:$0xf] %v652
                %v654 = vld [vmem:[%s328 + $0x508] sm:$0xf]
                %655 = vst [vmem:[%s329 + $0x288] sm:$0xf] %v654
                %v656 = vld [vmem:[%s328 + $0x50c] sm:$0xf]
                %657 = vst [vmem:[%s329 + $0x28c] sm:$0xf] %v656
                %v658 = vld [vmem:[%s328 + $0x510] sm:$0xf]
                %659 = vst [vmem:[%s329 + $0x290] sm:$0xf] %v658
                %v660 = vld [vmem:[%s328 + $0x514] sm:$0xf]
                %661 = vst [vmem:[%s329 + $0x294] sm:$0xf] %v660
                %v662 = vld [vmem:[%s328 + $0x518] sm:$0xf]
                %663 = vst [vmem:[%s329 + $0x298] sm:$0xf] %v662
                %v664 = vld [vmem:[%s328 + $0x51c] sm:$0xf]
                %665 = vst [vmem:[%s329 + $0x29c] sm:$0xf] %v664
                %v666 = vld [vmem:[%s328 + $0x520] sm:$0xf]
                %667 = vst [vmem:[%s329 + $0x2a0] sm:$0xf] %v666
                %v668 = vld [vmem:[%s328 + $0x524] sm:$0xf]
                %669 = vst [vmem:[%s329 + $0x2a4] sm:$0xf] %v668
                %v670 = vld [vmem:[%s328 + $0x528] sm:$0xf]
                %671 = vst [vmem:[%s329 + $0x2a8] sm:$0xf] %v670
                %v672 = vld [vmem:[%s328 + $0x52c] sm:$0xf]
                %673 = vst [vmem:[%s329 + $0x2ac] sm:$0xf] %v672
                %v674 = vld [vmem:[%s328 + $0x530] sm:$0xf]
                %675 = vst [vmem:[%s329 + $0x2b0] sm:$0xf] %v674
                %v676 = vld [vmem:[%s328 + $0x534] sm:$0xf]
                %677 = vst [vmem:[%s329 + $0x2b4] sm:$0xf] %v676
                %v678 = vld [vmem:[%s328 + $0x538] sm:$0xf]
                %679 = vst [vmem:[%s329 + $0x2b8] sm:$0xf] %v678
                %v680 = vld [vmem:[%s328 + $0x53c] sm:$0xf]
                %681 = vst [vmem:[%s329 + $0x2bc] sm:$0xf] %v680
                %v682 = vld [vmem:[%s328 + $0x540] sm:$0xf]
                %683 = vst [vmem:[%s329 + $0x2c0] sm:$0xf] %v682
                %v684 = vld [vmem:[%s328 + $0x544] sm:$0xf]
                %685 = vst [vmem:[%s329 + $0x2c4] sm:$0xf] %v684
                %v686 = vld [vmem:[%s328 + $0x548] sm:$0xf]
                %687 = vst [vmem:[%s329 + $0x2c8] sm:$0xf] %v686
                %v688 = vld [vmem:[%s328 + $0x54c] sm:$0xf]
                %689 = vst [vmem:[%s329 + $0x2cc] sm:$0xf] %v688
                %v690 = vld [vmem:[%s328 + $0x550] sm:$0xf]
                %691 = vst [vmem:[%s329 + $0x2d0] sm:$0xf] %v690
                %v692 = vld [vmem:[%s328 + $0x554] sm:$0xf]
                %693 = vst [vmem:[%s329 + $0x2d4] sm:$0xf] %v692
                %v694 = vld [vmem:[%s328 + $0x558] sm:$0xf]
                %695 = vst [vmem:[%s329 + $0x2d8] sm:$0xf] %v694
                %v696 = vld [vmem:[%s328 + $0x55c] sm:$0xf]
                %697 = vst [vmem:[%s329 + $0x2dc] sm:$0xf] %v696
                %v698 = vld [vmem:[%s328 + $0x560] sm:$0xf]
                %699 = vst [vmem:[%s329 + $0x2e0] sm:$0xf] %v698
                %v700 = vld [vmem:[%s328 + $0x564] sm:$0xf]
                %701 = vst [vmem:[%s329 + $0x2e4] sm:$0xf] %v700
                %v702 = vld [vmem:[%s328 + $0x568] sm:$0xf]
                %703 = vst [vmem:[%s329 + $0x2e8] sm:$0xf] %v702
                %v704 = vld [vmem:[%s328 + $0x56c] sm:$0xf]
                %705 = vst [vmem:[%s329 + $0x2ec] sm:$0xf] %v704
                %v706 = vld [vmem:[%s328 + $0x570] sm:$0xf]
                %707 = vst [vmem:[%s329 + $0x2f0] sm:$0xf] %v706
                %v708 = vld [vmem:[%s328 + $0x574] sm:$0xf]
                %709 = vst [vmem:[%s329 + $0x2f4] sm:$0xf] %v708
                %v710 = vld [vmem:[%s328 + $0x578] sm:$0xf]
                %711 = vst [vmem:[%s329 + $0x2f8] sm:$0xf] %v710
                %v712 = vld [vmem:[%s328 + $0x57c] sm:$0xf]
                %713 = vst [vmem:[%s329 + $0x2fc] sm:$0xf] %v712
                %v714 = vld [vmem:[%s328 + $0x600] sm:$0xf]
                %715 = vst [vmem:[%s329 + $0x300] sm:$0xf] %v714
                %v716 = vld [vmem:[%s328 + $0x604] sm:$0xf]
                %717 = vst [vmem:[%s329 + $0x304] sm:$0xf] %v716
                %v718 = vld [vmem:[%s328 + $0x608] sm:$0xf]
                %719 = vst [vmem:[%s329 + $0x308] sm:$0xf] %v718
                %v720 = vld [vmem:[%s328 + $0x60c] sm:$0xf]
                %721 = vst [vmem:[%s329 + $0x30c] sm:$0xf] %v720
                %v722 = vld [vmem:[%s328 + $0x610] sm:$0xf]
                %723 = vst [vmem:[%s329 + $0x310] sm:$0xf] %v722
                %v724 = vld [vmem:[%s328 + $0x614] sm:$0xf]
                %725 = vst [vmem:[%s329 + $0x314] sm:$0xf] %v724
                %v726 = vld [vmem:[%s328 + $0x618] sm:$0xf]
                %727 = vst [vmem:[%s329 + $0x318] sm:$0xf] %v726
                %v728 = vld [vmem:[%s328 + $0x61c] sm:$0xf]
                %729 = vst [vmem:[%s329 + $0x31c] sm:$0xf] %v728
                %v730 = vld [vmem:[%s328 + $0x620] sm:$0xf]
                %731 = vst [vmem:[%s329 + $0x320] sm:$0xf] %v730
                %v732 = vld [vmem:[%s328 + $0x624] sm:$0xf]
                %733 = vst [vmem:[%s329 + $0x324] sm:$0xf] %v732
                %v734 = vld [vmem:[%s328 + $0x628] sm:$0xf]
                %735 = vst [vmem:[%s329 + $0x328] sm:$0xf] %v734
                %v736 = vld [vmem:[%s328 + $0x62c] sm:$0xf]
                %737 = vst [vmem:[%s329 + $0x32c] sm:$0xf] %v736
                %v738 = vld [vmem:[%s328 + $0x630] sm:$0xf]
                %739 = vst [vmem:[%s329 + $0x330] sm:$0xf] %v738
                %v740 = vld [vmem:[%s328 + $0x634] sm:$0xf]
                %741 = vst [vmem:[%s329 + $0x334] sm:$0xf] %v740
                %v742 = vld [vmem:[%s328 + $0x638] sm:$0xf]
                %743 = vst [vmem:[%s329 + $0x338] sm:$0xf] %v742
                %v744 = vld [vmem:[%s328 + $0x63c] sm:$0xf]
                %745 = vst [vmem:[%s329 + $0x33c] sm:$0xf] %v744
                %v746 = vld [vmem:[%s328 + $0x640] sm:$0xf]
                %747 = vst [vmem:[%s329 + $0x340] sm:$0xf] %v746
                %v748 = vld [vmem:[%s328 + $0x644] sm:$0xf]
                %749 = vst [vmem:[%s329 + $0x344] sm:$0xf] %v748
                %v750 = vld [vmem:[%s328 + $0x648] sm:$0xf]
                %751 = vst [vmem:[%s329 + $0x348] sm:$0xf] %v750
                %v752 = vld [vmem:[%s328 + $0x64c] sm:$0xf]
                %753 = vst [vmem:[%s329 + $0x34c] sm:$0xf] %v752
                %v754 = vld [vmem:[%s328 + $0x650] sm:$0xf]
                %755 = vst [vmem:[%s329 + $0x350] sm:$0xf] %v754
                %v756 = vld [vmem:[%s328 + $0x654] sm:$0xf]
                %757 = vst [vmem:[%s329 + $0x354] sm:$0xf] %v756
                %v758 = vld [vmem:[%s328 + $0x658] sm:$0xf]
                %759 = vst [vmem:[%s329 + $0x358] sm:$0xf] %v758
                %v760 = vld [vmem:[%s328 + $0x65c] sm:$0xf]
                %761 = vst [vmem:[%s329 + $0x35c] sm:$0xf] %v760
                %v762 = vld [vmem:[%s328 + $0x660] sm:$0xf]
                %763 = vst [vmem:[%s329 + $0x360] sm:$0xf] %v762
                %v764 = vld [vmem:[%s328 + $0x664] sm:$0xf]
                %765 = vst [vmem:[%s329 + $0x364] sm:$0xf] %v764
                %v766 = vld [vmem:[%s328 + $0x668] sm:$0xf]
                %767 = vst [vmem:[%s329 + $0x368] sm:$0xf] %v766
                %v768 = vld [vmem:[%s328 + $0x66c] sm:$0xf]
                %769 = vst [vmem:[%s329 + $0x36c] sm:$0xf] %v768
                %v770 = vld [vmem:[%s328 + $0x670] sm:$0xf]
                %771 = vst [vmem:[%s329 + $0x370] sm:$0xf] %v770
                %v772 = vld [vmem:[%s328 + $0x674] sm:$0xf]
                %773 = vst [vmem:[%s329 + $0x374] sm:$0xf] %v772
                %v774 = vld [vmem:[%s328 + $0x678] sm:$0xf]
                %775 = vst [vmem:[%s329 + $0x378] sm:$0xf] %v774
                %v776 = vld [vmem:[%s328 + $0x67c] sm:$0xf]
                %777 = vst [vmem:[%s329 + $0x37c] sm:$0xf] %v776
                %v778 = vld [vmem:[%s328 + $0x700] sm:$0xf]
                %779 = vst [vmem:[%s329 + $0x380] sm:$0xf] %v778
                %v780 = vld [vmem:[%s328 + $0x704] sm:$0xf]
                %781 = vst [vmem:[%s329 + $0x384] sm:$0xf] %v780
                %v782 = vld [vmem:[%s328 + $0x708] sm:$0xf]
                %783 = vst [vmem:[%s329 + $0x388] sm:$0xf] %v782
                %v784 = vld [vmem:[%s328 + $0x70c] sm:$0xf]
                %785 = vst [vmem:[%s329 + $0x38c] sm:$0xf] %v784
                %v786 = vld [vmem:[%s328 + $0x710] sm:$0xf]
                %787 = vst [vmem:[%s329 + $0x390] sm:$0xf] %v786
                %v788 = vld [vmem:[%s328 + $0x714] sm:$0xf]
                %789 = vst [vmem:[%s329 + $0x394] sm:$0xf] %v788
                %v790 = vld [vmem:[%s328 + $0x718] sm:$0xf]
                %791 = vst [vmem:[%s329 + $0x398] sm:$0xf] %v790
                %v792 = vld [vmem:[%s328 + $0x71c] sm:$0xf]
                %793 = vst [vmem:[%s329 + $0x39c] sm:$0xf] %v792
                %v794 = vld [vmem:[%s328 + $0x720] sm:$0xf]
                %795 = vst [vmem:[%s329 + $0x3a0] sm:$0xf] %v794
                %v796 = vld [vmem:[%s328 + $0x724] sm:$0xf]
                %797 = vst [vmem:[%s329 + $0x3a4] sm:$0xf] %v796
                %v798 = vld [vmem:[%s328 + $0x728] sm:$0xf]
                %799 = vst [vmem:[%s329 + $0x3a8] sm:$0xf] %v798
                %v800 = vld [vmem:[%s328 + $0x72c] sm:$0xf]
                %801 = vst [vmem:[%s329 + $0x3ac] sm:$0xf] %v800
                %v802 = vld [vmem:[%s328 + $0x730] sm:$0xf]
                %803 = vst [vmem:[%s329 + $0x3b0] sm:$0xf] %v802
                %v804 = vld [vmem:[%s328 + $0x734] sm:$0xf]
                %805 = vst [vmem:[%s329 + $0x3b4] sm:$0xf] %v804
                %v806 = vld [vmem:[%s328 + $0x738] sm:$0xf]
                %807 = vst [vmem:[%s329 + $0x3b8] sm:$0xf] %v806
                %v808 = vld [vmem:[%s328 + $0x73c] sm:$0xf]
                %809 = vst [vmem:[%s329 + $0x3bc] sm:$0xf] %v808
                %v810 = vld [vmem:[%s328 + $0x740] sm:$0xf]
                %811 = vst [vmem:[%s329 + $0x3c0] sm:$0xf] %v810
                %v812 = vld [vmem:[%s328 + $0x744] sm:$0xf]
                %813 = vst [vmem:[%s329 + $0x3c4] sm:$0xf] %v812
                %v814 = vld [vmem:[%s328 + $0x748] sm:$0xf]
                %815 = vst [vmem:[%s329 + $0x3c8] sm:$0xf] %v814
                %v816 = vld [vmem:[%s328 + $0x74c] sm:$0xf]
                %817 = vst [vmem:[%s329 + $0x3cc] sm:$0xf] %v816
                %v818 = vld [vmem:[%s328 + $0x750] sm:$0xf]
                %819 = vst [vmem:[%s329 + $0x3d0] sm:$0xf] %v818
                %v820 = vld [vmem:[%s328 + $0x754] sm:$0xf]
                %821 = vst [vmem:[%s329 + $0x3d4] sm:$0xf] %v820
                %v822 = vld [vmem:[%s328 + $0x758] sm:$0xf]
                %823 = vst [vmem:[%s329 + $0x3d8] sm:$0xf] %v822
                %v824 = vld [vmem:[%s328 + $0x75c] sm:$0xf]
                %825 = vst [vmem:[%s329 + $0x3dc] sm:$0xf] %v824
                %v826 = vld [vmem:[%s328 + $0x760] sm:$0xf]
                %827 = vst [vmem:[%s329 + $0x3e0] sm:$0xf] %v826
                %v828 = vld [vmem:[%s328 + $0x764] sm:$0xf]
                %829 = vst [vmem:[%s329 + $0x3e4] sm:$0xf] %v828
                %v830 = vld [vmem:[%s328 + $0x768] sm:$0xf]
                %831 = vst [vmem:[%s329 + $0x3e8] sm:$0xf] %v830
                %v832 = vld [vmem:[%s328 + $0x76c] sm:$0xf]
                %833 = vst [vmem:[%s329 + $0x3ec] sm:$0xf] %v832
                %v834 = vld [vmem:[%s328 + $0x770] sm:$0xf]
                %835 = vst [vmem:[%s329 + $0x3f0] sm:$0xf] %v834
                %v836 = vld [vmem:[%s328 + $0x774] sm:$0xf]
                %837 = vst [vmem:[%s329 + $0x3f4] sm:$0xf] %v836
                %v838 = vld [vmem:[%s328 + $0x778] sm:$0xf]
                %839 = vst [vmem:[%s329 + $0x3f8] sm:$0xf] %v838
                %v840 = vld [vmem:[%s328 + $0x77c] sm:$0xf]
                %841 = vst [vmem:[%s329 + $0x3fc] sm:$0xf] %v840
              $region57: #{tpu_custom_call.1} parent=51 // loop_footer
                %s327 = sadd.s32 1, %s323
              $region58: #{tpu_custom_call.1} parent=51 // loop_footer_branch
                %322 = sbr.rel target = $region54
              $region59: #{tpu_custom_call.1} parent=51 // loop_exit
                _
            $region52: #{tpu_custom_call.1} parent=43 // pred_fallthru
              _
          $region44: #{tpu_custom_call.1} parent=39 // pred_fallthru
            _
          %1373 = vnop
        $region40: #{tpu_custom_call.1} parent=31 // pred_fallthru
          _
        // Predicated region
        $region78: #{tpu_custom_call.1} parent=31 // pred_check
          %p1374 = pneg %p192
        $region79: #{tpu_custom_call.1} parent=31 // pred_check_branch
          %1376 = sbr.rel (%p1374) target = $region81
        $region80: #{tpu_custom_call.1} parent=31 // pred_region
          %p1377 = scmp.lt.s32.totalorder %s27, 1
          %s1378 = scalar_select %p1377, %s27, 1
          %s1379 = smul.addr %s1378, 8
          %s1380 = scalar_lea.vmem %s6, %s1379
        $region81: #{tpu_custom_call.1} parent=31 // pred_fallthru
          _
      $region32: #{tpu_custom_call.1} parent=5 // pred_fallthru
        _
      %p1381 = scmp.le.s32.totalorder 1, %s20
      %p1382 = scmp.lt.s32.totalorder %s20, 5
      %p1383 = pnand %p1381, %p1382
      %p1384 = pneg %p1383
      // Predicated region
      $region82: #{tpu_custom_call.1} parent=5 // pred_check
        _
      $region83: #{tpu_custom_call.1} parent=5 // pred_check_branch
        %1386 = sbr.rel (%p1383) target = $region85
      $region84: #{tpu_custom_call.1} parent=5 // pred_region
        %s1387 = ssub.s32 %s20, 1
        // Predicated region
        $region86: #{tpu_custom_call.1} parent=84 // pred_check
          %p1388 = pneg %p53
        $region87: #{tpu_custom_call.1} parent=84 // pred_check_branch
          %1390 = sbr.rel (%p1388) target = $region89
        $region88: #{tpu_custom_call.1} parent=84 // pred_region
          %1391 = dma.done [#allocation7], 16
        $region89: #{tpu_custom_call.1} parent=84 // pred_fallthru
          _
        %s1392 = sand.u32 %s117, 1
        %s1393 = sand.u32 %s117, 1
        %s1394 = smul.addr %s1393, 1024
        %s1395 = scalar_lea.vmem [#allocation8], %s1394
        // Predicated region
        $region90: #{tpu_custom_call.1} parent=84 // pred_check
          %p1396 = pneg %p130
        $region91: #{tpu_custom_call.1} parent=84 // pred_check_branch
          %1398 = sbr.rel (%p1396) target = $region93
        $region92: #{tpu_custom_call.1} parent=84 // pred_region
          _
        $region93: #{tpu_custom_call.1} parent=84 // pred_fallthru
          _
        %1399 = sfence
        %p1400 = pneg %p53
        %p1401 = pneg %p50
        %p1402 = pneg %p74
        %p1403 = pneg %p71
        %s1404 = smul.u32 2, %s30
        %p1405 = scmp.lt.s32.totalorder %s29, 1
        %s1406 = scalar_select %p1405, %s29, 1
        %p1407 = scmp.lt.s32.totalorder %s1404, 3
        %s1408 = scalar_select %p1407, %s1404, 3
        %s1409 = smul.addr %s1406, 4
        %s1410 = sadd.s32 %s1408, %s1409
        %s1411 = smul.addr %s1410, 8
        %s1412 = scalar_lea.vmem %s2, %s1411
        %p1413 = pneg %p102
        %p1414 = pneg %p99
        %s1415 = sand.u32 %s117, 1
        %s1416 = sand.u32 %s117, 1
        %s1417 = smul.addr %s1416, 1024
        %s1418 = scalar_lea.vmem [#allocation8], %s1417
        %p1419 = pneg %p130
        %p1420 = pneg %p127
        %p1421 = pneg %p151
        %p1422 = pneg %p148
        %p1423 = pneg %p172
        %p1424 = pneg %p169
        %p1425 = scmp.lt.s32.totalorder %s29, 1
        %s1426 = scalar_select %p1425, %s29, 1
        %s1427 = smul.addr %s1426, 8
        %s1428 = scalar_lea.vmem %s6, %s1427
        %p1429 = pneg %p198
        %p1430 = pneg %p195
        %p1431 = pneg %p224
        %p1432 = pneg %p221
        %s1433 = sand.u32 %s211, 1
        %s1434 = scalar_lea.sflag [#allocation6], %s1433
        %s1435 = sand.u32 %s211, 1
        %s1436 = smul.addr %s1435, 8
        %s1437 = scalar_lea.vmem [#allocation9], %s1436
        %p1438 = pneg %p250
        %p1439 = pneg %p247
        %p1440 = scmp.lt.s32.totalorder %s29, 1
        %s1441 = scalar_select %p1440, %s29, 1
        %s1442 = smul.addr %s1441, 8
        %s1443 = scalar_lea.vmem %s8, %s1442
        %s1444 = smul.u32 2, %s30
        %p1445 = scmp.lt.s32.totalorder %s29, 1
        %s1446 = scalar_select %p1445, %s29, 1
        %p1447 = scmp.lt.s32.totalorder %s1444, 3
        %s1448 = scalar_select %p1447, %s1444, 3
        %s1449 = smul.addr %s1446, 4
        %s1450 = sadd.s32 %s1448, %s1449
        %s1451 = smul.addr %s1450, 8
        %s1452 = scalar_lea.vmem %s2, %s1451
        %s1453 = smul.u32 2, %s30
        %s1454 = smul.u32 8, %s29
        %s1455 = smul.u32 32, %s30
        %p1456 = scmp.lt.s32.totalorder %s29, 1
        %s1457 = scalar_select %p1456, %s29, 1
        %s1458 = smul.addr %s1457, 8
        %s1459 = scalar_lea.vmem %s6, %s1458
        %p1460 = scmp.lt.s32.totalorder %s29, 1
        %s1461 = scalar_select %p1460, %s29, 1
        %s1462 = smul.addr %s1461, 8
        %s1463 = scalar_lea.vmem %s8, %s1462
        %p1465 = scmp.eq.s32.totalorder %s30, 0
        // Predicated region
        $region94: #{tpu_custom_call.1} parent=84 // pred_check
          %p1466 = pneg %p1465
        $region95: #{tpu_custom_call.1} parent=84 // pred_check_branch
          %1468 = sbr.rel (%p1466) target = $region97
        $region96: #{tpu_custom_call.1} parent=84 // pred_region
          %vm1469 = vcmask 261120
          %1470 = vst.msk [vmem:[#allocation2] sm:$0xff] %vm1469, 0.0
          %vm1471 = vcmask 7168
          %1472 = vst.msk [vmem:[#allocation3] sm:$0xff] %vm1471, 0.0
        $region97: #{tpu_custom_call.1} parent=84 // pred_fallthru
          _
        %v1473 = vld [vmem:[%s1452] sm:$0xff]
        %v1474 = vld [vmem:[%s1452 + $0x8] sm:$0xff]
        %vm1475 = vcmp.ne.s32.totalorder %v1473, 1
        %vm1476 = vcmp.ne.s32.totalorder %v1474, 1
        %v1477 = vsel %vm1475, 1, 0
        %v1478 = vsel %vm1476, 1, 0
        %v1479 = vcvt.s32.f32 %v1477
        %v1480 = vcvt.s32.f32 %v1478
        %v1481 = vld [vmem:[%s1395] sm:$0xf]
        %v1482 = vld [vmem:[%s1395 + $0x4] sm:$0xf]
        %v1483 = vld [vmem:[%s1395 + $0x8] sm:$0xf]
        %v1484 = vld [vmem:[%s1395 + $0xc] sm:$0xf]
        %v1485 = vld [vmem:[%s1395 + $0x10] sm:$0xf]
        %v1486 = vld [vmem:[%s1395 + $0x14] sm:$0xf]
        %v1487 = vld [vmem:[%s1395 + $0x18] sm:$0xf]
        %v1488 = vld [vmem:[%s1395 + $0x1c] sm:$0xf]
        %v1489 = vld [vmem:[%s1395 + $0x20] sm:$0xf]
        %v1490 = vld [vmem:[%s1395 + $0x24] sm:$0xf]
        %v1491 = vld [vmem:[%s1395 + $0x28] sm:$0xf]
        %v1492 = vld [vmem:[%s1395 + $0x2c] sm:$0xf]
        %v1493 = vld [vmem:[%s1395 + $0x30] sm:$0xf]
        %v1494 = vld [vmem:[%s1395 + $0x34] sm:$0xf]
        %v1495 = vld [vmem:[%s1395 + $0x38] sm:$0xf]
        %v1496 = vld [vmem:[%s1395 + $0x3c] sm:$0xf]
        %v1497 = vld [vmem:[%s1395 + $0x40] sm:$0xf]
        %v1498 = vld [vmem:[%s1395 + $0x44] sm:$0xf]
        %v1499 = vld [vmem:[%s1395 + $0x48] sm:$0xf]
        %v1500 = vld [vmem:[%s1395 + $0x4c] sm:$0xf]
        %v1501 = vld [vmem:[%s1395 + $0x50] sm:$0xf]
        %v1502 = vld [vmem:[%s1395 + $0x54] sm:$0xf]
        %v1503 = vld [vmem:[%s1395 + $0x58] sm:$0xf]
        %v1504 = vld [vmem:[%s1395 + $0x5c] sm:$0xf]
        %v1505 = vld [vmem:[%s1395 + $0x60] sm:$0xf]
        %v1506 = vld [vmem:[%s1395 + $0x64] sm:$0xf]
        %v1507 = vld [vmem:[%s1395 + $0x68] sm:$0xf]
        %v1508 = vld [vmem:[%s1395 + $0x6c] sm:$0xf]
        %v1509 = vld [vmem:[%s1395 + $0x70] sm:$0xf]
        %v1510 = vld [vmem:[%s1395 + $0x74] sm:$0xf]
        %v1511 = vld [vmem:[%s1395 + $0x78] sm:$0xf]
        %v1512 = vld [vmem:[%s1395 + $0x7c] sm:$0xf]
        %v1513 = vld [vmem:[%s1395 + $0x80] sm:$0xf]
        %v1514 = vld [vmem:[%s1395 + $0x84] sm:$0xf]
        %v1515 = vld [vmem:[%s1395 + $0x88] sm:$0xf]
        %v1516 = vld [vmem:[%s1395 + $0x8c] sm:$0xf]
        %v1517 = vld [vmem:[%s1395 + $0x90] sm:$0xf]
        %v1518 = vld [vmem:[%s1395 + $0x94] sm:$0xf]
        %v1519 = vld [vmem:[%s1395 + $0x98] sm:$0xf]
        %v1520 = vld [vmem:[%s1395 + $0x9c] sm:$0xf]
        %v1521 = vld [vmem:[%s1395 + $0xa0] sm:$0xf]
        %v1522 = vld [vmem:[%s1395 + $0xa4] sm:$0xf]
        %v1523 = vld [vmem:[%s1395 + $0xa8] sm:$0xf]
        %v1524 = vld [vmem:[%s1395 + $0xac] sm:$0xf]
        %v1525 = vld [vmem:[%s1395 + $0xb0] sm:$0xf]
        %v1526 = vld [vmem:[%s1395 + $0xb4] sm:$0xf]
        %v1527 = vld [vmem:[%s1395 + $0xb8] sm:$0xf]
        %v1528 = vld [vmem:[%s1395 + $0xbc] sm:$0xf]
        %v1529 = vld [vmem:[%s1395 + $0xc0] sm:$0xf]
        %v1530 = vld [vmem:[%s1395 + $0xc4] sm:$0xf]
        %v1531 = vld [vmem:[%s1395 + $0xc8] sm:$0xf]
        %v1532 = vld [vmem:[%s1395 + $0xcc] sm:$0xf]
        %v1533 = vld [vmem:[%s1395 + $0xd0] sm:$0xf]
        %v1534 = vld [vmem:[%s1395 + $0xd4] sm:$0xf]
        %v1535 = vld [vmem:[%s1395 + $0xd8] sm:$0xf]
        %v1536 = vld [vmem:[%s1395 + $0xdc] sm:$0xf]
        %v1537 = vld [vmem:[%s1395 + $0xe0] sm:$0xf]
        %v1538 = vld [vmem:[%s1395 + $0xe4] sm:$0xf]
        %v1539 = vld [vmem:[%s1395 + $0xe8] sm:$0xf]
        %v1540 = vld [vmem:[%s1395 + $0xec] sm:$0xf]
        %v1541 = vld [vmem:[%s1395 + $0xf0] sm:$0xf]
        %v1542 = vld [vmem:[%s1395 + $0xf4] sm:$0xf]
        %v1543 = vld [vmem:[%s1395 + $0xf8] sm:$0xf]
        %v1544 = vld [vmem:[%s1395 + $0xfc] sm:$0xf]
        %v1545 = vld [vmem:[%s1395 + $0x100] sm:$0xf]
        %v1546 = vld [vmem:[%s1395 + $0x104] sm:$0xf]
        %v1547 = vld [vmem:[%s1395 + $0x108] sm:$0xf]
        %v1548 = vld [vmem:[%s1395 + $0x10c] sm:$0xf]
        %v1549 = vld [vmem:[%s1395 + $0x110] sm:$0xf]
        %v1550 = vld [vmem:[%s1395 + $0x114] sm:$0xf]
        %v1551 = vld [vmem:[%s1395 + $0x118] sm:$0xf]
        %v1552 = vld [vmem:[%s1395 + $0x11c] sm:$0xf]
        %v1553 = vld [vmem:[%s1395 + $0x120] sm:$0xf]
        %v1554 = vld [vmem:[%s1395 + $0x124] sm:$0xf]
        %v1555 = vld [vmem:[%s1395 + $0x128] sm:$0xf]
        %v1556 = vld [vmem:[%s1395 + $0x12c] sm:$0xf]
        %v1557 = vld [vmem:[%s1395 + $0x130] sm:$0xf]
        %v1558 = vld [vmem:[%s1395 + $0x134] sm:$0xf]
        %v1559 = vld [vmem:[%s1395 + $0x138] sm:$0xf]
        %v1560 = vld [vmem:[%s1395 + $0x13c] sm:$0xf]
        %v1561 = vld [vmem:[%s1395 + $0x140] sm:$0xf]
        %v1562 = vld [vmem:[%s1395 + $0x144] sm:$0xf]
        %v1563 = vld [vmem:[%s1395 + $0x148] sm:$0xf]
        %v1564 = vld [vmem:[%s1395 + $0x14c] sm:$0xf]
        %v1565 = vld [vmem:[%s1395 + $0x150] sm:$0xf]
        %v1566 = vld [vmem:[%s1395 + $0x154] sm:$0xf]
        %v1567 = vld [vmem:[%s1395 + $0x158] sm:$0xf]
        %v1568 = vld [vmem:[%s1395 + $0x15c] sm:$0xf]
        %v1569 = vld [vmem:[%s1395 + $0x160] sm:$0xf]
        %v1570 = vld [vmem:[%s1395 + $0x164] sm:$0xf]
        %v1571 = vld [vmem:[%s1395 + $0x168] sm:$0xf]
        %v1572 = vld [vmem:[%s1395 + $0x16c] sm:$0xf]
        %v1573 = vld [vmem:[%s1395 + $0x170] sm:$0xf]
        %v1574 = vld [vmem:[%s1395 + $0x174] sm:$0xf]
        %v1575 = vld [vmem:[%s1395 + $0x178] sm:$0xf]
        %v1576 = vld [vmem:[%s1395 + $0x17c] sm:$0xf]
        %v1577 = vld [vmem:[%s1395 + $0x180] sm:$0xf]
        %v1578 = vld [vmem:[%s1395 + $0x184] sm:$0xf]
        %v1579 = vld [vmem:[%s1395 + $0x188] sm:$0xf]
        %v1580 = vld [vmem:[%s1395 + $0x18c] sm:$0xf]
        %v1581 = vld [vmem:[%s1395 + $0x190] sm:$0xf]
        %v1582 = vld [vmem:[%s1395 + $0x194] sm:$0xf]
        %v1583 = vld [vmem:[%s1395 + $0x198] sm:$0xf]
        %v1584 = vld [vmem:[%s1395 + $0x19c] sm:$0xf]
        %v1585 = vld [vmem:[%s1395 + $0x1a0] sm:$0xf]
        %v1586 = vld [vmem:[%s1395 + $0x1a4] sm:$0xf]
        %v1587 = vld [vmem:[%s1395 + $0x1a8] sm:$0xf]
        %v1588 = vld [vmem:[%s1395 + $0x1ac] sm:$0xf]
        %v1589 = vld [vmem:[%s1395 + $0x1b0] sm:$0xf]
        %v1590 = vld [vmem:[%s1395 + $0x1b4] sm:$0xf]
        %v1591 = vld [vmem:[%s1395 + $0x1b8] sm:$0xf]
        %v1592 = vld [vmem:[%s1395 + $0x1bc] sm:$0xf]
        %v1593 = vld [vmem:[%s1395 + $0x1c0] sm:$0xf]
        %v1594 = vld [vmem:[%s1395 + $0x1c4] sm:$0xf]
        %v1595 = vld [vmem:[%s1395 + $0x1c8] sm:$0xf]
        %v1596 = vld [vmem:[%s1395 + $0x1cc] sm:$0xf]
        %v1597 = vld [vmem:[%s1395 + $0x1d0] sm:$0xf]
        %v1598 = vld [vmem:[%s1395 + $0x1d4] sm:$0xf]
        %v1599 = vld [vmem:[%s1395 + $0x1d8] sm:$0xf]
        %v1600 = vld [vmem:[%s1395 + $0x1dc] sm:$0xf]
        %v1601 = vld [vmem:[%s1395 + $0x1e0] sm:$0xf]
        %v1602 = vld [vmem:[%s1395 + $0x1e4] sm:$0xf]
        %v1603 = vld [vmem:[%s1395 + $0x1e8] sm:$0xf]
        %v1604 = vld [vmem:[%s1395 + $0x1ec] sm:$0xf]
        %v1605 = vld [vmem:[%s1395 + $0x1f0] sm:$0xf]
        %v1606 = vld [vmem:[%s1395 + $0x1f4] sm:$0xf]
        %v1607 = vld [vmem:[%s1395 + $0x1f8] sm:$0xf]
        %v1608 = vld [vmem:[%s1395 + $0x1fc] sm:$0xf]
        %v1609 = vld [vmem:[%s1395 + $0x200] sm:$0xf]
        %v1610 = vld [vmem:[%s1395 + $0x204] sm:$0xf]
        %v1611 = vld [vmem:[%s1395 + $0x208] sm:$0xf]
        %v1612 = vld [vmem:[%s1395 + $0x20c] sm:$0xf]
        %v1613 = vld [vmem:[%s1395 + $0x210] sm:$0xf]
        %v1614 = vld [vmem:[%s1395 + $0x214] sm:$0xf]
        %v1615 = vld [vmem:[%s1395 + $0x218] sm:$0xf]
        %v1616 = vld [vmem:[%s1395 + $0x21c] sm:$0xf]
        %v1617 = vld [vmem:[%s1395 + $0x220] sm:$0xf]
        %v1618 = vld [vmem:[%s1395 + $0x224] sm:$0xf]
        %v1619 = vld [vmem:[%s1395 + $0x228] sm:$0xf]
        %v1620 = vld [vmem:[%s1395 + $0x22c] sm:$0xf]
        %v1621 = vld [vmem:[%s1395 + $0x230] sm:$0xf]
        %v1622 = vld [vmem:[%s1395 + $0x234] sm:$0xf]
        %v1623 = vld [vmem:[%s1395 + $0x238] sm:$0xf]
        %v1624 = vld [vmem:[%s1395 + $0x23c] sm:$0xf]
        %v1625 = vld [vmem:[%s1395 + $0x240] sm:$0xf]
        %v1626 = vld [vmem:[%s1395 + $0x244] sm:$0xf]
        %v1627 = vld [vmem:[%s1395 + $0x248] sm:$0xf]
        %v1628 = vld [vmem:[%s1395 + $0x24c] sm:$0xf]
        %v1629 = vld [vmem:[%s1395 + $0x250] sm:$0xf]
        %v1630 = vld [vmem:[%s1395 + $0x254] sm:$0xf]
        %v1631 = vld [vmem:[%s1395 + $0x258] sm:$0xf]
        %v1632 = vld [vmem:[%s1395 + $0x25c] sm:$0xf]
        %v1633 = vld [vmem:[%s1395 + $0x260] sm:$0xf]
        %v1634 = vld [vmem:[%s1395 + $0x264] sm:$0xf]
        %v1635 = vld [vmem:[%s1395 + $0x268] sm:$0xf]
        %v1636 = vld [vmem:[%s1395 + $0x26c] sm:$0xf]
        %v1637 = vld [vmem:[%s1395 + $0x270] sm:$0xf]
        %v1638 = vld [vmem:[%s1395 + $0x274] sm:$0xf]
        %v1639 = vld [vmem:[%s1395 + $0x278] sm:$0xf]
        %v1640 = vld [vmem:[%s1395 + $0x27c] sm:$0xf]
        %v1641 = vld [vmem:[%s1395 + $0x280] sm:$0xf]
        %v1642 = vld [vmem:[%s1395 + $0x284] sm:$0xf]
        %v1643 = vld [vmem:[%s1395 + $0x288] sm:$0xf]
        %v1644 = vld [vmem:[%s1395 + $0x28c] sm:$0xf]
        %v1645 = vld [vmem:[%s1395 + $0x290] sm:$0xf]
        %v1646 = vld [vmem:[%s1395 + $0x294] sm:$0xf]
        %v1647 = vld [vmem:[%s1395 + $0x298] sm:$0xf]
        %v1648 = vld [vmem:[%s1395 + $0x29c] sm:$0xf]
        %v1649 = vld [vmem:[%s1395 + $0x2a0] sm:$0xf]
        %v1650 = vld [vmem:[%s1395 + $0x2a4] sm:$0xf]
        %v1651 = vld [vmem:[%s1395 + $0x2a8] sm:$0xf]
        %v1652 = vld [vmem:[%s1395 + $0x2ac] sm:$0xf]
        %v1653 = vld [vmem:[%s1395 + $0x2b0] sm:$0xf]
        %v1654 = vld [vmem:[%s1395 + $0x2b4] sm:$0xf]
        %v1655 = vld [vmem:[%s1395 + $0x2b8] sm:$0xf]
        %v1656 = vld [vmem:[%s1395 + $0x2bc] sm:$0xf]
        %v1657 = vld [vmem:[%s1395 + $0x2c0] sm:$0xf]
        %v1658 = vld [vmem:[%s1395 + $0x2c4] sm:$0xf]
        %v1659 = vld [vmem:[%s1395 + $0x2c8] sm:$0xf]
        %v1660 = vld [vmem:[%s1395 + $0x2cc] sm:$0xf]
        %v1661 = vld [vmem:[%s1395 + $0x2d0] sm:$0xf]
        %v1662 = vld [vmem:[%s1395 + $0x2d4] sm:$0xf]
        %v1663 = vld [vmem:[%s1395 + $0x2d8] sm:$0xf]
        %v1664 = vld [vmem:[%s1395 + $0x2dc] sm:$0xf]
        %v1665 = vld [vmem:[%s1395 + $0x2e0] sm:$0xf]
        %v1666 = vld [vmem:[%s1395 + $0x2e4] sm:$0xf]
        %v1667 = vld [vmem:[%s1395 + $0x2e8] sm:$0xf]
        %v1668 = vld [vmem:[%s1395 + $0x2ec] sm:$0xf]
        %v1669 = vld [vmem:[%s1395 + $0x2f0] sm:$0xf]
        %v1670 = vld [vmem:[%s1395 + $0x2f4] sm:$0xf]
        %v1671 = vld [vmem:[%s1395 + $0x2f8] sm:$0xf]
        %v1672 = vld [vmem:[%s1395 + $0x2fc] sm:$0xf]
        %v1673 = vld [vmem:[%s1395 + $0x300] sm:$0xf]
        %v1674 = vld [vmem:[%s1395 + $0x304] sm:$0xf]
        %v1675 = vld [vmem:[%s1395 + $0x308] sm:$0xf]
        %v1676 = vld [vmem:[%s1395 + $0x30c] sm:$0xf]
        %v1677 = vld [vmem:[%s1395 + $0x310] sm:$0xf]
        %v1678 = vld [vmem:[%s1395 + $0x314] sm:$0xf]
        %v1679 = vld [vmem:[%s1395 + $0x318] sm:$0xf]
        %v1680 = vld [vmem:[%s1395 + $0x31c] sm:$0xf]
        %v1681 = vld [vmem:[%s1395 + $0x320] sm:$0xf]
        %v1682 = vld [vmem:[%s1395 + $0x324] sm:$0xf]
        %v1683 = vld [vmem:[%s1395 + $0x328] sm:$0xf]
        %v1684 = vld [vmem:[%s1395 + $0x32c] sm:$0xf]
        %v1685 = vld [vmem:[%s1395 + $0x330] sm:$0xf]
        %v1686 = vld [vmem:[%s1395 + $0x334] sm:$0xf]
        %v1687 = vld [vmem:[%s1395 + $0x338] sm:$0xf]
        %v1688 = vld [vmem:[%s1395 + $0x33c] sm:$0xf]
        %v1689 = vld [vmem:[%s1395 + $0x340] sm:$0xf]
        %v1690 = vld [vmem:[%s1395 + $0x344] sm:$0xf]
        %v1691 = vld [vmem:[%s1395 + $0x348] sm:$0xf]
        %v1692 = vld [vmem:[%s1395 + $0x34c] sm:$0xf]
        %v1693 = vld [vmem:[%s1395 + $0x350] sm:$0xf]
        %v1694 = vld [vmem:[%s1395 + $0x354] sm:$0xf]
        %v1695 = vld [vmem:[%s1395 + $0x358] sm:$0xf]
        %v1696 = vld [vmem:[%s1395 + $0x35c] sm:$0xf]
        %v1697 = vld [vmem:[%s1395 + $0x360] sm:$0xf]
        %v1698 = vld [vmem:[%s1395 + $0x364] sm:$0xf]
        %v1699 = vld [vmem:[%s1395 + $0x368] sm:$0xf]
        %v1700 = vld [vmem:[%s1395 + $0x36c] sm:$0xf]
        %v1701 = vld [vmem:[%s1395 + $0x370] sm:$0xf]
        %v1702 = vld [vmem:[%s1395 + $0x374] sm:$0xf]
        %v1703 = vld [vmem:[%s1395 + $0x378] sm:$0xf]
        %v1704 = vld [vmem:[%s1395 + $0x37c] sm:$0xf]
        %v1705 = vld [vmem:[%s1395 + $0x380] sm:$0xf]
        %v1706 = vld [vmem:[%s1395 + $0x384] sm:$0xf]
        %v1707 = vld [vmem:[%s1395 + $0x388] sm:$0xf]
        %v1708 = vld [vmem:[%s1395 + $0x38c] sm:$0xf]
        %v1709 = vld [vmem:[%s1395 + $0x390] sm:$0xf]
        %v1710 = vld [vmem:[%s1395 + $0x394] sm:$0xf]
        %v1711 = vld [vmem:[%s1395 + $0x398] sm:$0xf]
        %v1712 = vld [vmem:[%s1395 + $0x39c] sm:$0xf]
        %v1713 = vld [vmem:[%s1395 + $0x3a0] sm:$0xf]
        %v1714 = vld [vmem:[%s1395 + $0x3a4] sm:$0xf]
        %v1715 = vld [vmem:[%s1395 + $0x3a8] sm:$0xf]
        %v1716 = vld [vmem:[%s1395 + $0x3ac] sm:$0xf]
        %v1717 = vld [vmem:[%s1395 + $0x3b0] sm:$0xf]
        %v1718 = vld [vmem:[%s1395 + $0x3b4] sm:$0xf]
        %v1719 = vld [vmem:[%s1395 + $0x3b8] sm:$0xf]
        %v1720 = vld [vmem:[%s1395 + $0x3bc] sm:$0xf]
        %v1721 = vld [vmem:[%s1395 + $0x3c0] sm:$0xf]
        %v1722 = vld [vmem:[%s1395 + $0x3c4] sm:$0xf]
        %v1723 = vld [vmem:[%s1395 + $0x3c8] sm:$0xf]
        %v1724 = vld [vmem:[%s1395 + $0x3cc] sm:$0xf]
        %v1725 = vld [vmem:[%s1395 + $0x3d0] sm:$0xf]
        %v1726 = vld [vmem:[%s1395 + $0x3d4] sm:$0xf]
        %v1727 = vld [vmem:[%s1395 + $0x3d8] sm:$0xf]
        %v1728 = vld [vmem:[%s1395 + $0x3dc] sm:$0xf]
        %v1729 = vld [vmem:[%s1395 + $0x3e0] sm:$0xf]
        %v1730 = vld [vmem:[%s1395 + $0x3e4] sm:$0xf]
        %v1731 = vld [vmem:[%s1395 + $0x3e8] sm:$0xf]
        %v1732 = vld [vmem:[%s1395 + $0x3ec] sm:$0xf]
        %v1733 = vld [vmem:[%s1395 + $0x3f0] sm:$0xf]
        %v1734 = vld [vmem:[%s1395 + $0x3f4] sm:$0xf]
        %v1735 = vld [vmem:[%s1395 + $0x3f8] sm:$0xf]
        %v1736 = vld [vmem:[%s1395 + $0x3fc] sm:$0xf]
        %v1737 = vpack.c.bf16 %v1479, %v1479
        %v1738 = vpack.c.bf16 %v1480, %v1480
        %v1741 = vcombine.low %v1737, %v1738
        %v1743 = vunpack.c.l.s4 1966171168
        %v1744 = vunpack.c.0.s8 %v1743
        %v1745 = vlaneseq
        %v1746 = vshrl.u32 %v1745, 7
        %v1747 = vsub.s32 %v1744, %v1746
        %v1748 = vrot.slane %v1741, %v1747
        %v1749 = vcombine.high %v1748, %v1748
        %v1751 = vunpack.c.l.s4 1966171168
        %v1752 = vunpack.c.0.s8 %v1751
        %v1753 = vlaneseq
        %v1754 = vshrl.u32 %v1753, 7
        %v1755 = vsub.s32 %v1752, %v1754
        %v1756 = vrot.slane %v1748, %v1755
        %v1758 = vunpack.c.l.s4 1966171168
        %v1759 = vunpack.c.0.s8 %v1758
        %v1760 = vlaneseq
        %v1761 = vshrl.u32 %v1760, 7
        %v1762 = vsub.s32 %v1759, %v1761
        %v1763 = vrot.slane %v1749, %v1762
        %v1764 = vcombine.high %v1756, %v1756
        %v1765 = vcombine.high %v1763, %v1763
        %v1766 = vunpack.i.l.s16 %v1756
        %v1767 = vunpack.i.h.s16 %v1756
        %v1768 = vunpack.i.l.s16 %v1763
        %v1769 = vunpack.i.h.s16 %v1763
        %v1770 = vunpack.i.l.s16 %v1764
        %v1771 = vunpack.i.h.s16 %v1764
        %v1772 = vunpack.i.l.s16 %v1765
        %v1773 = vunpack.i.h.s16 %v1765
        %v1774 = vpack.i.b16 %v1766, %v1766
        %v1775 = vlaneseq
        %v1776 = vshrl.u32 %v1775, 7
        %v1777 = vsub.s32 0, %v1776
        %v1778 = vrot.slane %v1774, %v1777
        %v1779 = vlaneseq
        %v1780 = vshrl.u32 %v1779, 7
        %v1781 = vsub.s32 1, %v1780
        %v1782 = vrot.slane %v1774, %v1781
        %v1817 = vunpack.c.l.b16 %v1481
        %v1818 = vunpack.c.l.b16 %v1482
        %v1819 = vunpack.c.l.b16 %v1483
        %v1820 = vunpack.c.l.b16 %v1484
        %v1821 = vunpack.c.l.b16 %v1485
        %v1822 = vunpack.c.l.b16 %v1486
        %v1823 = vunpack.c.l.b16 %v1487
        %v1824 = vunpack.c.l.b16 %v1488
        %v1825 = vunpack.c.l.b16 %v1489
        %v1826 = vunpack.c.l.b16 %v1490
        %v1827 = vunpack.c.l.b16 %v1491
        %v1828 = vunpack.c.l.b16 %v1492
        %v1829 = vunpack.c.l.b16 %v1493
        %v1830 = vunpack.c.l.b16 %v1494
        %v1831 = vunpack.c.l.b16 %v1495
        %v1832 = vunpack.c.l.b16 %v1496
        %v1833 = vunpack.c.l.b16 %v1497
        %v1834 = vunpack.c.l.b16 %v1498
        %v1835 = vunpack.c.l.b16 %v1499
        %v1836 = vunpack.c.l.b16 %v1500
        %v1837 = vunpack.c.l.b16 %v1501
        %v1838 = vunpack.c.l.b16 %v1502
        %v1839 = vunpack.c.l.b16 %v1503
        %v1840 = vunpack.c.l.b16 %v1504
        %v1841 = vunpack.c.l.b16 %v1505
        %v1842 = vunpack.c.l.b16 %v1506
        %v1843 = vunpack.c.l.b16 %v1507
        %v1844 = vunpack.c.l.b16 %v1508
        %v1845 = vunpack.c.l.b16 %v1509
        %v1846 = vunpack.c.l.b16 %v1510
        %v1847 = vunpack.c.l.b16 %v1511
        %v1848 = vunpack.c.l.b16 %v1512
        %v1849 = vpack.c.b16 %v1818, %v1817
        %v1850 = vpack.c.b16 %v1820, %v1819
        %v1851 = vpack.c.b16 %v1822, %v1821
        %v1852 = vpack.c.b16 %v1824, %v1823
        %v1853 = vpack.c.b16 %v1826, %v1825
        %v1854 = vpack.c.b16 %v1828, %v1827
        %v1855 = vpack.c.b16 %v1830, %v1829
        %v1856 = vpack.c.b16 %v1832, %v1831
        %v1857 = vpack.c.b16 %v1834, %v1833
        %v1858 = vpack.c.b16 %v1836, %v1835
        %v1859 = vpack.c.b16 %v1838, %v1837
        %v1860 = vpack.c.b16 %v1840, %v1839
        %v1861 = vpack.c.b16 %v1842, %v1841
        %v1862 = vpack.c.b16 %v1844, %v1843
        %v1863 = vpack.c.b16 %v1846, %v1845
        %v1864 = vpack.c.b16 %v1848, %v1847
        %1881 = vmatprep.subr.bf16.mxu0 0
        %1882 = vmatpush1.bf16.msra.mxu0 %v1849
        %1883 = vmatprep.subr.bf16.mxu0 0
        %1884 = vmatpush1.bf16.msra.mxu0 %v1850
        %1885 = vmatprep.subr.bf16.mxu0 0
        %1886 = vmatpush1.bf16.msra.mxu0 %v1851
        %1887 = vmatprep.subr.bf16.mxu0 0
        %1888 = vmatpush1.bf16.msra.mxu0 %v1852
        %1889 = vmatprep.subr.bf16.mxu0 0
        %1890 = vmatpush1.bf16.msra.mxu0 %v1853
        %1891 = vmatprep.subr.bf16.mxu0 0
        %1892 = vmatpush1.bf16.msra.mxu0 %v1854
        %1893 = vmatprep.subr.bf16.mxu0 0
        %1894 = vmatpush1.bf16.msra.mxu0 %v1855
        %1895 = vmatprep.subr.bf16.mxu0 0
        %1896 = vmatpush1.bf16.msra.mxu0 %v1856
        %1897 = vmatprep.subr.bf16.mxu0 0
        %1898 = vmatpush1.bf16.msra.mxu0 %v1857
        %1899 = vmatprep.subr.bf16.mxu0 0
        %1900 = vmatpush1.bf16.msra.mxu0 %v1858
        %1901 = vmatprep.subr.bf16.mxu0 0
        %1902 = vmatpush1.bf16.msra.mxu0 %v1859
        %1903 = vmatprep.subr.bf16.mxu0 0
        %1904 = vmatpush1.bf16.msra.mxu0 %v1860
        %1905 = vmatprep.subr.bf16.mxu0 0
        %1906 = vmatpush1.bf16.msra.mxu0 %v1861
        %1907 = vmatprep.subr.bf16.mxu0 0
        %1908 = vmatpush1.bf16.msra.mxu0 %v1862
        %1909 = vmatprep.subr.bf16.mxu0 0
        %1910 = vmatpush1.bf16.msra.mxu0 %v1863
        %1911 = vmatprep.subr.bf16.mxu0 0
        %1912 = vmatpush1.bf16.msra.mxu0 %v1864
        %1913 = vmatprep.mubr.bf16.mxu0 %v1782
        %1914 = vmatmul.mubr.bf16.gmra.mrb[0].mxu0 %v1778
        %v1915 = vpop.f32.mrb[0].mxu0
        %v1916 = vadd.f32 0.0, %v1915
        %v1917 = vpop.f32.mrb[0].mxu0
        %v1918 = vpop.f32.mrb[0].mxu0
        %v1919 = vpop.f32.mrb[0].mxu0
        %1920 = vdwg.mxu0
        %v1921 = vpack.i.b16 %v1767, %v1767
        %v1922 = vlaneseq
        %v1923 = vshrl.u32 %v1922, 7
        %v1924 = vsub.s32 0, %v1923
        %v1925 = vrot.slane %v1921, %v1924
        %v1926 = vlaneseq
        %v1927 = vshrl.u32 %v1926, 7
        %v1928 = vsub.s32 1, %v1927
        %v1929 = vrot.slane %v1921, %v1928
        %v1964 = vunpack.c.l.b16 %v1513
        %v1965 = vunpack.c.l.b16 %v1514
        %v1966 = vunpack.c.l.b16 %v1515
        %v1967 = vunpack.c.l.b16 %v1516
        %v1968 = vunpack.c.l.b16 %v1517
        %v1969 = vunpack.c.l.b16 %v1518
        %v1970 = vunpack.c.l.b16 %v1519
        %v1971 = vunpack.c.l.b16 %v1520
        %v1972 = vunpack.c.l.b16 %v1521
        %v1973 = vunpack.c.l.b16 %v1522
        %v1974 = vunpack.c.l.b16 %v1523
        %v1975 = vunpack.c.l.b16 %v1524
        %v1976 = vunpack.c.l.b16 %v1525
        %v1977 = vunpack.c.l.b16 %v1526
        %v1978 = vunpack.c.l.b16 %v1527
        %v1979 = vunpack.c.l.b16 %v1528
        %v1980 = vunpack.c.l.b16 %v1529
        %v1981 = vunpack.c.l.b16 %v1530
        %v1982 = vunpack.c.l.b16 %v1531
        %v1983 = vunpack.c.l.b16 %v1532
        %v1984 = vunpack.c.l.b16 %v1533
        %v1985 = vunpack.c.l.b16 %v1534
        %v1986 = vunpack.c.l.b16 %v1535
        %v1987 = vunpack.c.l.b16 %v1536
        %v1988 = vunpack.c.l.b16 %v1537
        %v1989 = vunpack.c.l.b16 %v1538
        %v1990 = vunpack.c.l.b16 %v1539
        %v1991 = vunpack.c.l.b16 %v1540
        %v1992 = vunpack.c.l.b16 %v1541
        %v1993 = vunpack.c.l.b16 %v1542
        %v1994 = vunpack.c.l.b16 %v1543
        %v1995 = vunpack.c.l.b16 %v1544
        %v1996 = vpack.c.b16 %v1965, %v1964
        %v1997 = vpack.c.b16 %v1967, %v1966
        %v1998 = vpack.c.b16 %v1969, %v1968
        %v1999 = vpack.c.b16 %v1971, %v1970
        %v2000 = vpack.c.b16 %v1973, %v1972
        %v2001 = vpack.c.b16 %v1975, %v1974
        %v2002 = vpack.c.b16 %v1977, %v1976
        %v2003 = vpack.c.b16 %v1979, %v1978
        %v2004 = vpack.c.b16 %v1981, %v1980
        %v2005 = vpack.c.b16 %v1983, %v1982
        %v2006 = vpack.c.b16 %v1985, %v1984
        %v2007 = vpack.c.b16 %v1987, %v1986
        %v2008 = vpack.c.b16 %v1989, %v1988
        %v2009 = vpack.c.b16 %v1991, %v1990
        %v2010 = vpack.c.b16 %v1993, %v1992
        %v2011 = vpack.c.b16 %v1995, %v1994
        %2028 = vmatprep.subr.bf16.mxu0 0
        %2029 = vmatpush1.bf16.msra.mxu0 %v1996
        %2030 = vmatprep.subr.bf16.mxu0 0
        %2031 = vmatpush1.bf16.msra.mxu0 %v1997
        %2032 = vmatprep.subr.bf16.mxu0 0
        %2033 = vmatpush1.bf16.msra.mxu0 %v1998
        %2034 = vmatprep.subr.bf16.mxu0 0
        %2035 = vmatpush1.bf16.msra.mxu0 %v1999
        %2036 = vmatprep.subr.bf16.mxu0 0
        %2037 = vmatpush1.bf16.msra.mxu0 %v2000
        %2038 = vmatprep.subr.bf16.mxu0 0
        %2039 = vmatpush1.bf16.msra.mxu0 %v2001
        %2040 = vmatprep.subr.bf16.mxu0 0
        %2041 = vmatpush1.bf16.msra.mxu0 %v2002
        %2042 = vmatprep.subr.bf16.mxu0 0
        %2043 = vmatpush1.bf16.msra.mxu0 %v2003
        %2044 = vmatprep.subr.bf16.mxu0 0
        %2045 = vmatpush1.bf16.msra.mxu0 %v2004
        %2046 = vmatprep.subr.bf16.mxu0 0
        %2047 = vmatpush1.bf16.msra.mxu0 %v2005
        %2048 = vmatprep.subr.bf16.mxu0 0
        %2049 = vmatpush1.bf16.msra.mxu0 %v2006
        %2050 = vmatprep.subr.bf16.mxu0 0
        %2051 = vmatpush1.bf16.msra.mxu0 %v2007
        %2052 = vmatprep.subr.bf16.mxu0 0
        %2053 = vmatpush1.bf16.msra.mxu0 %v2008
        %2054 = vmatprep.subr.bf16.mxu0 0
        %2055 = vmatpush1.bf16.msra.mxu0 %v2009
        %2056 = vmatprep.subr.bf16.mxu0 0
        %2057 = vmatpush1.bf16.msra.mxu0 %v2010
        %2058 = vmatprep.subr.bf16.mxu0 0
        %2059 = vmatpush1.bf16.msra.mxu0 %v2011
        %2060 = vmatprep.mubr.bf16.mxu0 %v1929
        %2061 = vmatmul.mubr.bf16.gmra.mrb[0].mxu0 %v1925
        %v2062 = vpop.f32.mrb[0].mxu0
        %v2063 = vadd.f32 0.0, %v2062
        %v2064 = vpop.f32.mrb[0].mxu0
        %v2065 = vpop.f32.mrb[0].mxu0
        %v2066 = vpop.f32.mrb[0].mxu0
        %2067 = vdwg.mxu0
        %v2068 = vpack.i.b16 %v1768, %v1768
        %v2069 = vlaneseq
        %v2070 = vshrl.u32 %v2069, 7
        %v2071 = vsub.s32 0, %v2070
        %v2072 = vrot.slane %v2068, %v2071
        %v2073 = vlaneseq
        %v2074 = vshrl.u32 %v2073, 7
        %v2075 = vsub.s32 1, %v2074
        %v2076 = vrot.slane %v2068, %v2075
        %v2111 = vunpack.c.l.b16 %v1545
        %v2112 = vunpack.c.l.b16 %v1546
        %v2113 = vunpack.c.l.b16 %v1547
        %v2114 = vunpack.c.l.b16 %v1548
        %v2115 = vunpack.c.l.b16 %v1549
        %v2116 = vunpack.c.l.b16 %v1550
        %v2117 = vunpack.c.l.b16 %v1551
        %v2118 = vunpack.c.l.b16 %v1552
        %v2119 = vunpack.c.l.b16 %v1553
        %v2120 = vunpack.c.l.b16 %v1554
        %v2121 = vunpack.c.l.b16 %v1555
        %v2122 = vunpack.c.l.b16 %v1556
        %v2123 = vunpack.c.l.b16 %v1557
        %v2124 = vunpack.c.l.b16 %v1558
        %v2125 = vunpack.c.l.b16 %v1559
        %v2126 = vunpack.c.l.b16 %v1560
        %v2127 = vunpack.c.l.b16 %v1561
        %v2128 = vunpack.c.l.b16 %v1562
        %v2129 = vunpack.c.l.b16 %v1563
        %v2130 = vunpack.c.l.b16 %v1564
        %v2131 = vunpack.c.l.b16 %v1565
        %v2132 = vunpack.c.l.b16 %v1566
        %v2133 = vunpack.c.l.b16 %v1567
        %v2134 = vunpack.c.l.b16 %v1568
        %v2135 = vunpack.c.l.b16 %v1569
        %v2136 = vunpack.c.l.b16 %v1570
        %v2137 = vunpack.c.l.b16 %v1571
        %v2138 = vunpack.c.l.b16 %v1572
        %v2139 = vunpack.c.l.b16 %v1573
        %v2140 = vunpack.c.l.b16 %v1574
        %v2141 = vunpack.c.l.b16 %v1575
        %v2142 = vunpack.c.l.b16 %v1576
        %v2143 = vpack.c.b16 %v2112, %v2111
        %v2144 = vpack.c.b16 %v2114, %v2113
        %v2145 = vpack.c.b16 %v2116, %v2115
        %v2146 = vpack.c.b16 %v2118, %v2117
        %v2147 = vpack.c.b16 %v2120, %v2119
        %v2148 = vpack.c.b16 %v2122, %v2121
        %v2149 = vpack.c.b16 %v2124, %v2123
        %v2150 = vpack.c.b16 %v2126, %v2125
        %v2151 = vpack.c.b16 %v2128, %v2127
        %v2152 = vpack.c.b16 %v2130, %v2129
        %v2153 = vpack.c.b16 %v2132, %v2131
        %v2154 = vpack.c.b16 %v2134, %v2133
        %v2155 = vpack.c.b16 %v2136, %v2135
        %v2156 = vpack.c.b16 %v2138, %v2137
        %v2157 = vpack.c.b16 %v2140, %v2139
        %v2158 = vpack.c.b16 %v2142, %v2141
        %2175 = vmatprep.subr.bf16.mxu0 0
        %2176 = vmatpush1.bf16.msra.mxu0 %v2143
        %2177 = vmatprep.subr.bf16.mxu0 0
        %2178 = vmatpush1.bf16.msra.mxu0 %v2144
        %2179 = vmatprep.subr.bf16.mxu0 0
        %2180 = vmatpush1.bf16.msra.mxu0 %v2145
        %2181 = vmatprep.subr.bf16.mxu0 0
        %2182 = vmatpush1.bf16.msra.mxu0 %v2146
        %2183 = vmatprep.subr.bf16.mxu0 0
        %2184 = vmatpush1.bf16.msra.mxu0 %v2147
        %2185 = vmatprep.subr.bf16.mxu0 0
        %2186 = vmatpush1.bf16.msra.mxu0 %v2148
        %2187 = vmatprep.subr.bf16.mxu0 0
        %2188 = vmatpush1.bf16.msra.mxu0 %v2149
        %2189 = vmatprep.subr.bf16.mxu0 0
        %2190 = vmatpush1.bf16.msra.mxu0 %v2150
        %2191 = vmatprep.subr.bf16.mxu0 0
        %2192 = vmatpush1.bf16.msra.mxu0 %v2151
        %2193 = vmatprep.subr.bf16.mxu0 0
        %2194 = vmatpush1.bf16.msra.mxu0 %v2152
        %2195 = vmatprep.subr.bf16.mxu0 0
        %2196 = vmatpush1.bf16.msra.mxu0 %v2153
        %2197 = vmatprep.subr.bf16.mxu0 0
        %2198 = vmatpush1.bf16.msra.mxu0 %v2154
        %2199 = vmatprep.subr.bf16.mxu0 0
        %2200 = vmatpush1.bf16.msra.mxu0 %v2155
        %2201 = vmatprep.subr.bf16.mxu0 0
        %2202 = vmatpush1.bf16.msra.mxu0 %v2156
        %2203 = vmatprep.subr.bf16.mxu0 0
        %2204 = vmatpush1.bf16.msra.mxu0 %v2157
        %2205 = vmatprep.subr.bf16.mxu0 0
        %2206 = vmatpush1.bf16.msra.mxu0 %v2158
        %2207 = vmatprep.mubr.bf16.mxu0 %v2076
        %2208 = vmatmul.mubr.bf16.gmra.mrb[0].mxu0 %v2072
        %v2209 = vpop.f32.mrb[0].mxu0
        %v2210 = vadd.f32 0.0, %v2209
        %v2211 = vpop.f32.mrb[0].mxu0
        %v2212 = vpop.f32.mrb[0].mxu0
        %v2213 = vpop.f32.mrb[0].mxu0
        %2214 = vdwg.mxu0
        %v2215 = vpack.i.b16 %v1769, %v1769
        %v2216 = vlaneseq
        %v2217 = vshrl.u32 %v2216, 7
        %v2218 = vsub.s32 0, %v2217
        %v2219 = vrot.slane %v2215, %v2218
        %v2220 = vlaneseq
        %v2221 = vshrl.u32 %v2220, 7
        %v2222 = vsub.s32 1, %v2221
        %v2223 = vrot.slane %v2215, %v2222
        %v2258 = vunpack.c.l.b16 %v1577
        %v2259 = vunpack.c.l.b16 %v1578
        %v2260 = vunpack.c.l.b16 %v1579
        %v2261 = vunpack.c.l.b16 %v1580
        %v2262 = vunpack.c.l.b16 %v1581
        %v2263 = vunpack.c.l.b16 %v1582
        %v2264 = vunpack.c.l.b16 %v1583
        %v2265 = vunpack.c.l.b16 %v1584
        %v2266 = vunpack.c.l.b16 %v1585
        %v2267 = vunpack.c.l.b16 %v1586
        %v2268 = vunpack.c.l.b16 %v1587
        %v2269 = vunpack.c.l.b16 %v1588
        %v2270 = vunpack.c.l.b16 %v1589
        %v2271 = vunpack.c.l.b16 %v1590
        %v2272 = vunpack.c.l.b16 %v1591
        %v2273 = vunpack.c.l.b16 %v1592
        %v2274 = vunpack.c.l.b16 %v1593
        %v2275 = vunpack.c.l.b16 %v1594
        %v2276 = vunpack.c.l.b16 %v1595
        %v2277 = vunpack.c.l.b16 %v1596
        %v2278 = vunpack.c.l.b16 %v1597
        %v2279 = vunpack.c.l.b16 %v1598
        %v2280 = vunpack.c.l.b16 %v1599
        %v2281 = vunpack.c.l.b16 %v1600
        %v2282 = vunpack.c.l.b16 %v1601
        %v2283 = vunpack.c.l.b16 %v1602
        %v2284 = vunpack.c.l.b16 %v1603
        %v2285 = vunpack.c.l.b16 %v1604
        %v2286 = vunpack.c.l.b16 %v1605
        %v2287 = vunpack.c.l.b16 %v1606
        %v2288 = vunpack.c.l.b16 %v1607
        %v2289 = vunpack.c.l.b16 %v1608
        %v2290 = vpack.c.b16 %v2259, %v2258
        %v2291 = vpack.c.b16 %v2261, %v2260
        %v2292 = vpack.c.b16 %v2263, %v2262
        %v2293 = vpack.c.b16 %v2265, %v2264
        %v2294 = vpack.c.b16 %v2267, %v2266
        %v2295 = vpack.c.b16 %v2269, %v2268
        %v2296 = vpack.c.b16 %v2271, %v2270
        %v2297 = vpack.c.b16 %v2273, %v2272
        %v2298 = vpack.c.b16 %v2275, %v2274
        %v2299 = vpack.c.b16 %v2277, %v2276
        %v2300 = vpack.c.b16 %v2279, %v2278
        %v2301 = vpack.c.b16 %v2281, %v2280
        %v2302 = vpack.c.b16 %v2283, %v2282
        %v2303 = vpack.c.b16 %v2285, %v2284
        %v2304 = vpack.c.b16 %v2287, %v2286
        %v2305 = vpack.c.b16 %v2289, %v2288
        %2322 = vmatprep.subr.bf16.mxu0 0
        %2323 = vmatpush1.bf16.msra.mxu0 %v2290
        %2324 = vmatprep.subr.bf16.mxu0 0
        %2325 = vmatpush1.bf16.msra.mxu0 %v2291
        %2326 = vmatprep.subr.bf16.mxu0 0
        %2327 = vmatpush1.bf16.msra.mxu0 %v2292
        %2328 = vmatprep.subr.bf16.mxu0 0
        %2329 = vmatpush1.bf16.msra.mxu0 %v2293
        %2330 = vmatprep.subr.bf16.mxu0 0
        %2331 = vmatpush1.bf16.msra.mxu0 %v2294
        %2332 = vmatprep.subr.bf16.mxu0 0
        %2333 = vmatpush1.bf16.msra.mxu0 %v2295
        %2334 = vmatprep.subr.bf16.mxu0 0
        %2335 = vmatpush1.bf16.msra.mxu0 %v2296
        %2336 = vmatprep.subr.bf16.mxu0 0
        %2337 = vmatpush1.bf16.msra.mxu0 %v2297
        %2338 = vmatprep.subr.bf16.mxu0 0
        %2339 = vmatpush1.bf16.msra.mxu0 %v2298
        %2340 = vmatprep.subr.bf16.mxu0 0
        %2341 = vmatpush1.bf16.msra.mxu0 %v2299
        %2342 = vmatprep.subr.bf16.mxu0 0
        %2343 = vmatpush1.bf16.msra.mxu0 %v2300
        %2344 = vmatprep.subr.bf16.mxu0 0
        %2345 = vmatpush1.bf16.msra.mxu0 %v2301
        %2346 = vmatprep.subr.bf16.mxu0 0
        %2347 = vmatpush1.bf16.msra.mxu0 %v2302
        %2348 = vmatprep.subr.bf16.mxu0 0
        %2349 = vmatpush1.bf16.msra.mxu0 %v2303
        %2350 = vmatprep.subr.bf16.mxu0 0
        %2351 = vmatpush1.bf16.msra.mxu0 %v2304
        %2352 = vmatprep.subr.bf16.mxu0 0
        %2353 = vmatpush1.bf16.msra.mxu0 %v2305
        %2354 = vmatprep.mubr.bf16.mxu0 %v2223
        %2355 = vmatmul.mubr.bf16.gmra.mrb[0].mxu0 %v2219
        %v2356 = vpop.f32.mrb[0].mxu0
        %v2357 = vadd.f32 0.0, %v2356
        %v2358 = vpop.f32.mrb[0].mxu0
        %v2359 = vpop.f32.mrb[0].mxu0
        %v2360 = vpop.f32.mrb[0].mxu0
        %2361 = vdwg.mxu0
        %v2362 = vpack.i.b16 %v1770, %v1770
        %v2363 = vlaneseq
        %v2364 = vshrl.u32 %v2363, 7
        %v2365 = vsub.s32 0, %v2364
        %v2366 = vrot.slane %v2362, %v2365
        %v2367 = vlaneseq
        %v2368 = vshrl.u32 %v2367, 7
        %v2369 = vsub.s32 1, %v2368
        %v2370 = vrot.slane %v2362, %v2369
        %v2405 = vunpack.c.l.b16 %v1609
        %v2406 = vunpack.c.l.b16 %v1610
        %v2407 = vunpack.c.l.b16 %v1611
        %v2408 = vunpack.c.l.b16 %v1612
        %v2409 = vunpack.c.l.b16 %v1613
        %v2410 = vunpack.c.l.b16 %v1614
        %v2411 = vunpack.c.l.b16 %v1615
        %v2412 = vunpack.c.l.b16 %v1616
        %v2413 = vunpack.c.l.b16 %v1617
        %v2414 = vunpack.c.l.b16 %v1618
        %v2415 = vunpack.c.l.b16 %v1619
        %v2416 = vunpack.c.l.b16 %v1620
        %v2417 = vunpack.c.l.b16 %v1621
        %v2418 = vunpack.c.l.b16 %v1622
        %v2419 = vunpack.c.l.b16 %v1623
        %v2420 = vunpack.c.l.b16 %v1624
        %v2421 = vunpack.c.l.b16 %v1625
        %v2422 = vunpack.c.l.b16 %v1626
        %v2423 = vunpack.c.l.b16 %v1627
        %v2424 = vunpack.c.l.b16 %v1628
        %v2425 = vunpack.c.l.b16 %v1629
        %v2426 = vunpack.c.l.b16 %v1630
        %v2427 = vunpack.c.l.b16 %v1631
        %v2428 = vunpack.c.l.b16 %v1632
        %v2429 = vunpack.c.l.b16 %v1633
        %v2430 = vunpack.c.l.b16 %v1634
        %v2431 = vunpack.c.l.b16 %v1635
        %v2432 = vunpack.c.l.b16 %v1636
        %v2433 = vunpack.c.l.b16 %v1637
        %v2434 = vunpack.c.l.b16 %v1638
        %v2435 = vunpack.c.l.b16 %v1639
        %v2436 = vunpack.c.l.b16 %v1640
        %v2437 = vpack.c.b16 %v2406, %v2405
        %v2438 = vpack.c.b16 %v2408, %v2407
        %v2439 = vpack.c.b16 %v2410, %v2409
        %v2440 = vpack.c.b16 %v2412, %v2411
        %v2441 = vpack.c.b16 %v2414, %v2413
        %v2442 = vpack.c.b16 %v2416, %v2415
        %v2443 = vpack.c.b16 %v2418, %v2417
        %v2444 = vpack.c.b16 %v2420, %v2419
        %v2445 = vpack.c.b16 %v2422, %v2421
        %v2446 = vpack.c.b16 %v2424, %v2423
        %v2447 = vpack.c.b16 %v2426, %v2425
        %v2448 = vpack.c.b16 %v2428, %v2427
        %v2449 = vpack.c.b16 %v2430, %v2429
        %v2450 = vpack.c.b16 %v2432, %v2431
        %v2451 = vpack.c.b16 %v2434, %v2433
        %v2452 = vpack.c.b16 %v2436, %v2435
        %2469 = vmatprep.subr.bf16.mxu0 0
        %2470 = vmatpush1.bf16.msra.mxu0 %v2437
        %2471 = vmatprep.subr.bf16.mxu0 0
        %2472 = vmatpush1.bf16.msra.mxu0 %v2438
        %2473 = vmatprep.subr.bf16.mxu0 0
        %2474 = vmatpush1.bf16.msra.mxu0 %v2439
        %2475 = vmatprep.subr.bf16.mxu0 0
        %2476 = vmatpush1.bf16.msra.mxu0 %v2440
        %2477 = vmatprep.subr.bf16.mxu0 0
        %2478 = vmatpush1.bf16.msra.mxu0 %v2441
        %2479 = vmatprep.subr.bf16.mxu0 0
        %2480 = vmatpush1.bf16.msra.mxu0 %v2442
        %2481 = vmatprep.subr.bf16.mxu0 0
        %2482 = vmatpush1.bf16.msra.mxu0 %v2443
        %2483 = vmatprep.subr.bf16.mxu0 0
        %2484 = vmatpush1.bf16.msra.mxu0 %v2444
        %2485 = vmatprep.subr.bf16.mxu0 0
        %2486 = vmatpush1.bf16.msra.mxu0 %v2445
        %2487 = vmatprep.subr.bf16.mxu0 0
        %2488 = vmatpush1.bf16.msra.mxu0 %v2446
        %2489 = vmatprep.subr.bf16.mxu0 0
        %2490 = vmatpush1.bf16.msra.mxu0 %v2447
        %2491 = vmatprep.subr.bf16.mxu0 0
        %2492 = vmatpush1.bf16.msra.mxu0 %v2448
        %2493 = vmatprep.subr.bf16.mxu0 0
        %2494 = vmatpush1.bf16.msra.mxu0 %v2449
        %2495 = vmatprep.subr.bf16.mxu0 0
        %2496 = vmatpush1.bf16.msra.mxu0 %v2450
        %2497 = vmatprep.subr.bf16.mxu0 0
        %2498 = vmatpush1.bf16.msra.mxu0 %v2451
        %2499 = vmatprep.subr.bf16.mxu0 0
        %2500 = vmatpush1.bf16.msra.mxu0 %v2452
        %2501 = vmatprep.mubr.bf16.mxu0 %v2370
        %2502 = vmatmul.mubr.bf16.gmra.mrb[0].mxu0 %v2366
        %v2503 = vpop.f32.mrb[0].mxu0
        %v2504 = vadd.f32 0.0, %v2503
        %v2505 = vpop.f32.mrb[0].mxu0
        %v2506 = vpop.f32.mrb[0].mxu0
        %v2507 = vpop.f32.mrb[0].mxu0
        %2508 = vdwg.mxu0
        %v2509 = vpack.i.b16 %v1771, %v1771
        %v2510 = vlaneseq
        %v2511 = vshrl.u32 %v2510, 7
        %v2512 = vsub.s32 0, %v2511
        %v2513 = vrot.slane %v2509, %v2512
        %v2514 = vlaneseq
        %v2515 = vshrl.u32 %v2514, 7
        %v2516 = vsub.s32 1, %v2515
        %v2517 = vrot.slane %v2509, %v2516
        %v2552 = vunpack.c.l.b16 %v1641
        %v2553 = vunpack.c.l.b16 %v1642
        %v2554 = vunpack.c.l.b16 %v1643
        %v2555 = vunpack.c.l.b16 %v1644
        %v2556 = vunpack.c.l.b16 %v1645
        %v2557 = vunpack.c.l.b16 %v1646
        %v2558 = vunpack.c.l.b16 %v1647
        %v2559 = vunpack.c.l.b16 %v1648
        %v2560 = vunpack.c.l.b16 %v1649
        %v2561 = vunpack.c.l.b16 %v1650
        %v2562 = vunpack.c.l.b16 %v1651
        %v2563 = vunpack.c.l.b16 %v1652
        %v2564 = vunpack.c.l.b16 %v1653
        %v2565 = vunpack.c.l.b16 %v1654
        %v2566 = vunpack.c.l.b16 %v1655
        %v2567 = vunpack.c.l.b16 %v1656
        %v2568 = vunpack.c.l.b16 %v1657
        %v2569 = vunpack.c.l.b16 %v1658
        %v2570 = vunpack.c.l.b16 %v1659
        %v2571 = vunpack.c.l.b16 %v1660
        %v2572 = vunpack.c.l.b16 %v1661
        %v2573 = vunpack.c.l.b16 %v1662
        %v2574 = vunpack.c.l.b16 %v1663
        %v2575 = vunpack.c.l.b16 %v1664
        %v2576 = vunpack.c.l.b16 %v1665
        %v2577 = vunpack.c.l.b16 %v1666
        %v2578 = vunpack.c.l.b16 %v1667
        %v2579 = vunpack.c.l.b16 %v1668
        %v2580 = vunpack.c.l.b16 %v1669
        %v2581 = vunpack.c.l.b16 %v1670
        %v2582 = vunpack.c.l.b16 %v1671
        %v2583 = vunpack.c.l.b16 %v1672
        %v2584 = vpack.c.b16 %v2553, %v2552
        %v2585 = vpack.c.b16 %v2555, %v2554
        %v2586 = vpack.c.b16 %v2557, %v2556
        %v2587 = vpack.c.b16 %v2559, %v2558
        %v2588 = vpack.c.b16 %v2561, %v2560
        %v2589 = vpack.c.b16 %v2563, %v2562
        %v2590 = vpack.c.b16 %v2565, %v2564
        %v2591 = vpack.c.b16 %v2567, %v2566
        %v2592 = vpack.c.b16 %v2569, %v2568
        %v2593 = vpack.c.b16 %v2571, %v2570
        %v2594 = vpack.c.b16 %v2573, %v2572
        %v2595 = vpack.c.b16 %v2575, %v2574
        %v2596 = vpack.c.b16 %v2577, %v2576
        %v2597 = vpack.c.b16 %v2579, %v2578
        %v2598 = vpack.c.b16 %v2581, %v2580
        %v2599 = vpack.c.b16 %v2583, %v2582
        %2616 = vmatprep.subr.bf16.mxu0 0
        %2617 = vmatpush1.bf16.msra.mxu0 %v2584
        %2618 = vmatprep.subr.bf16.mxu0 0
        %2619 = vmatpush1.bf16.msra.mxu0 %v2585
        %2620 = vmatprep.subr.bf16.mxu0 0
        %2621 = vmatpush1.bf16.msra.mxu0 %v2586
        %2622 = vmatprep.subr.bf16.mxu0 0
        %2623 = vmatpush1.bf16.msra.mxu0 %v2587
        %2624 = vmatprep.subr.bf16.mxu0 0
        %2625 = vmatpush1.bf16.msra.mxu0 %v2588
        %2626 = vmatprep.subr.bf16.mxu0 0
        %2627 = vmatpush1.bf16.msra.mxu0 %v2589
        %2628 = vmatprep.subr.bf16.mxu0 0
        %2629 = vmatpush1.bf16.msra.mxu0 %v2590
        %2630 = vmatprep.subr.bf16.mxu0 0
        %2631 = vmatpush1.bf16.msra.mxu0 %v2591
        %2632 = vmatprep.subr.bf16.mxu0 0
        %2633 = vmatpush1.bf16.msra.mxu0 %v2592
        %2634 = vmatprep.subr.bf16.mxu0 0
        %2635 = vmatpush1.bf16.msra.mxu0 %v2593
        %2636 = vmatprep.subr.bf16.mxu0 0
        %2637 = vmatpush1.bf16.msra.mxu0 %v2594
        %2638 = vmatprep.subr.bf16.mxu0 0
        %2639 = vmatpush1.bf16.msra.mxu0 %v2595
        %2640 = vmatprep.subr.bf16.mxu0 0
        %2641 = vmatpush1.bf16.msra.mxu0 %v2596
        %2642 = vmatprep.subr.bf16.mxu0 0
        %2643 = vmatpush1.bf16.msra.mxu0 %v2597
        %2644 = vmatprep.subr.bf16.mxu0 0
        %2645 = vmatpush1.bf16.msra.mxu0 %v2598
        %2646 = vmatprep.subr.bf16.mxu0 0
        %2647 = vmatpush1.bf16.msra.mxu0 %v2599
        %2648 = vmatprep.mubr.bf16.mxu0 %v2517
        %2649 = vmatmul.mubr.bf16.gmra.mrb[0].mxu0 %v2513
        %v2650 = vpop.f32.mrb[0].mxu0
        %v2651 = vadd.f32 0.0, %v2650
        %v2652 = vpop.f32.mrb[0].mxu0
        %v2653 = vpop.f32.mrb[0].mxu0
        %v2654 = vpop.f32.mrb[0].mxu0
        %2655 = vdwg.mxu0
        %v2656 = vpack.i.b16 %v1772, %v1772
        %v2657 = vlaneseq
        %v2658 = vshrl.u32 %v2657, 7
        %v2659 = vsub.s32 0, %v2658
        %v2660 = vrot.slane %v2656, %v2659
        %v2661 = vlaneseq
        %v2662 = vshrl.u32 %v2661, 7
        %v2663 = vsub.s32 1, %v2662
        %v2664 = vrot.slane %v2656, %v2663
        %v2699 = vunpack.c.l.b16 %v1673
        %v2700 = vunpack.c.l.b16 %v1674
        %v2701 = vunpack.c.l.b16 %v1675
        %v2702 = vunpack.c.l.b16 %v1676
        %v2703 = vunpack.c.l.b16 %v1677
        %v2704 = vunpack.c.l.b16 %v1678
        %v2705 = vunpack.c.l.b16 %v1679
        %v2706 = vunpack.c.l.b16 %v1680
        %v2707 = vunpack.c.l.b16 %v1681
        %v2708 = vunpack.c.l.b16 %v1682
        %v2709 = vunpack.c.l.b16 %v1683
        %v2710 = vunpack.c.l.b16 %v1684
        %v2711 = vunpack.c.l.b16 %v1685
        %v2712 = vunpack.c.l.b16 %v1686
        %v2713 = vunpack.c.l.b16 %v1687
        %v2714 = vunpack.c.l.b16 %v1688
        %v2715 = vunpack.c.l.b16 %v1689
        %v2716 = vunpack.c.l.b16 %v1690
        %v2717 = vunpack.c.l.b16 %v1691
        %v2718 = vunpack.c.l.b16 %v1692
        %v2719 = vunpack.c.l.b16 %v1693
        %v2720 = vunpack.c.l.b16 %v1694
        %v2721 = vunpack.c.l.b16 %v1695
        %v2722 = vunpack.c.l.b16 %v1696
        %v2723 = vunpack.c.l.b16 %v1697
        %v2724 = vunpack.c.l.b16 %v1698
        %v2725 = vunpack.c.l.b16 %v1699
        %v2726 = vunpack.c.l.b16 %v1700
        %v2727 = vunpack.c.l.b16 %v1701
        %v2728 = vunpack.c.l.b16 %v1702
        %v2729 = vunpack.c.l.b16 %v1703
        %v2730 = vunpack.c.l.b16 %v1704
        %v2731 = vpack.c.b16 %v2700, %v2699
        %v2732 = vpack.c.b16 %v2702, %v2701
        %v2733 = vpack.c.b16 %v2704, %v2703
        %v2734 = vpack.c.b16 %v2706, %v2705
        %v2735 = vpack.c.b16 %v2708, %v2707
        %v2736 = vpack.c.b16 %v2710, %v2709
        %v2737 = vpack.c.b16 %v2712, %v2711
        %v2738 = vpack.c.b16 %v2714, %v2713
        %v2739 = vpack.c.b16 %v2716, %v2715
        %v2740 = vpack.c.b16 %v2718, %v2717
        %v2741 = vpack.c.b16 %v2720, %v2719
        %v2742 = vpack.c.b16 %v2722, %v2721
        %v2743 = vpack.c.b16 %v2724, %v2723
        %v2744 = vpack.c.b16 %v2726, %v2725
        %v2745 = vpack.c.b16 %v2728, %v2727
        %v2746 = vpack.c.b16 %v2730, %v2729
        %2763 = vmatprep.subr.bf16.mxu0 0
        %2764 = vmatpush1.bf16.msra.mxu0 %v2731
        %2765 = vmatprep.subr.bf16.mxu0 0
        %2766 = vmatpush1.bf16.msra.mxu0 %v2732
        %2767 = vmatprep.subr.bf16.mxu0 0
        %2768 = vmatpush1.bf16.msra.mxu0 %v2733
        %2769 = vmatprep.subr.bf16.mxu0 0
        %2770 = vmatpush1.bf16.msra.mxu0 %v2734
        %2771 = vmatprep.subr.bf16.mxu0 0
        %2772 = vmatpush1.bf16.msra.mxu0 %v2735
        %2773 = vmatprep.subr.bf16.mxu0 0
        %2774 = vmatpush1.bf16.msra.mxu0 %v2736
        %2775 = vmatprep.subr.bf16.mxu0 0
        %2776 = vmatpush1.bf16.msra.mxu0 %v2737
        %2777 = vmatprep.subr.bf16.mxu0 0
        %2778 = vmatpush1.bf16.msra.mxu0 %v2738
        %2779 = vmatprep.subr.bf16.mxu0 0
        %2780 = vmatpush1.bf16.msra.mxu0 %v2739
        %2781 = vmatprep.subr.bf16.mxu0 0
        %2782 = vmatpush1.bf16.msra.mxu0 %v2740
        %2783 = vmatprep.subr.bf16.mxu0 0
        %2784 = vmatpush1.bf16.msra.mxu0 %v2741
        %2785 = vmatprep.subr.bf16.mxu0 0
        %2786 = vmatpush1.bf16.msra.mxu0 %v2742
        %2787 = vmatprep.subr.bf16.mxu0 0
        %2788 = vmatpush1.bf16.msra.mxu0 %v2743
        %2789 = vmatprep.subr.bf16.mxu0 0
        %2790 = vmatpush1.bf16.msra.mxu0 %v2744
        %2791 = vmatprep.subr.bf16.mxu0 0
        %2792 = vmatpush1.bf16.msra.mxu0 %v2745
        %2793 = vmatprep.subr.bf16.mxu0 0
        %2794 = vmatpush1.bf16.msra.mxu0 %v2746
        %2795 = vmatprep.mubr.bf16.mxu0 %v2664
        %2796 = vmatmul.mubr.bf16.gmra.mrb[0].mxu0 %v2660
        %v2797 = vpop.f32.mrb[0].mxu0
        %v2798 = vadd.f32 0.0, %v2797
        %v2799 = vpop.f32.mrb[0].mxu0
        %v2800 = vpop.f32.mrb[0].mxu0
        %v2801 = vpop.f32.mrb[0].mxu0
        %2802 = vdwg.mxu0
        %v2803 = vpack.i.b16 %v1773, %v1773
        %v2804 = vlaneseq
        %v2805 = vshrl.u32 %v2804, 7
        %v2806 = vsub.s32 0, %v2805
        %v2807 = vrot.slane %v2803, %v2806
        %v2808 = vlaneseq
        %v2809 = vshrl.u32 %v2808, 7
        %v2810 = vsub.s32 1, %v2809
        %v2811 = vrot.slane %v2803, %v2810
        %v2846 = vunpack.c.l.b16 %v1705
        %v2847 = vunpack.c.l.b16 %v1706
        %v2848 = vunpack.c.l.b16 %v1707
        %v2849 = vunpack.c.l.b16 %v1708
        %v2850 = vunpack.c.l.b16 %v1709
        %v2851 = vunpack.c.l.b16 %v1710
        %v2852 = vunpack.c.l.b16 %v1711
        %v2853 = vunpack.c.l.b16 %v1712
        %v2854 = vunpack.c.l.b16 %v1713
        %v2855 = vunpack.c.l.b16 %v1714
        %v2856 = vunpack.c.l.b16 %v1715
        %v2857 = vunpack.c.l.b16 %v1716
        %v2858 = vunpack.c.l.b16 %v1717
        %v2859 = vunpack.c.l.b16 %v1718
        %v2860 = vunpack.c.l.b16 %v1719
        %v2861 = vunpack.c.l.b16 %v1720
        %v2862 = vunpack.c.l.b16 %v1721
        %v2863 = vunpack.c.l.b16 %v1722
        %v2864 = vunpack.c.l.b16 %v1723
        %v2865 = vunpack.c.l.b16 %v1724
        %v2866 = vunpack.c.l.b16 %v1725
        %v2867 = vunpack.c.l.b16 %v1726
        %v2868 = vunpack.c.l.b16 %v1727
        %v2869 = vunpack.c.l.b16 %v1728
        %v2870 = vunpack.c.l.b16 %v1729
        %v2871 = vunpack.c.l.b16 %v1730
        %v2872 = vunpack.c.l.b16 %v1731
        %v2873 = vunpack.c.l.b16 %v1732
        %v2874 = vunpack.c.l.b16 %v1733
        %v2875 = vunpack.c.l.b16 %v1734
        %v2876 = vunpack.c.l.b16 %v1735
        %v2877 = vunpack.c.l.b16 %v1736
        %v2878 = vpack.c.b16 %v2847, %v2846
        %v2879 = vpack.c.b16 %v2849, %v2848
        %v2880 = vpack.c.b16 %v2851, %v2850
        %v2881 = vpack.c.b16 %v2853, %v2852
        %v2882 = vpack.c.b16 %v2855, %v2854
        %v2883 = vpack.c.b16 %v2857, %v2856
        %v2884 = vpack.c.b16 %v2859, %v2858
        %v2885 = vpack.c.b16 %v2861, %v2860
        %v2886 = vpack.c.b16 %v2863, %v2862
        %v2887 = vpack.c.b16 %v2865, %v2864
        %v2888 = vpack.c.b16 %v2867, %v2866
        %v2889 = vpack.c.b16 %v2869, %v2868
        %v2890 = vpack.c.b16 %v2871, %v2870
        %v2891 = vpack.c.b16 %v2873, %v2872
        %v2892 = vpack.c.b16 %v2875, %v2874
        %v2893 = vpack.c.b16 %v2877, %v2876
        %2910 = vmatprep.subr.bf16.mxu0 0
        %2911 = vmatpush1.bf16.msra.mxu0 %v2878
        %2912 = vmatprep.subr.bf16.mxu0 0
        %2913 = vmatpush1.bf16.msra.mxu0 %v2879
        %2914 = vmatprep.subr.bf16.mxu0 0
        %2915 = vmatpush1.bf16.msra.mxu0 %v2880
        %2916 = vmatprep.subr.bf16.mxu0 0
        %2917 = vmatpush1.bf16.msra.mxu0 %v2881
        %2918 = vmatprep.subr.bf16.mxu0 0
        %2919 = vmatpush1.bf16.msra.mxu0 %v2882
        %2920 = vmatprep.subr.bf16.mxu0 0
        %2921 = vmatpush1.bf16.msra.mxu0 %v2883
        %2922 = vmatprep.subr.bf16.mxu0 0
        %2923 = vmatpush1.bf16.msra.mxu0 %v2884
        %2924 = vmatprep.subr.bf16.mxu0 0
        %2925 = vmatpush1.bf16.msra.mxu0 %v2885
        %2926 = vmatprep.subr.bf16.mxu0 0
        %2927 = vmatpush1.bf16.msra.mxu0 %v2886
        %2928 = vmatprep.subr.bf16.mxu0 0
        %2929 = vmatpush1.bf16.msra.mxu0 %v2887
        %2930 = vmatprep.subr.bf16.mxu0 0
        %2931 = vmatpush1.bf16.msra.mxu0 %v2888
        %2932 = vmatprep.subr.bf16.mxu0 0
        %2933 = vmatpush1.bf16.msra.mxu0 %v2889
        %2934 = vmatprep.subr.bf16.mxu0 0
        %2935 = vmatpush1.bf16.msra.mxu0 %v2890
        %2936 = vmatprep.subr.bf16.mxu0 0
        %2937 = vmatpush1.bf16.msra.mxu0 %v2891
        %2938 = vmatprep.subr.bf16.mxu0 0
        %2939 = vmatpush1.bf16.msra.mxu0 %v2892
        %2940 = vmatprep.subr.bf16.mxu0 0
        %2941 = vmatpush1.bf16.msra.mxu0 %v2893
        %2942 = vmatprep.mubr.bf16.mxu0 %v2811
        %2943 = vmatmul.mubr.bf16.gmra.mrb[0].mxu0 %v2807
        %v2944 = vpop.f32.mrb[0].mxu0
        %v2945 = vadd.f32 0.0, %v2944
        %v2946 = vpop.f32.mrb[0].mxu0
        %v2947 = vpop.f32.mrb[0].mxu0
        %v2948 = vpop.f32.mrb[0].mxu0
        %2949 = vdwg.mxu0
        %v2950 = vld [vmem:[#allocation2] sm:$0xff]
        %v2959 = vrot.slane %v2063, 7
        %vm2960 = vcmask 1041409
        %v2961 = vsel %vm2960, %v2959, %v1916
        %v2962 = vrot.slane %v2210, 6
        %vm2963 = vcmask 1042434
        %v2964 = vsel %vm2963, %v2962, %v2961
        %v2965 = vrot.slane %v2357, 5
        %vm2966 = vcmask 1043459
        %v2967 = vsel %vm2966, %v2965, %v2964
        %v2968 = vrot.slane %v2504, 4
        %vm2969 = vcmask 1044484
        %v2970 = vsel %vm2969, %v2968, %v2967
        %v2971 = vrot.slane %v2651, 3
        %vm2972 = vcmask 1045509
        %v2973 = vsel %vm2972, %v2971, %v2970
        %v2974 = vrot.slane %v2798, 2
        %vm2975 = vcmask 1046534
        %v2976 = vsel %vm2975, %v2974, %v2973
        %v2977 = vrot.slane %v2945, 1
        %vm2978 = vcmask 1047559
        %v2979 = vsel %vm2978, %v2977, %v2976
        %v2981 = vadd.f32 %v2950, %v2979
        %vm2982 = vcmask 261120
        %2983 = vst.msk [vmem:[#allocation2] sm:$0xff] %vm2982, %v2981
        %v2984 = vld [vmem:[#allocation3] sm:$0xff]
        %v2985 = vadd.f32 %v1479, %v1480
        %2986 = vadd.xlane.f32.xlu0 %v2985
        %v2987 = vpop.xlane.xlu0 %2986
        %v2988 = vadd.f32 %v2984, %v2987
        %vm2989 = vcmask 7168
        %2990 = vst.msk [vmem:[#allocation3] sm:$0xff] %vm2989, %v2988
        %p2991 = scmp.eq.s32.totalorder %s30, 1
        // Predicated region
        $region98: #{tpu_custom_call.1} parent=84 // pred_check
          %p2992 = pneg %p2991
        $region99: #{tpu_custom_call.1} parent=84 // pred_check_branch
          %2994 = sbr.rel (%p2992) target = $region101
        $region100: #{tpu_custom_call.1} parent=84 // pred_region
          %v2995 = vld [vmem:[#allocation3] sm:$0xff]
          %v2996 = vmax.f32 %v2995, 1.0
          %v2997 = vld [vmem:[#allocation2] sm:$0xff]
          %2999 = vset.pattern.permute.xlu0 0
          %3000 = vperm.xlu0 %2999, %v2996
          %v3001 = vpop.permute.xlu0 %3000
          %v3003 = vrcp.pop %v3001
          %v3004 = vmul.f32 %v2997, %v3003
          %v3005 = vld [vmem:[%s4] sm:$0xff]
          %v3006 = vld [vmem:[%s4 + $0x8] sm:$0xff]
          %v3007 = vld [vmem:[%s4 + $0x10] sm:$0xff]
          %v3008 = vld [vmem:[%s4 + $0x18] sm:$0xff]
          %v3009 = vld [vmem:[%s5] sm:$0x1]
          %v3011 = vlaneseq
          %v3012 = vshrl.u32 %v3011, 7
          %v3013 = vsub.s32 0, %v3012
          %v3014 = vrot.slane %v3009, %v3013
          %v3017 = vsel %vm2982, %v3004, 0
          %3019 = vmatprep.subr.mxu0 0.0
          %3020 = vmatpush1.msra.mxu0 %v3005
          %3021 = vmatprep.subr.mxu0 0.0
          %3022 = vmatpush1.msra.mxu0 %v3006
          %3023 = vmatprep.subr.mxu0 0.0
          %3024 = vmatpush1.msra.mxu0 %v3007
          %3025 = vmatprep.subr.mxu0 0.0
          %3026 = vmatpush1.msra.mxu0 %v3008
          %3027 = vmatprep.subr.mxu0 0.0
          %3028 = vmatpush1.msra.mxu0 0.0
          %3029 = vmatprep.subr.mxu0 0.0
          %3030 = vmatpush1.msra.mxu0 0.0
          %3031 = vmatprep.subr.mxu0 0.0
          %3032 = vmatpush1.msra.mxu0 0.0
          %3033 = vmatprep.subr.mxu0 0.0
          %3034 = vmatpush1.msra.mxu0 0.0
          %3035 = vmatprep.subr.mxu0 0.0
          %3036 = vmatpush1.msra.mxu0 0.0
          %3037 = vmatprep.subr.mxu0 0.0
          %3038 = vmatpush1.msra.mxu0 0.0
          %3039 = vmatprep.subr.mxu0 0.0
          %3040 = vmatpush1.msra.mxu0 0.0
          %3041 = vmatprep.subr.mxu0 0.0
          %3042 = vmatpush1.msra.mxu0 0.0
          %3043 = vmatprep.subr.mxu0 0.0
          %3044 = vmatpush1.msra.mxu0 0.0
          %3045 = vmatprep.subr.mxu0 0.0
          %3046 = vmatpush1.msra.mxu0 0.0
          %3047 = vmatprep.subr.mxu0 0.0
          %3048 = vmatpush1.msra.mxu0 0.0
          %3049 = vmatprep.subr.mxu0 0.0
          %3050 = vmatpush1.msra.mxu0 0.0
          %3051 = vmatprep.subr.mxu0 0.0
          %3052 = vmatpush1.msra.mxu0 0.0
          %3053 = vmatprep.subr.mxu0 0.0
          %3054 = vmatpush1.msra.mxu0 0.0
          %3055 = vmatprep.subr.mxu0 0.0
          %3056 = vmatpush1.msra.mxu0 0.0
          %3057 = vmatprep.subr.mxu0 0.0
          %3058 = vmatpush1.msra.mxu0 0.0
          %3059 = vmatprep.subr.mxu0 0.0
          %3060 = vmatpush1.msra.mxu0 0.0
          %3061 = vmatprep.subr.mxu0 0.0
          %3062 = vmatpush1.msra.mxu0 0.0
          %3063 = vmatprep.subr.mxu0 0.0
          %3064 = vmatpush1.msra.mxu0 0.0
          %3065 = vmatprep.subr.mxu0 0.0
          %3066 = vmatpush1.msra.mxu0 0.0
          %3067 = vmatprep.subr.mxu0 0.0
          %3068 = vmatpush1.msra.mxu0 0.0
          %3069 = vmatprep.subr.mxu0 0.0
          %3070 = vmatpush1.msra.mxu0 0.0
          %3071 = vmatprep.subr.mxu0 0.0
          %3072 = vmatpush1.msra.mxu0 0.0
          %3073 = vmatprep.subr.mxu0 0.0
          %3074 = vmatpush1.msra.mxu0 0.0
          %3075 = vmatprep.subr.mxu0 0.0
          %3076 = vmatpush1.msra.mxu0 0.0
          %3077 = vmatprep.subr.mxu0 0.0
          %3078 = vmatpush1.msra.mxu0 0.0
          %3079 = vmatprep.subr.mxu0 0.0
          %3080 = vmatpush1.msra.mxu0 0.0
          %3081 = vmatprep.subr.mxu0 0.0
          %3082 = vmatpush1.msra.mxu0 0.0
          %3083 = vmatprep.mubr.f32.mxu0 0.0
          %3084 = vmatmul.mubr.f32.gmra.mrb[0].mxu0 %v3017
          %v3085 = vpop.f32.mrb[0].mxu0
          %v3086 = vadd.f32 %v3014, %v3085
          %v3087 = vpop.f32.mrb[0].mxu0
          %3088 = vdwg.mxu0
          %v3089 = vxor.u32 %v3086, 2147483648
          %v3090 = vmul.f32 %v3089, 1.442695
          %v3091 = vpow.pop %v3090
          %v3092 = vadd.f32 %v3091, 1.0
          %v3093 = vrcp.pop %v3092
          %v3094 = vmul.f32 1.0, %v3093
          %3095 = vst [vmem:[%s1437] sm:$0xff] %v3094
          %s3096 = sld [smem:[#allocation4]]
          %p3097 = scmp.ne.s32.totalorder %s3096, 0
          // Predicated region
          $region102: #{tpu_custom_call.1} parent=100 // pred_check
            %p3098 = pneg %p3097
          $region103: #{tpu_custom_call.1} parent=100 // pred_check_branch
            %3100 = sbr.rel (%p3098) target = $region105
          $region104: #{tpu_custom_call.1} parent=100 // pred_region
            %v3101 = vld [vmem:[%s1459] sm:$0xff]
            %s3102 = sld [smem:[#allocation5]]
            %s3103 = sld [smem:[#allocation5 + $0x1]]
            %v3104 = vadd.f32 %v3094, 1e-10
            %v3105 = vlog2.pop %v3104
            %v3106 = vmul.f32 %v3105, 0.6931472
            %v3107 = vmul.f32 %v3106, %v3101
            %v3108 = vstv %s3103
            %v3109 = vmul.f32 %v3107, %v3108
            %v3110 = vsub.f32 1.0, %v3094
            %v3111 = vadd.f32 %v3110, 1e-10
            %v3112 = vlog2.pop %v3111
            %v3113 = vmul.f32 %v3112, 0.6931472
            %v3114 = vsub.f32 1.0, %v3101
            %v3115 = vmul.f32 %v3113, %v3114
            %v3116 = vstv %s3102
            %v3117 = vmul.f32 %v3115, %v3116
            %v3118 = vadd.f32 %v3109, %v3117
            %v3119 = vsub.f32 0.0, %v3118
            %3120 = vst.msk [vmem:[%s1463] sm:$0xff] %vm2989, %v3119
          $region105: #{tpu_custom_call.1} parent=100 // pred_fallthru
            _
        $region101: #{tpu_custom_call.1} parent=84 // pred_fallthru
          _
        %s3121 = sand.u32 %s211, 1
        %s3122 = scalar_lea.sflag [#allocation6], %s3121
        %s3123 = sand.u32 %s211, 1
        %s3124 = smul.addr %s3123, 8
        %s3125 = scalar_lea.vmem [#allocation9], %s3124
        %p3126 = scmp.lt.s32.totalorder %s29, 1
        %s3127 = scalar_select %p3126, %s29, 1
        %s3128 = smul.addr %s3127, 8
        %s3129 = scalar_lea.vmem %s8, %s3128
        // Predicated region
        $region106: #{tpu_custom_call.1} parent=84 // pred_check
          %p3130 = pneg %p221
        $region107: #{tpu_custom_call.1} parent=84 // pred_check_branch
          %3132 = sbr.rel (%p3130) target = $region109
        $region108: #{tpu_custom_call.1} parent=84 // pred_region
          %s3134 = ssub.s32 128, 128
          %3135 = vsyncadd %s3122, %s3134
          %s3136 = smul.addr %s29, 128
          %s3137 = scalar_lea.hbm %s7, %s3136
          %s3139 = sshll.u32 %s3125, 4
          %s3140 = int_to_ptr.vmem [resolvable:$true] %s3139
          %3142 = dma.vmem_to_hbm [thread:$0]  %s3140, 128, %s3137, %s3122
        $region109: #{tpu_custom_call.1} parent=84 // pred_fallthru
          _
        // Predicated region
        $region110: #{tpu_custom_call.1} parent=84 // pred_check
          %p3143 = pneg %p247
        $region111: #{tpu_custom_call.1} parent=84 // pred_check_branch
          %3145 = sbr.rel (%p3143) target = $region113
        $region112: #{tpu_custom_call.1} parent=84 // pred_region
          _
        $region113: #{tpu_custom_call.1} parent=84 // pred_fallthru
          _
      $region85: #{tpu_custom_call.1} parent=5 // pred_fallthru
        _
      %p3146 = scmp.le.s32.totalorder 2, %s20
      // Predicated region
      $region114: #{tpu_custom_call.1} parent=5 // pred_check
        %p3147 = pneg %p3146
      $region115: #{tpu_custom_call.1} parent=5 // pred_check_branch
        %3149 = sbr.rel (%p3147) target = $region117
      $region116: #{tpu_custom_call.1} parent=5 // pred_region
        %s3150 = ssub.s32 %s20, 2
        // Predicated region
        $region118: #{tpu_custom_call.1} parent=116 // pred_check
          %p3151 = pneg %p227
        $region119: #{tpu_custom_call.1} parent=116 // pred_check_branch
          %3153 = sbr.rel (%p3151) target = $region121
        $region120: #{tpu_custom_call.1} parent=116 // pred_region
          %s3154 = sand.u32 %s212, 1
          %s3155 = scalar_lea.sflag [#allocation6], %s3154
          %s3156 = sand.u32 %s212, 1
          %s3157 = smul.addr %s3156, 8
          %s3158 = scalar_lea.vmem [#allocation9], %s3157
          %3159 = dma.done %s3155, 128
        $region121: #{tpu_custom_call.1} parent=116 // pred_fallthru
          _
        // Predicated region
        $region122: #{tpu_custom_call.1} parent=116 // pred_check
          %p3160 = pneg %p253
        $region123: #{tpu_custom_call.1} parent=116 // pred_check_branch
          %3162 = sbr.rel (%p3160) target = $region125
        $region124: #{tpu_custom_call.1} parent=116 // pred_region
          %p3163 = scmp.lt.s32.totalorder %s31, 1
          %s3164 = scalar_select %p3163, %s31, 1
          %s3165 = smul.addr %s3164, 8
          %s3166 = scalar_lea.vmem %s8, %s3165
        $region125: #{tpu_custom_call.1} parent=116 // pred_fallthru
          _
      $region117: #{tpu_custom_call.1} parent=5 // pred_fallthru
        _
    $region6: #{tpu_custom_call.1} parent=1 // loop_footer
      %s24 = sadd.s32 1, %s20
    $region7: #{tpu_custom_call.1} parent=1 // loop_footer_branch
      %19 = sbr.rel target = $region3
    $region8: #{tpu_custom_call.1} parent=1 // loop_exit
      _
    %3167 = vsyncpa [#allocation6], 1
    %s3168 = scalar_lea.sflag [#allocation6], 1
    %3169 = vsyncpa %s3168, 1
    %3170 = vsyncpa [#allocation7], 1
    %s3171 = scalar_lea.sflag [#allocation7], 1
    %3172 = vsyncpa %s3171, 1

</llo_original>
